<compile_context>
chip_gen: v7x
topology: tpu7x:2x2x1
jax: 0.10.0
libtpu: 0.0.40
codegen_flags: <defaults>
</compile_context>

<pallas_src>
import numpy as np
import jax
import jax.numpy as jnp
from jax import lax
from jax.experimental import pallas as pl
from jax.experimental.pallas import tpu as pltpu

EPS = 1e-5

# ------------------------- scaled-down SKNet config -------------------------
# TODO(synk): the original SKNet wiring is not runnable as written (conv1
# emits 64 channels but SKConv(128)/SKConv(256) expect 128/256, and the SK
# "fc" convs use the invalid kernel_size=(1,0)/stride=(1,0)).  The forward
# structure is kept exactly, with one consistent (small) channel width and
# the fc layers implemented as the intended 1x1 convs (matmuls).
C_FEAT = 8          # channel width (original 64 / 128 / 256)
M_BRANCH = 3        # number of SK branches (M)
GROUPS = 4          # grouped-conv groups (original G=32)
RATIO = 2           # reduction ratio r -> d = C_FEAT // RATIO
NUM_CLASSES = 6

N_BATCH = 2
H0, W0 = 32, 3                       # WISDM-like input (N, 1, H0, W0)
H1 = (H0 + 2 - 5) // 3 + 1           # conv1 output height (stride 3) -> 10
WF = W0 + 4                          # final carried width (+2 per SKConv)
P = H1 * WF                          # flattened (h, w) lane extent -> 70
NC = N_BATCH * C_FEAT                # fused (n, c) row extent -> 16
D_SQ = C_FEAT // RATIO               # squeeze dim d -> 4
PAD = M_BRANCH * WF                  # max dilated H-tap lane shift -> 21
TAP = 128                            # lane-aligned stride of conv1 tap blocks


# ------------------------- packed parameter layout ---------------------------

_MAT_SHAPES = (
    ('wc1',     (NC, 5 * N_BATCH)),
    ('fold_nc', (NC, NC)),
    ('fold_b',  (M_BRANCH * NC, M_BRANCH * NC)),
    ('fold_s',  (N_BATCH * D_SQ, N_BATCH * D_SQ)),
    ('wcat0',   (M_BRANCH * NC, 3 * M_BRANCH * NC)),
    ('wcat1',   (M_BRANCH * NC, 3 * M_BRANCH * NC)),
    ('wsq0',    (N_BATCH * D_SQ, NC)),
    ('wsq1',    (N_BATCH * D_SQ, NC)),
    ('wex0',    (M_BRANCH * NC, N_BATCH * D_SQ)),
    ('wex1',    (M_BRANCH * NC, N_BATCH * D_SQ)),
    ('w2big',   (P, C_FEAT * NUM_CLASSES)),
    ('sc',      (C_FEAT * NUM_CLASSES, NUM_CLASSES)),
    ('fn',      (N_BATCH, NC)),
    ('mask_fc', (NC, C_FEAT * NUM_CLASSES)),
    ('masks',   (2, P)),
    ('fc_b',    (1, NUM_CLASSES)),
)
_VEC_SHAPES = (
    ('g1', NC), ('b1', NC),
    ('bng0', M_BRANCH * NC), ('bnb0', M_BRANCH * NC),
    ('bng1', M_BRANCH * NC), ('bnb1', M_BRANCH * NC),
    ('sqg0', N_BATCH * D_SQ), ('sqb0', N_BATCH * D_SQ),
    ('sqg1', N_BATCH * D_SQ), ('sqb1', N_BATCH * D_SQ),
    ('bex0', M_BRANCH * NC), ('bex1', M_BRANCH * NC),
)


def _round8(n):
    return ((n + 7) // 8) * 8


def _make_layouts():
    mat_layout, off = {}, 0
    for name, (r, c) in _MAT_SHAPES:
        mat_layout[name] = (off, r, c)
        off += _round8(r)                 # sublane-aligned block starts
    mat_rows = off
    vec_layout, off = {}, 0
    for name, r in _VEC_SHAPES:
        vec_layout[name] = (off, r)
        off += _round8(r)
    return mat_layout, mat_rows, vec_layout, off


MAT_LAYOUT, MAT_ROWS, VEC_LAYOUT, VEC_ROWS = _make_layouts()
MAT_W = max(shape[1] for _, shape in _MAT_SHAPES)          # 144


# ------------------------------ fused kernel --------------------------------

def sknet_fused_kernel(x_ref, gmat_ref, mats_ref, vecs_ref, o_ref):
    N, C, M = N_BATCH, C_FEAT, M_BRANCH

    def mat(name):
        off, r, c = MAT_LAYOUT[name]
        return mats_ref[off:off + r, 0:c]

    def vec(name):
        off, r = VEC_LAYOUT[name]
        return vecs_ref[off:off + r, :]

    def bn_relu(y, gamma, beta, inv_count, fold):
        # Train-mode BatchNorm (per channel, over batch + valid spatial) +
        # ReLU.  `fold` is a precomputed fold-over-batch-and-retile matrix so
        # the batch reduction is one tiny MXU dot (no row shuffles).  Columns
        # outside the valid region of `y` are exactly 0, so they do not
        # disturb the sums; `inv_count` is 1 / (true element count).
        s1 = jnp.dot(fold, jnp.sum(y, axis=1, keepdims=True),
                     preferred_element_type=jnp.float32)
        s2 = jnp.dot(fold, jnp.sum(y * y, axis=1, keepdims=True),
                     preferred_element_type=jnp.float32)
        mean = s1 * inv_count
        var = jnp.maximum(s2 * inv_count - mean * mean, 0.0)
        scale = lax.rsqrt(var + EPS) * gamma
        shift = beta - mean * scale
        return jnp.maximum(y * scale + shift, 0.0)

    masks = mat('masks')
    mask1 = masks[0:1, :]          # conv1 valid columns   (w in [2, 2+W0))
    mask2 = masks[1:2, :]          # SKConv-1 valid columns (w in [1, 1+W0+2))

    # ---- conv1: im2col folded in as one 0/1 gather matmul + one weight dot --
    xg = jnp.dot(x_ref[...], gmat_ref[...],
                 preferred_element_type=jnp.float32)             # (N, 5*TAP)
    tcat = jnp.concatenate(
        [xg[:, kh * TAP: kh * TAP + P] for kh in range(5)], axis=0)  # (5N, P)
    y1 = jnp.dot(mat('wc1'), tcat, preferred_element_type=jnp.float32)
    x = bn_relu(y1, vec('g1'), vec('b1'), 1.0 / (N * H1 * W0),
                mat('fold_nc')) * mask1                          # (NC, P)

    # ------------------------- two SKConv stages ----------------------------
    zpad = jnp.zeros((NC, PAD), jnp.float32)
    for s, w_valid in enumerate((W0 + 2, WF)):
        # One padded buffer per stage; every dilated H-tap is a static lane
        # slice of it.  All M branches fuse into ONE (48,144)x(144,70) matmul
        # via a block-diagonal weight; feats rows are ordered (m, n, c).
        xp = jnp.concatenate([zpad, x, zpad], axis=1)            # (NC, P+2*PAD)
        taps = [xp[:, PAD + (kh - 1) * (m + 1) * WF:
                    PAD + (kh - 1) * (m + 1) * WF + P]
                for m in range(M) for kh in range(3)]
        xcat = jnp.concatenate(taps, axis=0)                     # (3*M*NC, P)
        feats = jnp.dot(mat('wcat%d' % s), xcat,
                        preferred_element_type=jnp.float32)      # (M*NC, P)
        feats = bn_relu(feats, vec('bng%d' % s), vec('bnb%d' % s),
                        1.0 / (N * H1 * w_valid), mat('fold_b'))
        if s == 0:
            feats = feats * mask2

        fs = [feats[m * NC:(m + 1) * NC] for m in range(M)]      # aligned slices

        # fuse: U = sum_m feats_m ; global average pool -> (NC, 1)
        U = fs[0]
        for m in range(1, M):
            U = U + fs[m]
        gap = jnp.sum(U, axis=1, keepdims=True) * (1.0 / (H1 * w_valid))

        # squeeze fc (1x1 conv) + BN over batch + ReLU -> (N*d, 1)
        z = bn_relu(jnp.dot(mat('wsq%d' % s), gap,
                            preferred_element_type=jnp.float32),
                    vec('sqg%d' % s), vec('sqb%d' % s), 1.0 / N, mat('fold_s'))

        # all M excitation fcs fused into ONE matmul; rows ordered (m, n, c)
        logits = jnp.dot(mat('wex%d' % s), z,
                         preferred_element_type=jnp.float32) + vec('bex%d' % s)
        ls = [logits[m * NC:(m + 1) * NC] for m in range(M)]
        mx = ls[0]
        for m in range(1, M):
            mx = jnp.maximum(mx, ls[m])
        es = [jnp.exp(l - mx) for l in ls]
        den = es[0]
        for m in range(1, M):
            den = den + es[m]
        inv_den = pl.reciprocal(den, approx=True)                # EUP slot

        x = fs[0] * (es[0] * inv_den)
        for m in range(1, M):
            x = x + fs[m] * (es[m] * inv_den)                    # (NC, P)

    # ---- final: (c, h, w) flatten per sample + Linear + whole-tensor LN ----
    # T = x @ W2big gives per-(n,c) contributions for every weight channel c';
    # mask_fc keeps c'==c, sc folds c', fn folds the batch rows.
    T = jnp.dot(x, mat('w2big'), preferred_element_type=jnp.float32)  # (NC, C*6)
    per_row = jnp.dot(T * mat('mask_fc'), mat('sc'),
                      preferred_element_type=jnp.float32)             # (NC, 6)
    out = jnp.dot(mat('fn'), per_row,
                  preferred_element_type=jnp.float32) + mat('fc_b')   # (N, 6)
    mu = jnp.mean(out, axis=(0, 1), keepdims=True)
    var = jnp.mean((out - mu) ** 2, axis=(0, 1), keepdims=True)
    o_ref[...] = (out - mu) * lax.rsqrt(var + EPS)


# ----------------------------- pallas_call glue ------------------------------

def _full_spec(shape):
    nd = len(shape)
    return pl.BlockSpec(shape, lambda i, _nd=nd: (0,) * _nd)


@jax.jit
def sknet_forward(x, params):
    # Host side is just a free reshape of the raw (N,1,H0,W0) input: the
    # conv1 im2col now lives inside the kernel (0/1 gather matmul).
    xflat = x.reshape(N_BATCH, H0 * W0).astype(jnp.float32)
    ins = [xflat, params['gmat'], params['mats'], params['vecs']]
    # Single grid point: the whole model (a few hundred KiB of weights, a few
    # KiB of activations) runs in one VMEM-resident invocation; multi-core
    # sharding would only add overhead at this size.
    return pl.pallas_call(
        sknet_fused_kernel,
        out_shape=jax.ShapeDtypeStruct((N_BATCH, NUM_CLASSES), jnp.float32),
        grid=(1,),
        in_specs=[_full_spec(a.shape) for a in ins],
        out_specs=_full_spec((N_BATCH, NUM_CLASSES)),
        compiler_params=pltpu.CompilerParams(
            dimension_semantics=("arbitrary",)),
    )(*ins)


# ----------------------------- parameter init --------------------------------

def _block_diag(blocks):
    rows = sum(b.shape[0] for b in blocks)
    cols = sum(b.shape[1] for b in blocks)
    out = jnp.zeros((rows, cols), jnp.float32)
    r = c = 0
    for b in blocks:
        out = out.at[r:r + b.shape[0], c:c + b.shape[1]].set(b)
        r += b.shape[0]
        c += b.shape[1]
    return out


def _dense_grouped(w_raw):
    # grouped weight (C_out, C_in/G, 3) -> dense per-tap (3, C_out, C_in)
    c_out, cg, kh_dim = w_raw.shape
    dense = jnp.zeros((kh_dim, c_out, c_out), jnp.float32)
    for co in range(c_out):
        g = co // cg
        dense = dense.at[:, co, g * cg:(g + 1) * cg].set(w_raw[co].T)
    return dense


def _branch_wcat(w_raw):
    # (NC, 3*NC): grouped dilated (3,1) conv of one branch, batched over n via
    # a block-diagonal (kron) weight; kh taps along the contraction axis.
    dense = _dense_grouped(w_raw)
    eye = jnp.eye(N_BATCH, dtype=jnp.float32)
    return jnp.concatenate([jnp.kron(eye, dense[kh]) for kh in range(3)],
                           axis=1)


def _conv1_gather():
    # 0/1 matrix mapping the flat (h, w) input to the 5 stride-3 conv1 taps,
    # laid out at lane-aligned offsets (TAP=128) with the W0 columns centred
    # in the carried width WF.
    g = np.zeros((H0 * W0, 5 * TAP), np.float32)
    for kh in range(5):
        for h1 in range(H1):
            h = 3 * h1 + kh - 1
            if 0 <= h < H0:
                for w in range(W0):
                    g[h * W0 + w, kh * TAP + h1 * WF + (w + 2)] = 1.0
    return jnp.asarray(g)


def _init_sk_stage(key):
    C, M, G, d, N = C_FEAT, M_BRANCH, GROUPS, D_SQ, N_BATCH
    keys = jax.random.split(key, M + 3)
    eye = jnp.eye(N, dtype=jnp.float32)
    # all M branch convs fused into one block-diagonal weight (rows (m,n,c))
    wcat = _block_diag([
        _branch_wcat(0.2 * jax.random.normal(keys[m], (C, C // G, 3),
                                             dtype=jnp.float32))
        for m in range(M)])                                  # (M*NC, 3*M*NC)
    wfc = 0.2 * jax.random.normal(keys[M], (C, d), dtype=jnp.float32)
    wfcs = 0.2 * jax.random.normal(keys[M + 1], (M, d, C), dtype=jnp.float32)
    bfcs = 0.05 * jax.random.normal(keys[M + 2], (M, C), dtype=jnp.float32)
    # excitation fcs fused + rows ordered (m, n, c) -> contiguous att slices
    wex = jnp.concatenate([jnp.kron(eye, wfcs[m].T) for m in range(M)], axis=0)
    bex = jnp.concatenate([jnp.tile(bfcs[m].reshape(C, 1), (N, 1))
                           for m in range(M)], axis=0)       # (M*NC, 1)
    return dict(
        wcat=wcat,
        wsq=jnp.kron(eye, wfc.T),                            # (N*d, NC)
        wex=wex,
        bex=bex,
        bng=jnp.ones((M * N * C, 1), jnp.float32),
        bnb=jnp.zeros((M * N * C, 1), jnp.float32),
        sqg=jnp.ones((N * d, 1), jnp.float32),
        sqb=jnp.zeros((N * d, 1), jnp.float32),
    )


def _pack_mats(blocks):
    packed = jnp.zeros((MAT_ROWS, MAT_W), jnp.float32)
    for name, arr in blocks.items():
        off, r, c = MAT_LAYOUT[name]
        packed = packed.at[off:off + r, 0:c].set(arr)
    return packed


def _pack_vecs(blocks):
    packed = jnp.zeros((VEC_ROWS, 1), jnp.float32)
    for name, arr in blocks.items():
        off, r = VEC_LAYOUT[name]
        packed = packed.at[off:off + r, :].set(jnp.reshape(arr, (r, 1)))
    return packed


def init_params(key):
    kc, k2, k3, kw, kb = jax.random.split(key, 5)
    C, N = C_FEAT, N_BATCH
    eye_n = jnp.eye(N, dtype=jnp.float32)

    # conv1 weight, batched over n; columns ordered (kh, n)
    w1 = 0.2 * jax.random.normal(kc, (5, C), dtype=jnp.float32)
    wc1 = jnp.concatenate(
        [jnp.kron(eye_n, w1[kh].reshape(C, 1)) for kh in range(5)], axis=1)

    sk = [_init_sk_stage(k2), _init_sk_stage(k3)]

    # nn.Linear(C*H1*WF, 6) with the PyTorch (c, h, w) flatten order
    fc_w = 0.05 * jax.random.normal(kw, (C, P, NUM_CLASSES), dtype=jnp.float32)
    fc_b = 0.05 * jax.random.normal(kb, (1, NUM_CLASSES), dtype=jnp.float32)

    # column-validity masks over the fixed-width (h, w) lane layout
    wcol = jnp.arange(P) % WF
    masks = jnp.stack([
        ((wcol >= 2) & (wcol < 2 + W0)).astype(jnp.float32),
        ((wcol >= 1) & (wcol < 1 + W0 + 2)).astype(jnp.float32)], axis=0)

    # BatchNorm fold-over-batch-and-retile matrices
    fold_nc = jnp.kron(jnp.ones((N, N), jnp.float32),
                       jnp.eye(C, dtype=jnp.float32))
    mats = {
        'wc1': wc1,
        'fold_nc': fold_nc,
        'fold_b': jnp.kron(jnp.eye(M_BRANCH, dtype=jnp.float32), fold_nc),
        'fold_s': jnp.kron(jnp.ones((N, N), jnp.float32),
                           jnp.eye(D_SQ, dtype=jnp.float32)),
        'w2big': jnp.transpose(fc_w, (1, 0, 2)).reshape(P, C * NUM_CLASSES),
        'sc': jnp.tile(jnp.eye(NUM_CLASSES, dtype=jnp.float32), (C, 1)),
        'fn': jnp.kron(eye_n, jnp.ones((1, C), jnp.float32)),
        'mask_fc': jnp.tile(
            jnp.repeat(jnp.eye(C, dtype=jnp.float32), NUM_CLASSES, axis=1),
            (N, 1)),
        'masks': masks,
        'fc_b': fc_b,
    }
    vecs = {
        'g1': jnp.ones((NC,), jnp.float32),
        'b1': jnp.zeros((NC,), jnp.float32),
    }
    for s in range(2):
        mats['wcat%d' % s] = sk[s]['wcat']
        mats['wsq%d' % s] = sk[s]['wsq']
        mats['wex%d' % s] = sk[s]['wex']
        vecs['bng%d' % s] = sk[s]['bng']
        vecs['bnb%d' % s] = sk[s]['bnb']
        vecs['sqg%d' % s] = sk[s]['sqg']
        vecs['sqb%d' % s] = sk[s]['sqb']
        vecs['bex%d' % s] = sk[s]['bex']

    return {
        'gmat': _conv1_gather(),
        'mats': _pack_mats(mats),
        'vecs': _pack_vecs(vecs),
    }


# ----------------------------------- main ------------------------------------

if __name__ == "__main__":
    key = jax.random.PRNGKey(0)
    kx, kp = jax.random.split(key)
    x = jax.random.normal(kx, (N_BATCH, 1, H0, W0), dtype=jnp.float32)
    params = init_params(kp)
    out = jax.block_until_ready(sknet_forward(x, params))
    assert out.shape == (N_BATCH, NUM_CLASSES)
    assert bool(jnp.all(jnp.isfinite(out)))
    print("KERNEL_OK")
</pallas_src>

<mosaic_0001>
module attributes {stable_mosaic.version = 11 : i64} {
  func.func @sknet_fused_kernel(%arg0: i32, %arg1: memref<2x96xf32, #tpu.memory_space<vmem>>, %arg2: memref<96x640xf32, #tpu.memory_space<vmem>>, %arg3: memref<456x144xf32, #tpu.memory_space<vmem>>, %arg4: memref<352x1xf32, #tpu.memory_space<vmem>>, %arg5: memref<2x6xf32, #tpu.memory_space<vmem>>) attributes {dimension_semantics = [#tpu.dimension_semantics<arbitrary>], iteration_bounds = array<i64: 1>, scalar_prefetch = 0 : i64, scratch_operands = 0 : i64, tpu.core_type = #tpu.core_type<tc>, window_params = [{pipeline_mode = #tpu.pipeline_mode<synchronous>, transform_indices = @transform_0, window_bounds = array<i64: 2, 96>}, {pipeline_mode = #tpu.pipeline_mode<synchronous>, transform_indices = @transform_1, window_bounds = array<i64: 96, 640>}, {pipeline_mode = #tpu.pipeline_mode<synchronous>, transform_indices = @transform_2, window_bounds = array<i64: 456, 144>}, {pipeline_mode = #tpu.pipeline_mode<synchronous>, transform_indices = @transform_3, window_bounds = array<i64: 352, 1>}, {pipeline_mode = #tpu.pipeline_mode<synchronous>, transform_indices = @transform_4, window_bounds = array<i64: 2, 6>}]} {
    %c440 = arith.constant 440 : index
    %c0 = arith.constant 0 : index
    %0 = vector.load %arg3[%c440, %c0] : memref<456x144xf32, #tpu.memory_space<vmem>>, vector<2x70xf32>
    %1 = vector.extract_strided_slice %0 {offsets = [0, 0], sizes = [1, 70], strides = [1, 1]} : vector<2x70xf32> to vector<1x70xf32>
    %2 = vector.extract_strided_slice %0 {offsets = [1, 0], sizes = [1, 70], strides = [1, 1]} : vector<2x70xf32> to vector<1x70xf32>
    %c0_0 = arith.constant 0 : index
    %c0_1 = arith.constant 0 : index
    %3 = vector.load %arg1[%c0_0, %c0_1] : memref<2x96xf32, #tpu.memory_space<vmem>>, vector<2x96xf32>
    %c0_2 = arith.constant 0 : index
    %c0_3 = arith.constant 0 : index
    %4 = vector.load %arg2[%c0_2, %c0_3] : memref<96x640xf32, #tpu.memory_space<vmem>>, vector<96x640xf32>
    %cst = arith.constant dense<0.000000e+00> : vector<2x640xf32>
    %5 = tpu.matmul %3, %4, %cst {dimension_numbers = #tpu.dot_dimension_numbers<[1], [0], [0], [1], [0, 0, 1, 1], [], []>} : vector<2x96xf32>, vector<96x640xf32>, vector<2x640xf32> -> vector<2x640xf32>
    %6 = vector.extract_strided_slice %5 {offsets = [0, 0], sizes = [2, 70], strides = [1, 1]} : vector<2x640xf32> to vector<2x70xf32>
    %7 = vector.extract_strided_slice %5 {offsets = [0, 128], sizes = [2, 70], strides = [1, 1]} : vector<2x640xf32> to vector<2x70xf32>
    %8 = vector.extract_strided_slice %5 {offsets = [0, 256], sizes = [2, 70], strides = [1, 1]} : vector<2x640xf32> to vector<2x70xf32>
    %9 = vector.extract_strided_slice %5 {offsets = [0, 384], sizes = [2, 70], strides = [1, 1]} : vector<2x640xf32> to vector<2x70xf32>
    %10 = vector.extract_strided_slice %5 {offsets = [0, 512], sizes = [2, 70], strides = [1, 1]} : vector<2x640xf32> to vector<2x70xf32>
    %11 = tpu.concatenate %6, %7, %8, %9, %10 in 0 : vector<2x70xf32>, vector<2x70xf32>, vector<2x70xf32>, vector<2x70xf32>, vector<2x70xf32> -> vector<10x70xf32>
    %c0_4 = arith.constant 0 : index
    %c0_5 = arith.constant 0 : index
    %12 = vector.load %arg3[%c0_4, %c0_5] : memref<456x144xf32, #tpu.memory_space<vmem>>, vector<16x10xf32>
    %cst_6 = arith.constant dense<0.000000e+00> : vector<16x70xf32>
    %13 = tpu.matmul %12, %11, %cst_6 {dimension_numbers = #tpu.dot_dimension_numbers<[1], [0], [0], [1], [0, 0, 1, 1], [], []>} : vector<16x10xf32>, vector<10x70xf32>, vector<16x70xf32> -> vector<16x70xf32>
    %c0_7 = arith.constant 0 : index
    %c0_8 = arith.constant 0 : index
    %14 = vector.load %arg4[%c0_7, %c0_8] : memref<352x1xf32, #tpu.memory_space<vmem>>, vector<16x1xf32>
    %c16 = arith.constant 16 : index
    %c0_9 = arith.constant 0 : index
    %15 = vector.load %arg4[%c16, %c0_9] : memref<352x1xf32, #tpu.memory_space<vmem>>, vector<16x1xf32>
    %c16_10 = arith.constant 16 : index
    %c0_11 = arith.constant 0 : index
    %16 = vector.load %arg3[%c16_10, %c0_11] : memref<456x144xf32, #tpu.memory_space<vmem>>, vector<16x16xf32>
    %cst_12 = arith.constant dense<0.000000e+00> : vector<16xf32>
    %17 = vector.multi_reduction <add>, %13, %cst_12 [1] : vector<16x70xf32> to vector<16xf32>
    %18 = vector.shape_cast %17 : vector<16xf32> to vector<16x1xf32>
    %cst_13 = arith.constant dense<0.000000e+00> : vector<16x1xf32>
    %19 = tpu.matmul %16, %18, %cst_13 {dimension_numbers = #tpu.dot_dimension_numbers<[1], [0], [0], [1], [0, 0, 1, 1], [], []>} : vector<16x16xf32>, vector<16x1xf32>, vector<16x1xf32> -> vector<16x1xf32>
    %20 = arith.mulf %13, %13 : vector<16x70xf32>
    %cst_14 = arith.constant dense<0.000000e+00> : vector<16xf32>
    %21 = vector.multi_reduction <add>, %20, %cst_14 [1] : vector<16x70xf32> to vector<16xf32>
    %22 = vector.shape_cast %21 : vector<16xf32> to vector<16x1xf32>
    %cst_15 = arith.constant dense<0.000000e+00> : vector<16x1xf32>
    %23 = tpu.matmul %16, %22, %cst_15 {dimension_numbers = #tpu.dot_dimension_numbers<[1], [0], [0], [1], [0, 0, 1, 1], [], []>} : vector<16x16xf32>, vector<16x1xf32>, vector<16x1xf32> -> vector<16x1xf32>
    %cst_16 = arith.constant 0.0166666675 : f32
    %24 = vector.broadcast %cst_16 : f32 to vector<16x1xf32>
    %25 = arith.mulf %19, %24 : vector<16x1xf32>
    %cst_17 = arith.constant 0.0166666675 : f32
    %26 = vector.broadcast %cst_17 : f32 to vector<16x1xf32>
    %27 = arith.mulf %23, %26 : vector<16x1xf32>
    %28 = arith.mulf %25, %25 : vector<16x1xf32>
    %29 = arith.subf %27, %28 : vector<16x1xf32>
    %cst_18 = arith.constant 0.000000e+00 : f32
    %30 = vector.broadcast %cst_18 : f32 to vector<16x1xf32>
    %31 = arith.maximumf %29, %30 : vector<16x1xf32>
    %cst_19 = arith.constant 9.99999974E-6 : f32
    %32 = vector.broadcast %cst_19 : f32 to vector<16x1xf32>
    %33 = arith.addf %31, %32 : vector<16x1xf32>
    %34 = math.rsqrt %33 : vector<16x1xf32>
    %35 = arith.mulf %34, %14 : vector<16x1xf32>
    %36 = arith.mulf %25, %35 : vector<16x1xf32>
    %37 = arith.subf %15, %36 : vector<16x1xf32>
    %38 = vector.broadcast %35 : vector<16x1xf32> to vector<16x70xf32>
    %39 = arith.mulf %13, %38 : vector<16x70xf32>
    %40 = vector.broadcast %37 : vector<16x1xf32> to vector<16x70xf32>
    %41 = arith.addf %39, %40 : vector<16x70xf32>
    %cst_20 = arith.constant 0.000000e+00 : f32
    %42 = vector.broadcast %cst_20 : f32 to vector<16x70xf32>
    %43 = arith.maximumf %41, %42 : vector<16x70xf32>
    %44 = vector.broadcast %1 : vector<1x70xf32> to vector<16x70xf32>
    %45 = arith.mulf %43, %44 : vector<16x70xf32>
    %cst_21 = arith.constant 0.000000e+00 : f32
    %46 = vector.broadcast %cst_21 : f32 to vector<16x21xf32>
    %47 = tpu.concatenate %46, %45, %46 in 1 : vector<16x21xf32>, vector<16x70xf32>, vector<16x21xf32> -> vector<16x112xf32>
    %48 = vector.extract_strided_slice %47 {offsets = [0, 14], sizes = [16, 70], strides = [1, 1]} : vector<16x112xf32> to vector<16x70xf32>
    %49 = vector.extract_strided_slice %47 {offsets = [0, 21], sizes = [16, 70], strides = [1, 1]} : vector<16x112xf32> to vector<16x70xf32>
    %50 = vector.extract_strided_slice %47 {offsets = [0, 28], sizes = [16, 70], strides = [1, 1]} : vector<16x112xf32> to vector<16x70xf32>
    %51 = vector.extract_strided_slice %47 {offsets = [0, 7], sizes = [16, 70], strides = [1, 1]} : vector<16x112xf32> to vector<16x70xf32>
    %52 = vector.extract_strided_slice %47 {offsets = [0, 21], sizes = [16, 70], strides = [1, 1]} : vector<16x112xf32> to vector<16x70xf32>
    %53 = vector.extract_strided_slice %47 {offsets = [0, 35], sizes = [16, 70], strides = [1, 1]} : vector<16x112xf32> to vector<16x70xf32>
    %54 = vector.extract_strided_slice %47 {offsets = [0, 0], sizes = [16, 70], strides = [1, 1]} : vector<16x112xf32> to vector<16x70xf32>
    %55 = vector.extract_strided_slice %47 {offsets = [0, 21], sizes = [16, 70], strides = [1, 1]} : vector<16x112xf32> to vector<16x70xf32>
    %56 = vector.extract_strided_slice %47 {offsets = [0, 42], sizes = [16, 70], strides = [1, 1]} : vector<16x112xf32> to vector<16x70xf32>
    %57 = tpu.concatenate %48, %49, %50, %51, %52, %53, %54, %55, %56 in 0 : vector<16x70xf32>, vector<16x70xf32>, vector<16x70xf32>, vector<16x70xf32>, vector<16x70xf32>, vector<16x70xf32>, vector<16x70xf32>, vector<16x70xf32>, vector<16x70xf32> -> vector<144x70xf32>
    %c88 = arith.constant 88 : index
    %c0_22 = arith.constant 0 : index
    %58 = vector.load %arg3[%c88, %c0_22] : memref<456x144xf32, #tpu.memory_space<vmem>>, vector<48x144xf32>
    %cst_23 = arith.constant dense<0.000000e+00> : vector<48x70xf32>
    %59 = tpu.matmul %58, %57, %cst_23 {dimension_numbers = #tpu.dot_dimension_numbers<[1], [0], [0], [1], [0, 0, 1, 1], [], []>} : vector<48x144xf32>, vector<144x70xf32>, vector<48x70xf32> -> vector<48x70xf32>
    %c32 = arith.constant 32 : index
    %c0_24 = arith.constant 0 : index
    %60 = vector.load %arg4[%c32, %c0_24] : memref<352x1xf32, #tpu.memory_space<vmem>>, vector<48x1xf32>
    %c80 = arith.constant 80 : index
    %c0_25 = arith.constant 0 : index
    %61 = vector.load %arg4[%c80, %c0_25] : memref<352x1xf32, #tpu.memory_space<vmem>>, vector<48x1xf32>
    %c32_26 = arith.constant 32 : index
    %c0_27 = arith.constant 0 : index
    %62 = vector.load %arg3[%c32_26, %c0_27] : memref<456x144xf32, #tpu.memory_space<vmem>>, vector<48x48xf32>
    %cst_28 = arith.constant dense<0.000000e+00> : vector<48xf32>
    %63 = vector.multi_reduction <add>, %59, %cst_28 [1] : vector<48x70xf32> to vector<48xf32>
    %64 = vector.shape_cast %63 : vector<48xf32> to vector<48x1xf32>
    %cst_29 = arith.constant dense<0.000000e+00> : vector<48x1xf32>
    %65 = tpu.matmul %62, %64, %cst_29 {dimension_numbers = #tpu.dot_dimension_numbers<[1], [0], [0], [1], [0, 0, 1, 1], [], []>} : vector<48x48xf32>, vector<48x1xf32>, vector<48x1xf32> -> vector<48x1xf32>
    %66 = arith.mulf %59, %59 : vector<48x70xf32>
    %cst_30 = arith.constant dense<0.000000e+00> : vector<48xf32>
    %67 = vector.multi_reduction <add>, %66, %cst_30 [1] : vector<48x70xf32> to vector<48xf32>
    %68 = vector.shape_cast %67 : vector<48xf32> to vector<48x1xf32>
    %cst_31 = arith.constant dense<0.000000e+00> : vector<48x1xf32>
    %69 = tpu.matmul %62, %68, %cst_31 {dimension_numbers = #tpu.dot_dimension_numbers<[1], [0], [0], [1], [0, 0, 1, 1], [], []>} : vector<48x48xf32>, vector<48x1xf32>, vector<48x1xf32> -> vector<48x1xf32>
    %cst_32 = arith.constant 0.00999999977 : f32
    %70 = vector.broadcast %cst_32 : f32 to vector<48x1xf32>
    %71 = arith.mulf %65, %70 : vector<48x1xf32>
    %cst_33 = arith.constant 0.00999999977 : f32
    %72 = vector.broadcast %cst_33 : f32 to vector<48x1xf32>
    %73 = arith.mulf %69, %72 : vector<48x1xf32>
    %74 = arith.mulf %71, %71 : vector<48x1xf32>
    %75 = arith.subf %73, %74 : vector<48x1xf32>
    %cst_34 = arith.constant 0.000000e+00 : f32
    %76 = vector.broadcast %cst_34 : f32 to vector<48x1xf32>
    %77 = arith.maximumf %75, %76 : vector<48x1xf32>
    %cst_35 = arith.constant 9.99999974E-6 : f32
    %78 = vector.broadcast %cst_35 : f32 to vector<48x1xf32>
    %79 = arith.addf %77, %78 : vector<48x1xf32>
    %80 = math.rsqrt %79 : vector<48x1xf32>
    %81 = arith.mulf %80, %60 : vector<48x1xf32>
    %82 = arith.mulf %71, %81 : vector<48x1xf32>
    %83 = arith.subf %61, %82 : vector<48x1xf32>
    %84 = vector.broadcast %81 : vector<48x1xf32> to vector<48x70xf32>
    %85 = arith.mulf %59, %84 : vector<48x70xf32>
    %86 = vector.broadcast %83 : vector<48x1xf32> to vector<48x70xf32>
    %87 = arith.addf %85, %86 : vector<48x70xf32>
    %cst_36 = arith.constant 0.000000e+00 : f32
    %88 = vector.broadcast %cst_36 : f32 to vector<48x70xf32>
    %89 = arith.maximumf %87, %88 : vector<48x70xf32>
    %90 = vector.broadcast %2 : vector<1x70xf32> to vector<48x70xf32>
    %91 = arith.mulf %89, %90 : vector<48x70xf32>
    %92 = vector.extract_strided_slice %91 {offsets = [0, 0], sizes = [16, 70], strides = [1, 1]} : vector<48x70xf32> to vector<16x70xf32>
    %93 = vector.extract_strided_slice %91 {offsets = [16, 0], sizes = [16, 70], strides = [1, 1]} : vector<48x70xf32> to vector<16x70xf32>
    %94 = vector.extract_strided_slice %91 {offsets = [32, 0], sizes = [16, 70], strides = [1, 1]} : vector<48x70xf32> to vector<16x70xf32>
    %95 = arith.addf %92, %93 : vector<16x70xf32>
    %96 = arith.addf %95, %94 : vector<16x70xf32>
    %cst_37 = arith.constant dense<0.000000e+00> : vector<16xf32>
    %97 = vector.multi_reduction <add>, %96, %cst_37 [1] : vector<16x70xf32> to vector<16xf32>
    %98 = vector.shape_cast %97 : vector<16xf32> to vector<16x1xf32>
    %cst_38 = arith.constant 2.000000e-02 : f32
    %99 = vector.broadcast %cst_38 : f32 to vector<16x1xf32>
    %100 = arith.mulf %98, %99 : vector<16x1xf32>
    %c184 = arith.constant 184 : index
    %c0_39 = arith.constant 0 : index
    %101 = vector.load %arg3[%c184, %c0_39] : memref<456x144xf32, #tpu.memory_space<vmem>>, vector<8x16xf32>
    %cst_40 = arith.constant dense<0.000000e+00> : vector<8x1xf32>
    %102 = tpu.matmul %101, %100, %cst_40 {dimension_numbers = #tpu.dot_dimension_numbers<[1], [0], [0], [1], [0, 0, 1, 1], [], []>} : vector<8x16xf32>, vector<16x1xf32>, vector<8x1xf32> -> vector<8x1xf32>
    %c224 = arith.constant 224 : index
    %c0_41 = arith.constant 0 : index
    %103 = vector.load %arg4[%c224, %c0_41] : memref<352x1xf32, #tpu.memory_space<vmem>>, vector<8x1xf32>
    %c232 = arith.constant 232 : index
    %c0_42 = arith.constant 0 : index
    %104 = vector.load %arg4[%c232, %c0_42] : memref<352x1xf32, #tpu.memory_space<vmem>>, vector<8x1xf32>
    %c80_43 = arith.constant 80 : index
    %c0_44 = arith.constant 0 : index
    %105 = vector.load %arg3[%c80_43, %c0_44] : memref<456x144xf32, #tpu.memory_space<vmem>>, vector<8x8xf32>
    %cst_45 = arith.constant dense<0.000000e+00> : vector<8xf32>
    %106 = vector.multi_reduction <add>, %102, %cst_45 [1] : vector<8x1xf32> to vector<8xf32>
    %107 = vector.shape_cast %106 : vector<8xf32> to vector<8x1xf32>
    %cst_46 = arith.constant dense<0.000000e+00> : vector<8x1xf32>
    %108 = tpu.matmul %105, %107, %cst_46 {dimension_numbers = #tpu.dot_dimension_numbers<[1], [0], [0], [1], [0, 0, 1, 1], [], []>} : vector<8x8xf32>, vector<8x1xf32>, vector<8x1xf32> -> vector<8x1xf32>
    %109 = arith.mulf %102, %102 : vector<8x1xf32>
    %cst_47 = arith.constant dense<0.000000e+00> : vector<8xf32>
    %110 = vector.multi_reduction <add>, %109, %cst_47 [1] : vector<8x1xf32> to vector<8xf32>
    %111 = vector.shape_cast %110 : vector<8xf32> to vector<8x1xf32>
    %cst_48 = arith.constant dense<0.000000e+00> : vector<8x1xf32>
    %112 = tpu.matmul %105, %111, %cst_48 {dimension_numbers = #tpu.dot_dimension_numbers<[1], [0], [0], [1], [0, 0, 1, 1], [], []>} : vector<8x8xf32>, vector<8x1xf32>, vector<8x1xf32> -> vector<8x1xf32>
    %cst_49 = arith.constant 5.000000e-01 : f32
    %113 = vector.broadcast %cst_49 : f32 to vector<8x1xf32>
    %114 = arith.mulf %108, %113 : vector<8x1xf32>
    %cst_50 = arith.constant 5.000000e-01 : f32
    %115 = vector.broadcast %cst_50 : f32 to vector<8x1xf32>
    %116 = arith.mulf %112, %115 : vector<8x1xf32>
    %117 = arith.mulf %114, %114 : vector<8x1xf32>
    %118 = arith.subf %116, %117 : vector<8x1xf32>
    %cst_51 = arith.constant 0.000000e+00 : f32
    %119 = vector.broadcast %cst_51 : f32 to vector<8x1xf32>
    %120 = arith.maximumf %118, %119 : vector<8x1xf32>
    %cst_52 = arith.constant 9.99999974E-6 : f32
    %121 = vector.broadcast %cst_52 : f32 to vector<8x1xf32>
    %122 = arith.addf %120, %121 : vector<8x1xf32>
    %123 = math.rsqrt %122 : vector<8x1xf32>
    %124 = arith.mulf %123, %103 : vector<8x1xf32>
    %125 = arith.mulf %114, %124 : vector<8x1xf32>
    %126 = arith.subf %104, %125 : vector<8x1xf32>
    %127 = arith.mulf %102, %124 : vector<8x1xf32>
    %128 = arith.addf %127, %126 : vector<8x1xf32>
    %cst_53 = arith.constant 0.000000e+00 : f32
    %129 = vector.broadcast %cst_53 : f32 to vector<8x1xf32>
    %130 = arith.maximumf %128, %129 : vector<8x1xf32>
    %c200 = arith.constant 200 : index
    %c0_54 = arith.constant 0 : index
    %131 = vector.load %arg3[%c200, %c0_54] : memref<456x144xf32, #tpu.memory_space<vmem>>, vector<48x8xf32>
    %cst_55 = arith.constant dense<0.000000e+00> : vector<48x1xf32>
    %132 = tpu.matmul %131, %130, %cst_55 {dimension_numbers = #tpu.dot_dimension_numbers<[1], [0], [0], [1], [0, 0, 1, 1], [], []>} : vector<48x8xf32>, vector<8x1xf32>, vector<48x1xf32> -> vector<48x1xf32>
    %c256 = arith.constant 256 : index
    %c0_56 = arith.constant 0 : index
    %133 = vector.load %arg4[%c256, %c0_56] : memref<352x1xf32, #tpu.memory_space<vmem>>, vector<48x1xf32>
    %134 = arith.addf %132, %133 : vector<48x1xf32>
    %135 = vector.extract_strided_slice %134 {offsets = [0, 0], sizes = [16, 1], strides = [1, 1]} : vector<48x1xf32> to vector<16x1xf32>
    %136 = vector.extract_strided_slice %134 {offsets = [16, 0], sizes = [16, 1], strides = [1, 1]} : vector<48x1xf32> to vector<16x1xf32>
    %137 = vector.extract_strided_slice %134 {offsets = [32, 0], sizes = [16, 1], strides = [1, 1]} : vector<48x1xf32> to vector<16x1xf32>
    %138 = arith.maximumf %135, %136 : vector<16x1xf32>
    %139 = arith.maximumf %138, %137 : vector<16x1xf32>
    %140 = arith.subf %135, %139 : vector<16x1xf32>
    %141 = math.exp %140 : vector<16x1xf32>
    %142 = arith.subf %136, %139 : vector<16x1xf32>
    %143 = math.exp %142 : vector<16x1xf32>
    %144 = arith.subf %137, %139 : vector<16x1xf32>
    %145 = math.exp %144 : vector<16x1xf32>
    %146 = arith.addf %141, %143 : vector<16x1xf32>
    %147 = arith.addf %146, %145 : vector<16x1xf32>
    %148 = tpu.reciprocal %147 {approx = true} : vector<16x1xf32> -> vector<16x1xf32>
    %149 = arith.mulf %141, %148 : vector<16x1xf32>
    %150 = vector.broadcast %149 : vector<16x1xf32> to vector<16x70xf32>
    %151 = arith.mulf %92, %150 : vector<16x70xf32>
    %152 = arith.mulf %143, %148 : vector<16x1xf32>
    %153 = vector.broadcast %152 : vector<16x1xf32> to vector<16x70xf32>
    %154 = arith.mulf %93, %153 : vector<16x70xf32>
    %155 = arith.addf %151, %154 : vector<16x70xf32>
    %156 = arith.mulf %145, %148 : vector<16x1xf32>
    %157 = vector.broadcast %156 : vector<16x1xf32> to vector<16x70xf32>
    %158 = arith.mulf %94, %157 : vector<16x70xf32>
    %159 = arith.addf %155, %158 : vector<16x70xf32>
    %160 = tpu.concatenate %46, %159, %46 in 1 : vector<16x21xf32>, vector<16x70xf32>, vector<16x21xf32> -> vector<16x112xf32>
    %161 = vector.extract_strided_slice %160 {offsets = [0, 14], sizes = [16, 70], strides = [1, 1]} : vector<16x112xf32> to vector<16x70xf32>
    %162 = vector.extract_strided_slice %160 {offsets = [0, 21], sizes = [16, 70], strides = [1, 1]} : vector<16x112xf32> to vector<16x70xf32>
    %163 = vector.extract_strided_slice %160 {offsets = [0, 28], sizes = [16, 70], strides = [1, 1]} : vector<16x112xf32> to vector<16x70xf32>
    %164 = vector.extract_strided_slice %160 {offsets = [0, 7], sizes = [16, 70], strides = [1, 1]} : vector<16x112xf32> to vector<16x70xf32>
    %165 = vector.extract_strided_slice %160 {offsets = [0, 21], sizes = [16, 70], strides = [1, 1]} : vector<16x112xf32> to vector<16x70xf32>
    %166 = vector.extract_strided_slice %160 {offsets = [0, 35], sizes = [16, 70], strides = [1, 1]} : vector<16x112xf32> to vector<16x70xf32>
    %167 = vector.extract_strided_slice %160 {offsets = [0, 0], sizes = [16, 70], strides = [1, 1]} : vector<16x112xf32> to vector<16x70xf32>
    %168 = vector.extract_strided_slice %160 {offsets = [0, 21], sizes = [16, 70], strides = [1, 1]} : vector<16x112xf32> to vector<16x70xf32>
    %169 = vector.extract_strided_slice %160 {offsets = [0, 42], sizes = [16, 70], strides = [1, 1]} : vector<16x112xf32> to vector<16x70xf32>
    %170 = tpu.concatenate %161, %162, %163, %164, %165, %166, %167, %168, %169 in 0 : vector<16x70xf32>, vector<16x70xf32>, vector<16x70xf32>, vector<16x70xf32>, vector<16x70xf32>, vector<16x70xf32>, vector<16x70xf32>, vector<16x70xf32>, vector<16x70xf32> -> vector<144x70xf32>
    %c136 = arith.constant 136 : index
    %c0_57 = arith.constant 0 : index
    %171 = vector.load %arg3[%c136, %c0_57] : memref<456x144xf32, #tpu.memory_space<vmem>>, vector<48x144xf32>
    %cst_58 = arith.constant dense<0.000000e+00> : vector<48x70xf32>
    %172 = tpu.matmul %171, %170, %cst_58 {dimension_numbers = #tpu.dot_dimension_numbers<[1], [0], [0], [1], [0, 0, 1, 1], [], []>} : vector<48x144xf32>, vector<144x70xf32>, vector<48x70xf32> -> vector<48x70xf32>
    %c128 = arith.constant 128 : index
    %c0_59 = arith.constant 0 : index
    %173 = vector.load %arg4[%c128, %c0_59] : memref<352x1xf32, #tpu.memory_space<vmem>>, vector<48x1xf32>
    %c176 = arith.constant 176 : index
    %c0_60 = arith.constant 0 : index
    %174 = vector.load %arg4[%c176, %c0_60] : memref<352x1xf32, #tpu.memory_space<vmem>>, vector<48x1xf32>
    %c32_61 = arith.constant 32 : index
    %c0_62 = arith.constant 0 : index
    %175 = vector.load %arg3[%c32_61, %c0_62] : memref<456x144xf32, #tpu.memory_space<vmem>>, vector<48x48xf32>
    %cst_63 = arith.constant dense<0.000000e+00> : vector<48xf32>
    %176 = vector.multi_reduction <add>, %172, %cst_63 [1] : vector<48x70xf32> to vector<48xf32>
    %177 = vector.shape_cast %176 : vector<48xf32> to vector<48x1xf32>
    %cst_64 = arith.constant dense<0.000000e+00> : vector<48x1xf32>
    %178 = tpu.matmul %175, %177, %cst_64 {dimension_numbers = #tpu.dot_dimension_numbers<[1], [0], [0], [1], [0, 0, 1, 1], [], []>} : vector<48x48xf32>, vector<48x1xf32>, vector<48x1xf32> -> vector<48x1xf32>
    %179 = arith.mulf %172, %172 : vector<48x70xf32>
    %cst_65 = arith.constant dense<0.000000e+00> : vector<48xf32>
    %180 = vector.multi_reduction <add>, %179, %cst_65 [1] : vector<48x70xf32> to vector<48xf32>
    %181 = vector.shape_cast %180 : vector<48xf32> to vector<48x1xf32>
    %cst_66 = arith.constant dense<0.000000e+00> : vector<48x1xf32>
    %182 = tpu.matmul %175, %181, %cst_66 {dimension_numbers = #tpu.dot_dimension_numbers<[1], [0], [0], [1], [0, 0, 1, 1], [], []>} : vector<48x48xf32>, vector<48x1xf32>, vector<48x1xf32> -> vector<48x1xf32>
    %cst_67 = arith.constant 0.00714285718 : f32
    %183 = vector.broadcast %cst_67 : f32 to vector<48x1xf32>
    %184 = arith.mulf %178, %183 : vector<48x1xf32>
    %cst_68 = arith.constant 0.00714285718 : f32
    %185 = vector.broadcast %cst_68 : f32 to vector<48x1xf32>
    %186 = arith.mulf %182, %185 : vector<48x1xf32>
    %187 = arith.mulf %184, %184 : vector<48x1xf32>
    %188 = arith.subf %186, %187 : vector<48x1xf32>
    %cst_69 = arith.constant 0.000000e+00 : f32
    %189 = vector.broadcast %cst_69 : f32 to vector<48x1xf32>
    %190 = arith.maximumf %188, %189 : vector<48x1xf32>
    %cst_70 = arith.constant 9.99999974E-6 : f32
    %191 = vector.broadcast %cst_70 : f32 to vector<48x1xf32>
    %192 = arith.addf %190, %191 : vector<48x1xf32>
    %193 = math.rsqrt %192 : vector<48x1xf32>
    %194 = arith.mulf %193, %173 : vector<48x1xf32>
    %195 = arith.mulf %184, %194 : vector<48x1xf32>
    %196 = arith.subf %174, %195 : vector<48x1xf32>
    %197 = vector.broadcast %194 : vector<48x1xf32> to vector<48x70xf32>
    %198 = arith.mulf %172, %197 : vector<48x70xf32>
    %199 = vector.broadcast %196 : vector<48x1xf32> to vector<48x70xf32>
    %200 = arith.addf %198, %199 : vector<48x70xf32>
    %cst_71 = arith.constant 0.000000e+00 : f32
    %201 = vector.broadcast %cst_71 : f32 to vector<48x70xf32>
    %202 = arith.maximumf %200, %201 : vector<48x70xf32>
    %203 = vector.extract_strided_slice %202 {offsets = [0, 0], sizes = [16, 70], strides = [1, 1]} : vector<48x70xf32> to vector<16x70xf32>
    %204 = vector.extract_strided_slice %202 {offsets = [16, 0], sizes = [16, 70], strides = [1, 1]} : vector<48x70xf32> to vector<16x70xf32>
    %205 = vector.extract_strided_slice %202 {offsets = [32, 0], sizes = [16, 70], strides = [1, 1]} : vector<48x70xf32> to vector<16x70xf32>
    %206 = arith.addf %203, %204 : vector<16x70xf32>
    %207 = arith.addf %206, %205 : vector<16x70xf32>
    %cst_72 = arith.constant dense<0.000000e+00> : vector<16xf32>
    %208 = vector.multi_reduction <add>, %207, %cst_72 [1] : vector<16x70xf32> to vector<16xf32>
    %209 = vector.shape_cast %208 : vector<16xf32> to vector<16x1xf32>
    %cst_73 = arith.constant 0.0142857144 : f32
    %210 = vector.broadcast %cst_73 : f32 to vector<16x1xf32>
    %211 = arith.mulf %209, %210 : vector<16x1xf32>
    %c192 = arith.constant 192 : index
    %c0_74 = arith.constant 0 : index
    %212 = vector.load %arg3[%c192, %c0_74] : memref<456x144xf32, #tpu.memory_space<vmem>>, vector<8x16xf32>
    %cst_75 = arith.constant dense<0.000000e+00> : vector<8x1xf32>
    %213 = tpu.matmul %212, %211, %cst_75 {dimension_numbers = #tpu.dot_dimension_numbers<[1], [0], [0], [1], [0, 0, 1, 1], [], []>} : vector<8x16xf32>, vector<16x1xf32>, vector<8x1xf32> -> vector<8x1xf32>
    %c240 = arith.constant 240 : index
    %c0_76 = arith.constant 0 : index
    %214 = vector.load %arg4[%c240, %c0_76] : memref<352x1xf32, #tpu.memory_space<vmem>>, vector<8x1xf32>
    %c248 = arith.constant 248 : index
    %c0_77 = arith.constant 0 : index
    %215 = vector.load %arg4[%c248, %c0_77] : memref<352x1xf32, #tpu.memory_space<vmem>>, vector<8x1xf32>
    %c80_78 = arith.constant 80 : index
    %c0_79 = arith.constant 0 : index
    %216 = vector.load %arg3[%c80_78, %c0_79] : memref<456x144xf32, #tpu.memory_space<vmem>>, vector<8x8xf32>
    %cst_80 = arith.constant dense<0.000000e+00> : vector<8xf32>
    %217 = vector.multi_reduction <add>, %213, %cst_80 [1] : vector<8x1xf32> to vector<8xf32>
    %218 = vector.shape_cast %217 : vector<8xf32> to vector<8x1xf32>
    %cst_81 = arith.constant dense<0.000000e+00> : vector<8x1xf32>
    %219 = tpu.matmul %216, %218, %cst_81 {dimension_numbers = #tpu.dot_dimension_numbers<[1], [0], [0], [1], [0, 0, 1, 1], [], []>} : vector<8x8xf32>, vector<8x1xf32>, vector<8x1xf32> -> vector<8x1xf32>
    %220 = arith.mulf %213, %213 : vector<8x1xf32>
    %cst_82 = arith.constant dense<0.000000e+00> : vector<8xf32>
    %221 = vector.multi_reduction <add>, %220, %cst_82 [1] : vector<8x1xf32> to vector<8xf32>
    %222 = vector.shape_cast %221 : vector<8xf32> to vector<8x1xf32>
    %cst_83 = arith.constant dense<0.000000e+00> : vector<8x1xf32>
    %223 = tpu.matmul %216, %222, %cst_83 {dimension_numbers = #tpu.dot_dimension_numbers<[1], [0], [0], [1], [0, 0, 1, 1], [], []>} : vector<8x8xf32>, vector<8x1xf32>, vector<8x1xf32> -> vector<8x1xf32>
    %cst_84 = arith.constant 5.000000e-01 : f32
    %224 = vector.broadcast %cst_84 : f32 to vector<8x1xf32>
    %225 = arith.mulf %219, %224 : vector<8x1xf32>
    %cst_85 = arith.constant 5.000000e-01 : f32
    %226 = vector.broadcast %cst_85 : f32 to vector<8x1xf32>
    %227 = arith.mulf %223, %226 : vector<8x1xf32>
    %228 = arith.mulf %225, %225 : vector<8x1xf32>
    %229 = arith.subf %227, %228 : vector<8x1xf32>
    %cst_86 = arith.constant 0.000000e+00 : f32
    %230 = vector.broadcast %cst_86 : f32 to vector<8x1xf32>
    %231 = arith.maximumf %229, %230 : vector<8x1xf32>
    %cst_87 = arith.constant 9.99999974E-6 : f32
    %232 = vector.broadcast %cst_87 : f32 to vector<8x1xf32>
    %233 = arith.addf %231, %232 : vector<8x1xf32>
    %234 = math.rsqrt %233 : vector<8x1xf32>
    %235 = arith.mulf %234, %214 : vector<8x1xf32>
    %236 = arith.mulf %225, %235 : vector<8x1xf32>
    %237 = arith.subf %215, %236 : vector<8x1xf32>
    %238 = arith.mulf %213, %235 : vector<8x1xf32>
    %239 = arith.addf %238, %237 : vector<8x1xf32>
    %cst_88 = arith.constant 0.000000e+00 : f32
    %240 = vector.broadcast %cst_88 : f32 to vector<8x1xf32>
    %241 = arith.maximumf %239, %240 : vector<8x1xf32>
    %c248_89 = arith.constant 248 : index
    %c0_90 = arith.constant 0 : index
    %242 = vector.load %arg3[%c248_89, %c0_90] : memref<456x144xf32, #tpu.memory_space<vmem>>, vector<48x8xf32>
    %cst_91 = arith.constant dense<0.000000e+00> : vector<48x1xf32>
    %243 = tpu.matmul %242, %241, %cst_91 {dimension_numbers = #tpu.dot_dimension_numbers<[1], [0], [0], [1], [0, 0, 1, 1], [], []>} : vector<48x8xf32>, vector<8x1xf32>, vector<48x1xf32> -> vector<48x1xf32>
    %c304 = arith.constant 304 : index
    %c0_92 = arith.constant 0 : index
    %244 = vector.load %arg4[%c304, %c0_92] : memref<352x1xf32, #tpu.memory_space<vmem>>, vector<48x1xf32>
    %245 = arith.addf %243, %244 : vector<48x1xf32>
    %246 = vector.extract_strided_slice %245 {offsets = [0, 0], sizes = [16, 1], strides = [1, 1]} : vector<48x1xf32> to vector<16x1xf32>
    %247 = vector.extract_strided_slice %245 {offsets = [16, 0], sizes = [16, 1], strides = [1, 1]} : vector<48x1xf32> to vector<16x1xf32>
    %248 = vector.extract_strided_slice %245 {offsets = [32, 0], sizes = [16, 1], strides = [1, 1]} : vector<48x1xf32> to vector<16x1xf32>
    %249 = arith.maximumf %246, %247 : vector<16x1xf32>
    %250 = arith.maximumf %249, %248 : vector<16x1xf32>
    %251 = arith.subf %246, %250 : vector<16x1xf32>
    %252 = math.exp %251 : vector<16x1xf32>
    %253 = arith.subf %247, %250 : vector<16x1xf32>
    %254 = math.exp %253 : vector<16x1xf32>
    %255 = arith.subf %248, %250 : vector<16x1xf32>
    %256 = math.exp %255 : vector<16x1xf32>
    %257 = arith.addf %252, %254 : vector<16x1xf32>
    %258 = arith.addf %257, %256 : vector<16x1xf32>
    %259 = tpu.reciprocal %258 {approx = true} : vector<16x1xf32> -> vector<16x1xf32>
    %260 = arith.mulf %252, %259 : vector<16x1xf32>
    %261 = vector.broadcast %260 : vector<16x1xf32> to vector<16x70xf32>
    %262 = arith.mulf %203, %261 : vector<16x70xf32>
    %263 = arith.mulf %254, %259 : vector<16x1xf32>
    %264 = vector.broadcast %263 : vector<16x1xf32> to vector<16x70xf32>
    %265 = arith.mulf %204, %264 : vector<16x70xf32>
    %266 = arith.addf %262, %265 : vector<16x70xf32>
    %267 = arith.mulf %256, %259 : vector<16x1xf32>
    %268 = vector.broadcast %267 : vector<16x1xf32> to vector<16x70xf32>
    %269 = arith.mulf %205, %268 : vector<16x70xf32>
    %270 = arith.addf %266, %269 : vector<16x70xf32>
    %c296 = arith.constant 296 : index
    %c0_93 = arith.constant 0 : index
    %271 = vector.load %arg3[%c296, %c0_93] : memref<456x144xf32, #tpu.memory_space<vmem>>, vector<70x48xf32>
    %cst_94 = arith.constant dense<0.000000e+00> : vector<16x48xf32>
    %272 = tpu.matmul %270, %271, %cst_94 {dimension_numbers = #tpu.dot_dimension_numbers<[1], [0], [0], [1], [0, 0, 1, 1], [], []>} : vector<16x70xf32>, vector<70x48xf32>, vector<16x48xf32> -> vector<16x48xf32>
    %c424 = arith.constant 424 : index
    %c0_95 = arith.constant 0 : index
    %273 = vector.load %arg3[%c424, %c0_95] : memref<456x144xf32, #tpu.memory_space<vmem>>, vector<16x48xf32>
    %274 = arith.mulf %272, %273 : vector<16x48xf32>
    %c368 = arith.constant 368 : index
    %c0_96 = arith.constant 0 : index
    %275 = vector.load %arg3[%c368, %c0_96] : memref<456x144xf32, #tpu.memory_space<vmem>>, vector<48x6xf32>
    %cst_97 = arith.constant dense<0.000000e+00> : vector<16x6xf32>
    %276 = tpu.matmul %274, %275, %cst_97 {dimension_numbers = #tpu.dot_dimension_numbers<[1], [0], [0], [1], [0, 0, 1, 1], [], []>} : vector<16x48xf32>, vector<48x6xf32>, vector<16x6xf32> -> vector<16x6xf32>
    %c416 = arith.constant 416 : index
    %c0_98 = arith.constant 0 : index
    %277 = vector.load %arg3[%c416, %c0_98] : memref<456x144xf32, #tpu.memory_space<vmem>>, vector<2x16xf32>
    %cst_99 = arith.constant dense<0.000000e+00> : vector<2x6xf32>
    %278 = tpu.matmul %277, %276, %cst_99 {dimension_numbers = #tpu.dot_dimension_numbers<[1], [0], [0], [1], [0, 0, 1, 1], [], []>} : vector<2x16xf32>, vector<16x6xf32>, vector<2x6xf32> -> vector<2x6xf32>
    %c448 = arith.constant 448 : index
    %c0_100 = arith.constant 0 : index
    %279 = vector.load %arg3[%c448, %c0_100] : memref<456x144xf32, #tpu.memory_space<vmem>>, vector<1x6xf32>
    %280 = vector.broadcast %279 : vector<1x6xf32> to vector<2x6xf32>
    %281 = arith.addf %278, %280 : vector<2x6xf32>
    %282 = vector.shape_cast %281 : vector<2x6xf32> to vector<1x2x6xf32>
    %cst_101 = arith.constant dense<0.000000e+00> : vector<1xf32>
    %283 = vector.multi_reduction <add>, %282, %cst_101 [1, 2] : vector<1x2x6xf32> to vector<1xf32>
    %284 = vector.shape_cast %283 : vector<1xf32> to vector<1x1x1xf32>
    %285 = vector.extract %284[0, 0, 0] : f32 from vector<1x1x1xf32>
    %286 = vector.broadcast %285 : f32 to vector<1x1xf32>
    %cst_102 = arith.constant 1.200000e+01 : f32
    %287 = vector.broadcast %cst_102 : f32 to vector<1x1xf32>
    %288 = arith.divf %286, %287 : vector<1x1xf32>
    %289 = vector.broadcast %288 : vector<1x1xf32> to vector<2x6xf32>
    %290 = arith.subf %281, %289 : vector<2x6xf32>
    %291 = arith.mulf %290, %290 : vector<2x6xf32>
    %292 = vector.shape_cast %291 : vector<2x6xf32> to vector<1x2x6xf32>
    %cst_103 = arith.constant dense<0.000000e+00> : vector<1xf32>
    %293 = vector.multi_reduction <add>, %292, %cst_103 [1, 2] : vector<1x2x6xf32> to vector<1xf32>
    %294 = vector.shape_cast %293 : vector<1xf32> to vector<1x1x1xf32>
    %295 = vector.extract %294[0, 0, 0] : f32 from vector<1x1x1xf32>
    %296 = vector.broadcast %295 : f32 to vector<1x1xf32>
    %cst_104 = arith.constant 1.200000e+01 : f32
    %297 = vector.broadcast %cst_104 : f32 to vector<1x1xf32>
    %298 = arith.divf %296, %297 : vector<1x1xf32>
    %299 = vector.broadcast %288 : vector<1x1xf32> to vector<2x6xf32>
    %300 = arith.subf %281, %299 : vector<2x6xf32>
    %cst_105 = arith.constant 9.99999974E-6 : f32
    %301 = vector.broadcast %cst_105 : f32 to vector<1x1xf32>
    %302 = arith.addf %298, %301 : vector<1x1xf32>
    %303 = math.rsqrt %302 : vector<1x1xf32>
    %304 = vector.broadcast %303 : vector<1x1xf32> to vector<2x6xf32>
    %305 = arith.mulf %300, %304 : vector<2x6xf32>
    %c0_106 = arith.constant 0 : index
    %c0_107 = arith.constant 0 : index
    %306 = vector.load %arg5[%c0_106, %c0_107] : memref<2x6xf32, #tpu.memory_space<vmem>>, vector<2x6xf32>
    tpu.vector_store %arg5[%c0_106, %c0_107], %305 {strides = array<i32>} : memref<2x6xf32, #tpu.memory_space<vmem>>, vector<2x6xf32>,
    return
  }
  func.func @transform_0(%arg0: i32) -> (i32, i32) {
    %c0_i32 = arith.constant 0 : i32
    %c0_i32_0 = arith.constant 0 : i32
    %c0_i32_1 = arith.constant 0 : i32
    return %c0_i32, %c0_i32_0 : i32, i32
  }
  func.func @transform_1(%arg0: i32) -> (i32, i32) {
    %c0_i32 = arith.constant 0 : i32
    %c0_i32_0 = arith.constant 0 : i32
    %c0_i32_1 = arith.constant 0 : i32
    return %c0_i32, %c0_i32_0 : i32, i32
  }
  func.func @transform_2(%arg0: i32) -> (i32, i32) {
    %c0_i32 = arith.constant 0 : i32
    %c0_i32_0 = arith.constant 0 : i32
    %c0_i32_1 = arith.constant 0 : i32
    return %c0_i32, %c0_i32_0 : i32, i32
  }
  func.func @transform_3(%arg0: i32) -> (i32, i32) {
    %c0_i32 = arith.constant 0 : i32
    %c0_i32_0 = arith.constant 0 : i32
    %c0_i32_1 = arith.constant 0 : i32
    return %c0_i32, %c0_i32_0 : i32, i32
  }
  func.func @transform_4(%arg0: i32) -> (i32, i32) {
    %c0_i32 = arith.constant 0 : i32
    %c0_i32_0 = arith.constant 0 : i32
    %c0_i32_1 = arith.constant 0 : i32
    return %c0_i32, %c0_i32_0 : i32, i32
  }
}

</mosaic_0001>

<llo_original>
// kernel: sknet_forward.1
$region0: #{sknet_forward.1}
  #allocation0 [shape = 'u32[]', space=smem, size = 0x4, offset = 0x4, fixed_abs, tag = 'smem constant byte address 0x4 - core index']
  #allocation1 [shape = 'u32[144,128]{1,0:T(1,128)}', space=vmem, size = 0x12000, scoped, tag = 'internal scratch']
  %s0 = inlined_call_operand.vmem [shape: f32[2,96], index: 0, kind: input, shape index: {}]
  %s1 = inlined_call_operand.vmem [shape: f32[96,640], index: 1, kind: input, shape index: {}]
  %s2 = inlined_call_operand.vmem [shape: f32[456,144], index: 2, kind: input, shape index: {}]
  %s3 = inlined_call_operand.vmem [shape: f32[352,1], index: 3, kind: input, shape index: {}]
  %s4 = inlined_call_operand.hbm [shape: f32[2,6], index: 4, kind: output, shape index: {}]
  %s5 = sld [smem:[#allocation0]]
  $region26: #{sknet_forward.1} parent=0
    _
  %s7 = ssub.s32 1, %s5
  %s8 = scalar_select 0, %s7, %s5
  $region1: #{sknet_forward.1} parent=0
    #allocation2 [shape = 'u8[1024]{0}', space=vmem, size = 0x400, scoped, tag = 'output window, operand 0, single buffered']
    #allocation3 [shape = 's32[1]{0}', space=sflag, size = 0x4, scoped, tag = 'scoped memory for sknet_forward.1']
    %9 = vsyncpa [#allocation3], 0
    // Predicated region
    $region2: #{sknet_forward.1} parent=1 // pred_check
      _
    $region3: #{sknet_forward.1} parent=1 // pred_check_branch
      %11 = sbr.rel (0) target = $region5
    $region4: #{sknet_forward.1} parent=1 // pred_region
      _
    $region5: #{sknet_forward.1} parent=1 // pred_fallthru
      _
    // Predicated region
    $region6: #{sknet_forward.1} parent=1 // pred_check
      _
    $region7: #{sknet_forward.1} parent=1 // pred_check_branch
      %13 = sbr.rel (0) target = $region9
    $region8: #{sknet_forward.1} parent=1 // pred_region
      _
    $region9: #{sknet_forward.1} parent=1 // pred_fallthru
      _
    // Predicated region
    $region10: #{sknet_forward.1} parent=1 // pred_check
      _
    $region11: #{sknet_forward.1} parent=1 // pred_check_branch
      %15 = sbr.rel (0) target = $region13
    $region12: #{sknet_forward.1} parent=1 // pred_region
      _
    $region13: #{sknet_forward.1} parent=1 // pred_fallthru
      _
    // Predicated region
    $region14: #{sknet_forward.1} parent=1 // pred_check
      _
    $region15: #{sknet_forward.1} parent=1 // pred_check_branch
      %17 = sbr.rel (0) target = $region17
    $region16: #{sknet_forward.1} parent=1 // pred_region
      _
    $region17: #{sknet_forward.1} parent=1 // pred_fallthru
      _
    %v18 = vld [vmem:[%s2 + $0x370] sm:$0x3]
    %v19 = vld [vmem:[%s0] sm:$0x3]
    %v20 = vld [vmem:[%s1] sm:$0xff]
    %v21 = vld [vmem:[%s1 + $0x8] sm:$0xff]
    %v22 = vld [vmem:[%s1 + $0x10] sm:$0xff]
    %v23 = vld [vmem:[%s1 + $0x18] sm:$0xff]
    %v24 = vld [vmem:[%s1 + $0x20] sm:$0xff]
    %v25 = vld [vmem:[%s1 + $0x28] sm:$0xff]
    %v26 = vld [vmem:[%s1 + $0x30] sm:$0xff]
    %v27 = vld [vmem:[%s1 + $0x38] sm:$0xff]
    %v28 = vld [vmem:[%s1 + $0x40] sm:$0xff]
    %v29 = vld [vmem:[%s1 + $0x48] sm:$0xff]
    %v30 = vld [vmem:[%s1 + $0x50] sm:$0xff]
    %v31 = vld [vmem:[%s1 + $0x58] sm:$0xff]
    %v32 = vld [vmem:[%s1 + $0x60] sm:$0xff]
    %v33 = vld [vmem:[%s1 + $0x68] sm:$0xff]
    %v34 = vld [vmem:[%s1 + $0x70] sm:$0xff]
    %v35 = vld [vmem:[%s1 + $0x78] sm:$0xff]
    %v36 = vld [vmem:[%s1 + $0x80] sm:$0xff]
    %v37 = vld [vmem:[%s1 + $0x88] sm:$0xff]
    %v38 = vld [vmem:[%s1 + $0x90] sm:$0xff]
    %v39 = vld [vmem:[%s1 + $0x98] sm:$0xff]
    %v40 = vld [vmem:[%s1 + $0xa0] sm:$0xff]
    %v41 = vld [vmem:[%s1 + $0xa8] sm:$0xff]
    %v42 = vld [vmem:[%s1 + $0xb0] sm:$0xff]
    %v43 = vld [vmem:[%s1 + $0xb8] sm:$0xff]
    %v44 = vld [vmem:[%s1 + $0xc0] sm:$0xff]
    %v45 = vld [vmem:[%s1 + $0xc8] sm:$0xff]
    %v46 = vld [vmem:[%s1 + $0xd0] sm:$0xff]
    %v47 = vld [vmem:[%s1 + $0xd8] sm:$0xff]
    %v48 = vld [vmem:[%s1 + $0xe0] sm:$0xff]
    %v49 = vld [vmem:[%s1 + $0xe8] sm:$0xff]
    %v50 = vld [vmem:[%s1 + $0xf0] sm:$0xff]
    %v51 = vld [vmem:[%s1 + $0xf8] sm:$0xff]
    %v52 = vld [vmem:[%s1 + $0x100] sm:$0xff]
    %v53 = vld [vmem:[%s1 + $0x108] sm:$0xff]
    %v54 = vld [vmem:[%s1 + $0x110] sm:$0xff]
    %v55 = vld [vmem:[%s1 + $0x118] sm:$0xff]
    %v56 = vld [vmem:[%s1 + $0x120] sm:$0xff]
    %v57 = vld [vmem:[%s1 + $0x128] sm:$0xff]
    %v58 = vld [vmem:[%s1 + $0x130] sm:$0xff]
    %v59 = vld [vmem:[%s1 + $0x138] sm:$0xff]
    %v60 = vld [vmem:[%s1 + $0x140] sm:$0xff]
    %v61 = vld [vmem:[%s1 + $0x148] sm:$0xff]
    %v62 = vld [vmem:[%s1 + $0x150] sm:$0xff]
    %v63 = vld [vmem:[%s1 + $0x158] sm:$0xff]
    %v64 = vld [vmem:[%s1 + $0x160] sm:$0xff]
    %v65 = vld [vmem:[%s1 + $0x168] sm:$0xff]
    %v66 = vld [vmem:[%s1 + $0x170] sm:$0xff]
    %v67 = vld [vmem:[%s1 + $0x178] sm:$0xff]
    %v68 = vld [vmem:[%s1 + $0x180] sm:$0xff]
    %v69 = vld [vmem:[%s1 + $0x188] sm:$0xff]
    %v70 = vld [vmem:[%s1 + $0x190] sm:$0xff]
    %v71 = vld [vmem:[%s1 + $0x198] sm:$0xff]
    %v72 = vld [vmem:[%s1 + $0x1a0] sm:$0xff]
    %v73 = vld [vmem:[%s1 + $0x1a8] sm:$0xff]
    %v74 = vld [vmem:[%s1 + $0x1b0] sm:$0xff]
    %v75 = vld [vmem:[%s1 + $0x1b8] sm:$0xff]
    %v76 = vld [vmem:[%s1 + $0x1c0] sm:$0xff]
    %v77 = vld [vmem:[%s1 + $0x1c8] sm:$0xff]
    %v78 = vld [vmem:[%s1 + $0x1d0] sm:$0xff]
    %v79 = vld [vmem:[%s1 + $0x1d8] sm:$0xff]
    %vm80 = vcmask 785408
    %v82 = vsel %vm80, %v19, 0
    %84 = vmatprep.subr.mxu0 %v21
    %85 = vmatpush1.msra.mxu0 %v20
    %86 = vmatprep.subr.mxu0 %v26
    %87 = vmatpush1.msra.mxu0 %v25
    %88 = vmatprep.subr.mxu0 %v31
    %89 = vmatpush1.msra.mxu0 %v30
    %90 = vmatprep.subr.mxu0 %v36
    %91 = vmatpush1.msra.mxu0 %v35
    %92 = vmatprep.subr.mxu0 %v41
    %93 = vmatpush1.msra.mxu0 %v40
    %94 = vmatprep.subr.mxu0 %v46
    %95 = vmatpush1.msra.mxu0 %v45
    %96 = vmatprep.subr.mxu0 %v51
    %97 = vmatpush1.msra.mxu0 %v50
    %98 = vmatprep.subr.mxu0 %v56
    %99 = vmatpush1.msra.mxu0 %v55
    %100 = vmatprep.subr.mxu0 %v61
    %101 = vmatpush1.msra.mxu0 %v60
    %102 = vmatprep.subr.mxu0 %v66
    %103 = vmatpush1.msra.mxu0 %v65
    %104 = vmatprep.subr.mxu0 %v71
    %105 = vmatpush1.msra.mxu0 %v70
    %106 = vmatprep.subr.mxu0 %v76
    %107 = vmatpush1.msra.mxu0 %v75
    %108 = vmatprep.subr.mxu0 0.0
    %109 = vmatpush1.msra.mxu0 0.0
    %110 = vmatprep.subr.mxu0 0.0
    %111 = vmatpush1.msra.mxu0 0.0
    %112 = vmatprep.subr.mxu0 0.0
    %113 = vmatpush1.msra.mxu0 0.0
    %114 = vmatprep.subr.mxu0 0.0
    %115 = vmatpush1.msra.mxu0 0.0
    %116 = vmatprep.subr.mxu0 0.0
    %117 = vmatpush1.msra.mxu0 0.0
    %118 = vmatprep.subr.mxu0 0.0
    %119 = vmatpush1.msra.mxu0 0.0
    %120 = vmatprep.subr.mxu0 0.0
    %121 = vmatpush1.msra.mxu0 0.0
    %122 = vmatprep.subr.mxu0 0.0
    %123 = vmatpush1.msra.mxu0 0.0
    %124 = vmatprep.subr.mxu0 0.0
    %125 = vmatpush1.msra.mxu0 0.0
    %126 = vmatprep.subr.mxu0 0.0
    %127 = vmatpush1.msra.mxu0 0.0
    %128 = vmatprep.subr.mxu0 0.0
    %129 = vmatpush1.msra.mxu0 0.0
    %130 = vmatprep.subr.mxu0 0.0
    %131 = vmatpush1.msra.mxu0 0.0
    %132 = vmatprep.subr.mxu0 0.0
    %133 = vmatpush1.msra.mxu0 0.0
    %134 = vmatprep.subr.mxu0 0.0
    %135 = vmatpush1.msra.mxu0 0.0
    %136 = vmatprep.subr.mxu0 0.0
    %137 = vmatpush1.msra.mxu0 0.0
    %138 = vmatprep.subr.mxu0 0.0
    %139 = vmatpush1.msra.mxu0 0.0
    %140 = vmatprep.subr.mxu0 0.0
    %141 = vmatpush1.msra.mxu0 0.0
    %142 = vmatprep.subr.mxu0 0.0
    %143 = vmatpush1.msra.mxu0 0.0
    %144 = vmatprep.subr.mxu0 0.0
    %145 = vmatpush1.msra.mxu0 0.0
    %146 = vmatprep.subr.mxu0 0.0
    %147 = vmatpush1.msra.mxu0 0.0
    %148 = vmatprep.mubr.f32.mxu0 0.0
    %149 = vmatmul.mubr.f32.gmra.mrb[0].mxu0 %v82
    %v150 = vpop.f32.mrb[0].mxu0
    %v151 = vadd.f32 0.0, %v150
    %v152 = vpop.f32.mrb[0].mxu0
    %v153 = vadd.f32 0.0, %v152
    %154 = vdwg.mxu0
    %155 = vmatprep.subr.mxu0 %v23
    %156 = vmatpush1.msra.mxu0 %v22
    %157 = vmatprep.subr.mxu0 %v28
    %158 = vmatpush1.msra.mxu0 %v27
    %159 = vmatprep.subr.mxu0 %v33
    %160 = vmatpush1.msra.mxu0 %v32
    %161 = vmatprep.subr.mxu0 %v38
    %162 = vmatpush1.msra.mxu0 %v37
    %163 = vmatprep.subr.mxu0 %v43
    %164 = vmatpush1.msra.mxu0 %v42
    %165 = vmatprep.subr.mxu0 %v48
    %166 = vmatpush1.msra.mxu0 %v47
    %167 = vmatprep.subr.mxu0 %v53
    %168 = vmatpush1.msra.mxu0 %v52
    %169 = vmatprep.subr.mxu0 %v58
    %170 = vmatpush1.msra.mxu0 %v57
    %171 = vmatprep.subr.mxu0 %v63
    %172 = vmatpush1.msra.mxu0 %v62
    %173 = vmatprep.subr.mxu0 %v68
    %174 = vmatpush1.msra.mxu0 %v67
    %175 = vmatprep.subr.mxu0 %v73
    %176 = vmatpush1.msra.mxu0 %v72
    %177 = vmatprep.subr.mxu0 %v78
    %178 = vmatpush1.msra.mxu0 %v77
    %179 = vmatprep.subr.mxu0 0.0
    %180 = vmatpush1.msra.mxu0 0.0
    %181 = vmatprep.subr.mxu0 0.0
    %182 = vmatpush1.msra.mxu0 0.0
    %183 = vmatprep.subr.mxu0 0.0
    %184 = vmatpush1.msra.mxu0 0.0
    %185 = vmatprep.subr.mxu0 0.0
    %186 = vmatpush1.msra.mxu0 0.0
    %187 = vmatprep.subr.mxu0 0.0
    %188 = vmatpush1.msra.mxu0 0.0
    %189 = vmatprep.subr.mxu0 0.0
    %190 = vmatpush1.msra.mxu0 0.0
    %191 = vmatprep.subr.mxu0 0.0
    %192 = vmatpush1.msra.mxu0 0.0
    %193 = vmatprep.subr.mxu0 0.0
    %194 = vmatpush1.msra.mxu0 0.0
    %195 = vmatprep.subr.mxu0 0.0
    %196 = vmatpush1.msra.mxu0 0.0
    %197 = vmatprep.subr.mxu0 0.0
    %198 = vmatpush1.msra.mxu0 0.0
    %199 = vmatprep.subr.mxu0 0.0
    %200 = vmatpush1.msra.mxu0 0.0
    %201 = vmatprep.subr.mxu0 0.0
    %202 = vmatpush1.msra.mxu0 0.0
    %203 = vmatprep.subr.mxu0 0.0
    %204 = vmatpush1.msra.mxu0 0.0
    %205 = vmatprep.subr.mxu0 0.0
    %206 = vmatpush1.msra.mxu0 0.0
    %207 = vmatprep.subr.mxu0 0.0
    %208 = vmatpush1.msra.mxu0 0.0
    %209 = vmatprep.subr.mxu0 0.0
    %210 = vmatpush1.msra.mxu0 0.0
    %211 = vmatprep.subr.mxu0 0.0
    %212 = vmatpush1.msra.mxu0 0.0
    %213 = vmatprep.subr.mxu0 0.0
    %214 = vmatpush1.msra.mxu0 0.0
    %215 = vmatprep.subr.mxu0 0.0
    %216 = vmatpush1.msra.mxu0 0.0
    %217 = vmatprep.subr.mxu0 0.0
    %218 = vmatpush1.msra.mxu0 0.0
    %219 = vmatprep.mubr.f32.mxu0 0.0
    %220 = vmatmul.mubr.f32.gmra.mrb[0].mxu0 %v82
    %v221 = vpop.f32.mrb[0].mxu0
    %v222 = vadd.f32 0.0, %v221
    %v223 = vpop.f32.mrb[0].mxu0
    %v224 = vadd.f32 0.0, %v223
    %225 = vdwg.mxu0
    %226 = vmatprep.subr.mxu0 0.0
    %227 = vmatpush1.msra.mxu0 %v24
    %228 = vmatprep.subr.mxu0 0.0
    %229 = vmatpush1.msra.mxu0 %v29
    %230 = vmatprep.subr.mxu0 0.0
    %231 = vmatpush1.msra.mxu0 %v34
    %232 = vmatprep.subr.mxu0 0.0
    %233 = vmatpush1.msra.mxu0 %v39
    %234 = vmatprep.subr.mxu0 0.0
    %235 = vmatpush1.msra.mxu0 %v44
    %236 = vmatprep.subr.mxu0 0.0
    %237 = vmatpush1.msra.mxu0 %v49
    %238 = vmatprep.subr.mxu0 0.0
    %239 = vmatpush1.msra.mxu0 %v54
    %240 = vmatprep.subr.mxu0 0.0
    %241 = vmatpush1.msra.mxu0 %v59
    %242 = vmatprep.subr.mxu0 0.0
    %243 = vmatpush1.msra.mxu0 %v64
    %244 = vmatprep.subr.mxu0 0.0
    %245 = vmatpush1.msra.mxu0 %v69
    %246 = vmatprep.subr.mxu0 0.0
    %247 = vmatpush1.msra.mxu0 %v74
    %248 = vmatprep.subr.mxu0 0.0
    %249 = vmatpush1.msra.mxu0 %v79
    %250 = vmatprep.subr.mxu0 0.0
    %251 = vmatpush1.msra.mxu0 0.0
    %252 = vmatprep.subr.mxu0 0.0
    %253 = vmatpush1.msra.mxu0 0.0
    %254 = vmatprep.subr.mxu0 0.0
    %255 = vmatpush1.msra.mxu0 0.0
    %256 = vmatprep.subr.mxu0 0.0
    %257 = vmatpush1.msra.mxu0 0.0
    %258 = vmatprep.subr.mxu0 0.0
    %259 = vmatpush1.msra.mxu0 0.0
    %260 = vmatprep.subr.mxu0 0.0
    %261 = vmatpush1.msra.mxu0 0.0
    %262 = vmatprep.subr.mxu0 0.0
    %263 = vmatpush1.msra.mxu0 0.0
    %264 = vmatprep.subr.mxu0 0.0
    %265 = vmatpush1.msra.mxu0 0.0
    %266 = vmatprep.subr.mxu0 0.0
    %267 = vmatpush1.msra.mxu0 0.0
    %268 = vmatprep.subr.mxu0 0.0
    %269 = vmatpush1.msra.mxu0 0.0
    %270 = vmatprep.subr.mxu0 0.0
    %271 = vmatpush1.msra.mxu0 0.0
    %272 = vmatprep.subr.mxu0 0.0
    %273 = vmatpush1.msra.mxu0 0.0
    %274 = vmatprep.subr.mxu0 0.0
    %275 = vmatpush1.msra.mxu0 0.0
    %276 = vmatprep.subr.mxu0 0.0
    %277 = vmatpush1.msra.mxu0 0.0
    %278 = vmatprep.subr.mxu0 0.0
    %279 = vmatpush1.msra.mxu0 0.0
    %280 = vmatprep.subr.mxu0 0.0
    %281 = vmatpush1.msra.mxu0 0.0
    %282 = vmatprep.subr.mxu0 0.0
    %283 = vmatpush1.msra.mxu0 0.0
    %284 = vmatprep.subr.mxu0 0.0
    %285 = vmatpush1.msra.mxu0 0.0
    %286 = vmatprep.subr.mxu0 0.0
    %287 = vmatpush1.msra.mxu0 0.0
    %288 = vmatprep.subr.mxu0 0.0
    %289 = vmatpush1.msra.mxu0 0.0
    %290 = vmatprep.mubr.f32.mxu0 0.0
    %291 = vmatmul.mubr.f32.gmra.mrb[0].mxu0 %v82
    %v292 = vpop.f32.mrb[0].mxu0
    %v293 = vadd.f32 0.0, %v292
    %v294 = vpop.f32.mrb[0].mxu0
    %295 = vdwg.mxu0
    %v297 = vrot.slane %v153, 6
    %v300 = vrot.slane %v222, 4
    %v303 = vrot.slane %v224, 2
    %vm305 = vcmask 1041408
    %v306 = vsel %vm305, %v151, %v297
    %vm307 = vcmask 1043456
    %v308 = vsel %vm307, %v306, %v300
    %vm309 = vcmask 1045504
    %v310 = vsel %vm309, %v308, %v303
    %v311 = vld [vmem:[%s2] sm:$0xff]
    %v312 = vld [vmem:[%s2 + $0x10] sm:$0xff]
    %vm313 = vcmask 80896
    %v315 = vsel %vm313, %v311, 0
    %v318 = vsel %vm313, %v312, 0
    %v321 = vsel %vm305, %v293, 0
    %323 = vmatprep.subr.mxu0 0.0
    %324 = vmatpush1.msra.mxu0 %v310
    %325 = vmatprep.subr.mxu0 0.0
    %326 = vmatpush1.msra.mxu0 %v321
    %327 = vmatprep.subr.mxu0 0.0
    %328 = vmatpush1.msra.mxu0 0.0
    %329 = vmatprep.subr.mxu0 0.0
    %330 = vmatpush1.msra.mxu0 0.0
    %331 = vmatprep.subr.mxu0 0.0
    %332 = vmatpush1.msra.mxu0 0.0
    %333 = vmatprep.subr.mxu0 0.0
    %334 = vmatpush1.msra.mxu0 0.0
    %335 = vmatprep.subr.mxu0 0.0
    %336 = vmatpush1.msra.mxu0 0.0
    %337 = vmatprep.subr.mxu0 0.0
    %338 = vmatpush1.msra.mxu0 0.0
    %339 = vmatprep.subr.mxu0 0.0
    %340 = vmatpush1.msra.mxu0 0.0
    %341 = vmatprep.subr.mxu0 0.0
    %342 = vmatpush1.msra.mxu0 0.0
    %343 = vmatprep.subr.mxu0 0.0
    %344 = vmatpush1.msra.mxu0 0.0
    %345 = vmatprep.subr.mxu0 0.0
    %346 = vmatpush1.msra.mxu0 0.0
    %347 = vmatprep.subr.mxu0 0.0
    %348 = vmatpush1.msra.mxu0 0.0
    %349 = vmatprep.subr.mxu0 0.0
    %350 = vmatpush1.msra.mxu0 0.0
    %351 = vmatprep.subr.mxu0 0.0
    %352 = vmatpush1.msra.mxu0 0.0
    %353 = vmatprep.subr.mxu0 0.0
    %354 = vmatpush1.msra.mxu0 0.0
    %355 = vmatprep.subr.mxu0 0.0
    %356 = vmatpush1.msra.mxu0 0.0
    %357 = vmatprep.subr.mxu0 0.0
    %358 = vmatpush1.msra.mxu0 0.0
    %359 = vmatprep.subr.mxu0 0.0
    %360 = vmatpush1.msra.mxu0 0.0
    %361 = vmatprep.subr.mxu0 0.0
    %362 = vmatpush1.msra.mxu0 0.0
    %363 = vmatprep.subr.mxu0 0.0
    %364 = vmatpush1.msra.mxu0 0.0
    %365 = vmatprep.subr.mxu0 0.0
    %366 = vmatpush1.msra.mxu0 0.0
    %367 = vmatprep.subr.mxu0 0.0
    %368 = vmatpush1.msra.mxu0 0.0
    %369 = vmatprep.subr.mxu0 0.0
    %370 = vmatpush1.msra.mxu0 0.0
    %371 = vmatprep.subr.mxu0 0.0
    %372 = vmatpush1.msra.mxu0 0.0
    %373 = vmatprep.subr.mxu0 0.0
    %374 = vmatpush1.msra.mxu0 0.0
    %375 = vmatprep.subr.mxu0 0.0
    %376 = vmatpush1.msra.mxu0 0.0
    %377 = vmatprep.subr.mxu0 0.0
    %378 = vmatpush1.msra.mxu0 0.0
    %379 = vmatprep.subr.mxu0 0.0
    %380 = vmatpush1.msra.mxu0 0.0
    %381 = vmatprep.subr.mxu0 0.0
    %382 = vmatpush1.msra.mxu0 0.0
    %383 = vmatprep.subr.mxu0 0.0
    %384 = vmatpush1.msra.mxu0 0.0
    %385 = vmatprep.subr.mxu0 0.0
    %386 = vmatpush1.msra.mxu0 0.0
    %387 = vmatprep.mubr.f32.mxu0 0.0
    %388 = vmatmul.mubr.f32.gmra.mrb[0].mxu0 %v315
    %v389 = vpop.f32.mrb[0].mxu0
    %v390 = vadd.f32 0.0, %v389
    %v391 = vpop.f32.mrb[0].mxu0
    %392 = vmatprep.mubr.f32.mxu0 0.0
    %393 = vmatmul.mubr.f32.gmra.mrb[0].mxu0 %v318
    %v394 = vpop.f32.mrb[0].mxu0
    %v395 = vadd.f32 0.0, %v394
    %v396 = vpop.f32.mrb[0].mxu0
    %397 = vdwg.mxu0
    %v398 = vld [vmem:[%s3] sm:$0xff]
    %v399 = vld [vmem:[%s3 + $0x8] sm:$0xff]
    %v400 = vld [vmem:[%s3 + $0x10] sm:$0xff]
    %v401 = vld [vmem:[%s3 + $0x18] sm:$0xff]
    %v402 = vld [vmem:[%s2 + $0x20] sm:$0xff]
    %v403 = vld [vmem:[%s2 + $0x30] sm:$0xff]
    %vm404 = vcmask 572416
    %v405 = vsel %vm404, %v390, 0.0
    %406 = vadd.xlane.f32.xlu0 %v405
    %v407 = vpop.xlane.xlu0 %406
    %v408 = vsel %vm404, %v395, 0.0
    %409 = vadd.xlane.f32.xlu0 %v408
    %v410 = vpop.xlane.xlu0 %409
    %vm411 = vcmask 130048
    %v413 = vsel %vm411, %v402, 0
    %v416 = vsel %vm411, %v403, 0
    %418 = vmatprep.subr.mxu0 0.0
    %419 = vmatpush1.msra.mxu0 %v407
    %420 = vmatprep.subr.mxu0 0.0
    %421 = vmatpush1.msra.mxu0 %v410
    %422 = vmatprep.subr.mxu0 0.0
    %423 = vmatpush1.msra.mxu0 0.0
    %424 = vmatprep.subr.mxu0 0.0
    %425 = vmatpush1.msra.mxu0 0.0
    %426 = vmatprep.subr.mxu0 0.0
    %427 = vmatpush1.msra.mxu0 0.0
    %428 = vmatprep.subr.mxu0 0.0
    %429 = vmatpush1.msra.mxu0 0.0
    %430 = vmatprep.subr.mxu0 0.0
    %431 = vmatpush1.msra.mxu0 0.0
    %432 = vmatprep.subr.mxu0 0.0
    %433 = vmatpush1.msra.mxu0 0.0
    %434 = vmatprep.subr.mxu0 0.0
    %435 = vmatpush1.msra.mxu0 0.0
    %436 = vmatprep.subr.mxu0 0.0
    %437 = vmatpush1.msra.mxu0 0.0
    %438 = vmatprep.subr.mxu0 0.0
    %439 = vmatpush1.msra.mxu0 0.0
    %440 = vmatprep.subr.mxu0 0.0
    %441 = vmatpush1.msra.mxu0 0.0
    %442 = vmatprep.subr.mxu0 0.0
    %443 = vmatpush1.msra.mxu0 0.0
    %444 = vmatprep.subr.mxu0 0.0
    %445 = vmatpush1.msra.mxu0 0.0
    %446 = vmatprep.subr.mxu0 0.0
    %447 = vmatpush1.msra.mxu0 0.0
    %448 = vmatprep.subr.mxu0 0.0
    %449 = vmatpush1.msra.mxu0 0.0
    %450 = vmatprep.subr.mxu0 0.0
    %451 = vmatpush1.msra.mxu0 0.0
    %452 = vmatprep.subr.mxu0 0.0
    %453 = vmatpush1.msra.mxu0 0.0
    %454 = vmatprep.subr.mxu0 0.0
    %455 = vmatpush1.msra.mxu0 0.0
    %456 = vmatprep.subr.mxu0 0.0
    %457 = vmatpush1.msra.mxu0 0.0
    %458 = vmatprep.subr.mxu0 0.0
    %459 = vmatpush1.msra.mxu0 0.0
    %460 = vmatprep.subr.mxu0 0.0
    %461 = vmatpush1.msra.mxu0 0.0
    %462 = vmatprep.subr.mxu0 0.0
    %463 = vmatpush1.msra.mxu0 0.0
    %464 = vmatprep.subr.mxu0 0.0
    %465 = vmatpush1.msra.mxu0 0.0
    %466 = vmatprep.subr.mxu0 0.0
    %467 = vmatpush1.msra.mxu0 0.0
    %468 = vmatprep.subr.mxu0 0.0
    %469 = vmatpush1.msra.mxu0 0.0
    %470 = vmatprep.subr.mxu0 0.0
    %471 = vmatpush1.msra.mxu0 0.0
    %472 = vmatprep.subr.mxu0 0.0
    %473 = vmatpush1.msra.mxu0 0.0
    %474 = vmatprep.subr.mxu0 0.0
    %475 = vmatpush1.msra.mxu0 0.0
    %476 = vmatprep.subr.mxu0 0.0
    %477 = vmatpush1.msra.mxu0 0.0
    %478 = vmatprep.subr.mxu0 0.0
    %479 = vmatpush1.msra.mxu0 0.0
    %480 = vmatprep.subr.mxu0 0.0
    %481 = vmatpush1.msra.mxu0 0.0
    %482 = vmatprep.mubr.f32.mxu0 0.0
    %483 = vmatmul.mubr.f32.gmra.mrb[0].mxu0 %v413
    %v484 = vpop.f32.mrb[0].mxu0
    %v485 = vadd.f32 0.0, %v484
    %v486 = vpop.f32.mrb[0].mxu0
    %487 = vmatprep.mubr.f32.mxu0 0.0
    %488 = vmatmul.mubr.f32.gmra.mrb[0].mxu0 %v416
    %v489 = vpop.f32.mrb[0].mxu0
    %v490 = vadd.f32 0.0, %v489
    %v491 = vpop.f32.mrb[0].mxu0
    %492 = vdwg.mxu0
    %v493 = vmul.f32 %v390, %v390
    %v494 = vmul.f32 %v395, %v395
    %v495 = vsel %vm404, %v493, 0.0
    %496 = vadd.xlane.f32.xlu0 %v495
    %v497 = vpop.xlane.xlu0 %496
    %v498 = vsel %vm404, %v494, 0.0
    %499 = vadd.xlane.f32.xlu0 %v498
    %v500 = vpop.xlane.xlu0 %499
    %501 = vmatprep.subr.mxu0 0.0
    %502 = vmatpush1.msra.mxu0 %v497
    %503 = vmatprep.subr.mxu0 0.0
    %504 = vmatpush1.msra.mxu0 %v500
    %505 = vmatprep.subr.mxu0 0.0
    %506 = vmatpush1.msra.mxu0 0.0
    %507 = vmatprep.subr.mxu0 0.0
    %508 = vmatpush1.msra.mxu0 0.0
    %509 = vmatprep.subr.mxu0 0.0
    %510 = vmatpush1.msra.mxu0 0.0
    %511 = vmatprep.subr.mxu0 0.0
    %512 = vmatpush1.msra.mxu0 0.0
    %513 = vmatprep.subr.mxu0 0.0
    %514 = vmatpush1.msra.mxu0 0.0
    %515 = vmatprep.subr.mxu0 0.0
    %516 = vmatpush1.msra.mxu0 0.0
    %517 = vmatprep.subr.mxu0 0.0
    %518 = vmatpush1.msra.mxu0 0.0
    %519 = vmatprep.subr.mxu0 0.0
    %520 = vmatpush1.msra.mxu0 0.0
    %521 = vmatprep.subr.mxu0 0.0
    %522 = vmatpush1.msra.mxu0 0.0
    %523 = vmatprep.subr.mxu0 0.0
    %524 = vmatpush1.msra.mxu0 0.0
    %525 = vmatprep.subr.mxu0 0.0
    %526 = vmatpush1.msra.mxu0 0.0
    %527 = vmatprep.subr.mxu0 0.0
    %528 = vmatpush1.msra.mxu0 0.0
    %529 = vmatprep.subr.mxu0 0.0
    %530 = vmatpush1.msra.mxu0 0.0
    %531 = vmatprep.subr.mxu0 0.0
    %532 = vmatpush1.msra.mxu0 0.0
    %533 = vmatprep.subr.mxu0 0.0
    %534 = vmatpush1.msra.mxu0 0.0
    %535 = vmatprep.subr.mxu0 0.0
    %536 = vmatpush1.msra.mxu0 0.0
    %537 = vmatprep.subr.mxu0 0.0
    %538 = vmatpush1.msra.mxu0 0.0
    %539 = vmatprep.subr.mxu0 0.0
    %540 = vmatpush1.msra.mxu0 0.0
    %541 = vmatprep.subr.mxu0 0.0
    %542 = vmatpush1.msra.mxu0 0.0
    %543 = vmatprep.subr.mxu0 0.0
    %544 = vmatpush1.msra.mxu0 0.0
    %545 = vmatprep.subr.mxu0 0.0
    %546 = vmatpush1.msra.mxu0 0.0
    %547 = vmatprep.subr.mxu0 0.0
    %548 = vmatpush1.msra.mxu0 0.0
    %549 = vmatprep.subr.mxu0 0.0
    %550 = vmatpush1.msra.mxu0 0.0
    %551 = vmatprep.subr.mxu0 0.0
    %552 = vmatpush1.msra.mxu0 0.0
    %553 = vmatprep.subr.mxu0 0.0
    %554 = vmatpush1.msra.mxu0 0.0
    %555 = vmatprep.subr.mxu0 0.0
    %556 = vmatpush1.msra.mxu0 0.0
    %557 = vmatprep.subr.mxu0 0.0
    %558 = vmatpush1.msra.mxu0 0.0
    %559 = vmatprep.subr.mxu0 0.0
    %560 = vmatpush1.msra.mxu0 0.0
    %561 = vmatprep.subr.mxu0 0.0
    %562 = vmatpush1.msra.mxu0 0.0
    %563 = vmatprep.subr.mxu0 0.0
    %564 = vmatpush1.msra.mxu0 0.0
    %565 = vmatprep.mubr.f32.mxu0 0.0
    %566 = vmatmul.mubr.f32.gmra.mrb[0].mxu0 %v413
    %v567 = vpop.f32.mrb[0].mxu0
    %v568 = vadd.f32 0.0, %v567
    %v569 = vpop.f32.mrb[0].mxu0
    %570 = vmatprep.mubr.f32.mxu0 0.0
    %571 = vmatmul.mubr.f32.gmra.mrb[0].mxu0 %v416
    %v572 = vpop.f32.mrb[0].mxu0
    %v573 = vadd.f32 0.0, %v572
    %v574 = vpop.f32.mrb[0].mxu0
    %575 = vdwg.mxu0
    %v576 = vmul.f32 %v485, 0.016666668
    %v577 = vmul.f32 %v490, 0.016666668
    %v578 = vmul.f32 %v568, 0.016666668
    %v579 = vmul.f32 %v573, 0.016666668
    %v580 = vmul.f32 %v576, %v576
    %v581 = vmul.f32 %v577, %v577
    %v582 = vsub.f32 %v578, %v580
    %v583 = vsub.f32 %v579, %v581
    %v584 = vmax.f32 %v582, 0.0
    %v585 = vmax.f32 %v583, 0.0
    %v586 = vadd.f32 %v584, 1e-05
    %v587 = vadd.f32 %v585, 1e-05
    %v588 = vrsqrt.pop %v586
    %v589 = vrsqrt.pop %v587
    %v590 = vmul.f32 %v588, %v398
    %v591 = vmul.f32 %v589, %v399
    %v592 = vmul.f32 %v576, %v590
    %v593 = vmul.f32 %v577, %v591
    %v594 = vsub.f32 %v400, %v592
    %v595 = vsub.f32 %v401, %v593
    %597 = vset.pattern.permute.xlu0 0
    %598 = vperm.xlu0 %597, %v590
    %v599 = vpop.permute.xlu0 %598
    %602 = vset.pattern.permute.xlu0 0
    %603 = vperm.xlu0 %602, %v591
    %v604 = vpop.permute.xlu0 %603
    %v606 = vmul.f32 %v390, %v599
    %v607 = vmul.f32 %v395, %v604
    %609 = vset.pattern.permute.xlu0 0
    %610 = vperm.xlu0 %609, %v594
    %v611 = vpop.permute.xlu0 %610
    %614 = vset.pattern.permute.xlu0 0
    %615 = vperm.xlu0 %614, %v595
    %v616 = vpop.permute.xlu0 %615
    %v618 = vadd.f32 %v606, %v611
    %v619 = vadd.f32 %v607, %v616
    %v620 = vmax.f32 %v618, 0.0
    %v621 = vmax.f32 %v619, 0.0
    %v622 = vlaneseq
    %v623 = vshrl.u32 %v622, 7
    %v624 = vsub.s32 0, %v623
    %v625 = vrot.slane %v18, %v624
    %v626 = vmul.f32 %v620, %v625
    %v627 = vmul.f32 %v621, %v625
    %630 = vrot.lane.b32.xlu0 %v626, 21
    %v631 = vpop.permute.xlu0 %630
    %632 = vrot.lane.b32.xlu0 %v627, 21
    %v633 = vpop.permute.xlu0 %632
    %vm636 = vcmask 171008
    %v637 = vsel %vm636, 0.0, %v631
    %v638 = vsel %vm636, 0.0, %v633
    %vm639 = vcmask 744448
    %v640 = vsel %vm639, %v637, 0.0
    %v641 = vsel %vm639, %v638, 0.0
    %644 = vrot.lane.b32.xlu0 %v640, 121
    %v645 = vpop.permute.xlu0 %644
    %646 = vrot.lane.b32.xlu0 %v641, 121
    %v647 = vpop.permute.xlu0 %646
    %648 = vrot.lane.b32.xlu0 %v640, 114
    %v649 = vpop.permute.xlu0 %648
    %650 = vrot.lane.b32.xlu0 %v641, 114
    %v651 = vpop.permute.xlu0 %650
    %652 = vrot.lane.b32.xlu0 %v640, 7
    %v653 = vpop.permute.xlu0 %652
    %654 = vrot.lane.b32.xlu0 %v641, 7
    %v655 = vpop.permute.xlu0 %654
    %656 = vrot.lane.b32.xlu0 %v640, 107
    %v657 = vpop.permute.xlu0 %656
    %658 = vrot.lane.b32.xlu0 %v641, 107
    %v659 = vpop.permute.xlu0 %658
    %660 = vrot.lane.b32.xlu0 %v640, 14
    %v661 = vpop.permute.xlu0 %660
    %662 = vrot.lane.b32.xlu0 %v641, 14
    %v663 = vpop.permute.xlu0 %662
    %664 = vrot.lane.b32.xlu0 %v640, 100
    %v665 = vpop.permute.xlu0 %664
    %666 = vrot.lane.b32.xlu0 %v641, 100
    %v667 = vpop.permute.xlu0 %666
    %v668 = vld [vmem:[%s2 + $0xb0] sm:$0xff]
    %v669 = vld [vmem:[%s2 + $0xb8] sm:$0xff]
    %v670 = vld [vmem:[%s2 + $0xc0] sm:$0xff]
    %v671 = vld [vmem:[%s2 + $0xc8] sm:$0xff]
    %v672 = vld [vmem:[%s2 + $0xd0] sm:$0xff]
    %v673 = vld [vmem:[%s2 + $0xd8] sm:$0xff]
    %v674 = vld [vmem:[%s2 + $0xe0] sm:$0xff]
    %v675 = vld [vmem:[%s2 + $0xe8] sm:$0xff]
    %v676 = vld [vmem:[%s2 + $0xf0] sm:$0xff]
    %v677 = vld [vmem:[%s2 + $0xf8] sm:$0xff]
    %v678 = vld [vmem:[%s2 + $0x100] sm:$0xff]
    %v679 = vld [vmem:[%s2 + $0x108] sm:$0xff]
    %680 = vrot.lane.b32.xlu0 %v645, 114
    %v681 = vpop.permute.xlu0 %680
    %682 = vrot.lane.b32.xlu0 %v647, 114
    %v683 = vpop.permute.xlu0 %682
    %684 = vrot.lane.b32.xlu0 %v649, 114
    %v685 = vpop.permute.xlu0 %684
    %686 = vrot.lane.b32.xlu0 %v651, 114
    %v687 = vpop.permute.xlu0 %686
    %688 = vrot.lane.b32.xlu0 %v653, 114
    %v689 = vpop.permute.xlu0 %688
    %690 = vrot.lane.b32.xlu0 %v655, 114
    %v691 = vpop.permute.xlu0 %690
    %692 = vrot.lane.b32.xlu0 %v657, 114
    %v693 = vpop.permute.xlu0 %692
    %694 = vrot.lane.b32.xlu0 %v659, 114
    %v695 = vpop.permute.xlu0 %694
    %696 = vrot.lane.b32.xlu0 %v661, 114
    %v697 = vpop.permute.xlu0 %696
    %698 = vrot.lane.b32.xlu0 %v663, 114
    %v699 = vpop.permute.xlu0 %698
    %700 = vrot.lane.b32.xlu0 %v665, 114
    %v701 = vpop.permute.xlu0 %700
    %702 = vrot.lane.b32.xlu0 %v667, 114
    %v703 = vpop.permute.xlu0 %702
    %v719 = vsel %vm411, %v669, 0
    %v722 = vsel %vm411, %v671, 0
    %v725 = vsel %vm411, %v673, 0
    %v728 = vsel %vm411, %v675, 0
    %v731 = vsel %vm411, %v677, 0
    %v734 = vsel %vm411, %v679, 0
    %736 = vmatprep.subr.mxu0 0.0
    %737 = vmatpush1.msra.mxu0 %v649
    %738 = vmatprep.subr.mxu0 0.0
    %739 = vmatpush1.msra.mxu0 %v651
    %740 = vmatprep.subr.mxu0 0.0
    %741 = vmatpush1.msra.mxu0 %v681
    %742 = vmatprep.subr.mxu0 0.0
    %743 = vmatpush1.msra.mxu0 %v683
    %744 = vmatprep.subr.mxu0 0.0
    %745 = vmatpush1.msra.mxu0 %v685
    %746 = vmatprep.subr.mxu0 0.0
    %747 = vmatpush1.msra.mxu0 %v687
    %748 = vmatprep.subr.mxu0 0.0
    %749 = vmatpush1.msra.mxu0 %v689
    %750 = vmatprep.subr.mxu0 0.0
    %751 = vmatpush1.msra.mxu0 %v691
    %752 = vmatprep.subr.mxu0 0.0
    %753 = vmatpush1.msra.mxu0 %v681
    %754 = vmatprep.subr.mxu0 0.0
    %755 = vmatpush1.msra.mxu0 %v683
    %756 = vmatprep.subr.mxu0 0.0
    %757 = vmatpush1.msra.mxu0 %v693
    %758 = vmatprep.subr.mxu0 0.0
    %759 = vmatpush1.msra.mxu0 %v695
    %760 = vmatprep.subr.mxu0 0.0
    %761 = vmatpush1.msra.mxu0 %v697
    %762 = vmatprep.subr.mxu0 0.0
    %763 = vmatpush1.msra.mxu0 %v699
    %764 = vmatprep.subr.mxu0 0.0
    %765 = vmatpush1.msra.mxu0 %v681
    %766 = vmatprep.subr.mxu0 0.0
    %767 = vmatpush1.msra.mxu0 %v683
    %768 = vmatprep.subr.mxu0 0.0
    %769 = vmatpush1.msra.mxu0 %v701
    %770 = vmatprep.subr.mxu0 0.0
    %771 = vmatpush1.msra.mxu0 %v703
    %772 = vmatprep.subr.mxu0 0.0
    %773 = vmatpush1.msra.mxu0 0.0
    %774 = vmatprep.subr.mxu0 0.0
    %775 = vmatpush1.msra.mxu0 0.0
    %776 = vmatprep.subr.mxu0 0.0
    %777 = vmatpush1.msra.mxu0 0.0
    %778 = vmatprep.subr.mxu0 0.0
    %779 = vmatpush1.msra.mxu0 0.0
    %780 = vmatprep.subr.mxu0 0.0
    %781 = vmatpush1.msra.mxu0 0.0
    %782 = vmatprep.subr.mxu0 0.0
    %783 = vmatpush1.msra.mxu0 0.0
    %784 = vmatprep.subr.mxu0 0.0
    %785 = vmatpush1.msra.mxu0 0.0
    %786 = vmatprep.subr.mxu0 0.0
    %787 = vmatpush1.msra.mxu0 0.0
    %788 = vmatprep.subr.mxu0 0.0
    %789 = vmatpush1.msra.mxu0 0.0
    %790 = vmatprep.subr.mxu0 0.0
    %791 = vmatpush1.msra.mxu0 0.0
    %792 = vmatprep.subr.mxu0 0.0
    %793 = vmatpush1.msra.mxu0 0.0
    %794 = vmatprep.subr.mxu0 0.0
    %795 = vmatpush1.msra.mxu0 0.0
    %796 = vmatprep.subr.mxu0 0.0
    %797 = vmatpush1.msra.mxu0 0.0
    %798 = vmatprep.subr.mxu0 0.0
    %799 = vmatpush1.msra.mxu0 0.0
    %800 = vmatprep.mubr.f32.mxu0 %v719
    %801 = vmatmul.mubr.f32.gmra.mrb[0].mxu0 %v668
    %v802 = vpop.f32.mrb[0].mxu0
    %v803 = vadd.f32 0.0, %v802
    %v804 = vpop.f32.mrb[0].mxu0
    %805 = vmatprep.mubr.f32.mxu0 %v722
    %806 = vmatmul.mubr.f32.gmra.mrb[0].mxu0 %v670
    %v807 = vpop.f32.mrb[0].mxu0
    %v808 = vadd.f32 0.0, %v807
    %v809 = vpop.f32.mrb[0].mxu0
    %810 = vmatprep.mubr.f32.mxu0 %v725
    %811 = vmatmul.mubr.f32.gmra.mrb[0].mxu0 %v672
    %v812 = vpop.f32.mrb[0].mxu0
    %v813 = vadd.f32 0.0, %v812
    %v814 = vpop.f32.mrb[0].mxu0
    %815 = vmatprep.mubr.f32.mxu0 %v728
    %816 = vmatmul.mubr.f32.gmra.mrb[0].mxu0 %v674
    %v817 = vpop.f32.mrb[0].mxu0
    %v818 = vadd.f32 0.0, %v817
    %v819 = vpop.f32.mrb[0].mxu0
    %820 = vmatprep.mubr.f32.mxu0 %v731
    %821 = vmatmul.mubr.f32.gmra.mrb[0].mxu0 %v676
    %v822 = vpop.f32.mrb[0].mxu0
    %v823 = vadd.f32 0.0, %v822
    %v824 = vpop.f32.mrb[0].mxu0
    %825 = vmatprep.mubr.f32.mxu0 %v734
    %826 = vmatmul.mubr.f32.gmra.mrb[0].mxu0 %v678
    %v827 = vpop.f32.mrb[0].mxu0
    %v828 = vadd.f32 0.0, %v827
    %v829 = vpop.f32.mrb[0].mxu0
    %830 = vdwg.mxu0
    %v831 = vld [vmem:[%s3 + $0x20] sm:$0xff]
    %v832 = vld [vmem:[%s3 + $0x28] sm:$0xff]
    %v833 = vld [vmem:[%s3 + $0x30] sm:$0xff]
    %v834 = vld [vmem:[%s3 + $0x38] sm:$0xff]
    %v835 = vld [vmem:[%s3 + $0x40] sm:$0xff]
    %v836 = vld [vmem:[%s3 + $0x48] sm:$0xff]
    %v837 = vld [vmem:[%s3 + $0x50] sm:$0xff]
    %v838 = vld [vmem:[%s3 + $0x58] sm:$0xff]
    %v839 = vld [vmem:[%s3 + $0x60] sm:$0xff]
    %v840 = vld [vmem:[%s3 + $0x68] sm:$0xff]
    %v841 = vld [vmem:[%s3 + $0x70] sm:$0xff]
    %v842 = vld [vmem:[%s3 + $0x78] sm:$0xff]
    %v843 = vld [vmem:[%s2 + $0x40] sm:$0xff]
    %v844 = vld [vmem:[%s2 + $0x50] sm:$0xff]
    %v845 = vld [vmem:[%s2 + $0x60] sm:$0xff]
    %v846 = vld [vmem:[%s2 + $0x70] sm:$0xff]
    %v847 = vld [vmem:[%s2 + $0x80] sm:$0xff]
    %v848 = vld [vmem:[%s2 + $0x90] sm:$0xff]
    %v849 = vsel %vm404, %v803, 0.0
    %850 = vadd.xlane.f32.xlu0 %v849
    %v851 = vpop.xlane.xlu0 %850
    %v852 = vsel %vm404, %v808, 0.0
    %853 = vadd.xlane.f32.xlu0 %v852
    %v854 = vpop.xlane.xlu0 %853
    %v855 = vsel %vm404, %v813, 0.0
    %856 = vadd.xlane.f32.xlu0 %v855
    %v857 = vpop.xlane.xlu0 %856
    %v858 = vsel %vm404, %v818, 0.0
    %859 = vadd.xlane.f32.xlu0 %v858
    %v860 = vpop.xlane.xlu0 %859
    %v861 = vsel %vm404, %v823, 0.0
    %862 = vadd.xlane.f32.xlu0 %v861
    %v863 = vpop.xlane.xlu0 %862
    %v864 = vsel %vm404, %v828, 0.0
    %865 = vadd.xlane.f32.xlu0 %v864
    %v866 = vpop.xlane.xlu0 %865
    %vm867 = vcmask 392192
    %v869 = vsel %vm867, %v843, 0
    %v872 = vsel %vm867, %v844, 0
    %v875 = vsel %vm867, %v845, 0
    %v878 = vsel %vm867, %v846, 0
    %v881 = vsel %vm867, %v847, 0
    %v884 = vsel %vm867, %v848, 0
    %886 = vmatprep.subr.mxu0 0.0
    %887 = vmatpush1.msra.mxu0 %v851
    %888 = vmatprep.subr.mxu0 0.0
    %889 = vmatpush1.msra.mxu0 %v854
    %890 = vmatprep.subr.mxu0 0.0
    %891 = vmatpush1.msra.mxu0 %v857
    %892 = vmatprep.subr.mxu0 0.0
    %893 = vmatpush1.msra.mxu0 %v860
    %894 = vmatprep.subr.mxu0 0.0
    %895 = vmatpush1.msra.mxu0 %v863
    %896 = vmatprep.subr.mxu0 0.0
    %897 = vmatpush1.msra.mxu0 %v866
    %898 = vmatprep.subr.mxu0 0.0
    %899 = vmatpush1.msra.mxu0 0.0
    %900 = vmatprep.subr.mxu0 0.0
    %901 = vmatpush1.msra.mxu0 0.0
    %902 = vmatprep.subr.mxu0 0.0
    %903 = vmatpush1.msra.mxu0 0.0
    %904 = vmatprep.subr.mxu0 0.0
    %905 = vmatpush1.msra.mxu0 0.0
    %906 = vmatprep.subr.mxu0 0.0
    %907 = vmatpush1.msra.mxu0 0.0
    %908 = vmatprep.subr.mxu0 0.0
    %909 = vmatpush1.msra.mxu0 0.0
    %910 = vmatprep.subr.mxu0 0.0
    %911 = vmatpush1.msra.mxu0 0.0
    %912 = vmatprep.subr.mxu0 0.0
    %913 = vmatpush1.msra.mxu0 0.0
    %914 = vmatprep.subr.mxu0 0.0
    %915 = vmatpush1.msra.mxu0 0.0
    %916 = vmatprep.subr.mxu0 0.0
    %917 = vmatpush1.msra.mxu0 0.0
    %918 = vmatprep.subr.mxu0 0.0
    %919 = vmatpush1.msra.mxu0 0.0
    %920 = vmatprep.subr.mxu0 0.0
    %921 = vmatpush1.msra.mxu0 0.0
    %922 = vmatprep.subr.mxu0 0.0
    %923 = vmatpush1.msra.mxu0 0.0
    %924 = vmatprep.subr.mxu0 0.0
    %925 = vmatpush1.msra.mxu0 0.0
    %926 = vmatprep.subr.mxu0 0.0
    %927 = vmatpush1.msra.mxu0 0.0
    %928 = vmatprep.subr.mxu0 0.0
    %929 = vmatpush1.msra.mxu0 0.0
    %930 = vmatprep.subr.mxu0 0.0
    %931 = vmatpush1.msra.mxu0 0.0
    %932 = vmatprep.subr.mxu0 0.0
    %933 = vmatpush1.msra.mxu0 0.0
    %934 = vmatprep.subr.mxu0 0.0
    %935 = vmatpush1.msra.mxu0 0.0
    %936 = vmatprep.subr.mxu0 0.0
    %937 = vmatpush1.msra.mxu0 0.0
    %938 = vmatprep.subr.mxu0 0.0
    %939 = vmatpush1.msra.mxu0 0.0
    %940 = vmatprep.subr.mxu0 0.0
    %941 = vmatpush1.msra.mxu0 0.0
    %942 = vmatprep.subr.mxu0 0.0
    %943 = vmatpush1.msra.mxu0 0.0
    %944 = vmatprep.subr.mxu0 0.0
    %945 = vmatpush1.msra.mxu0 0.0
    %946 = vmatprep.subr.mxu0 0.0
    %947 = vmatpush1.msra.mxu0 0.0
    %948 = vmatprep.subr.mxu0 0.0
    %949 = vmatpush1.msra.mxu0 0.0
    %950 = vmatprep.mubr.f32.mxu0 0.0
    %951 = vmatmul.mubr.f32.gmra.mrb[0].mxu0 %v869
    %v952 = vpop.f32.mrb[0].mxu0
    %v953 = vadd.f32 0.0, %v952
    %v954 = vpop.f32.mrb[0].mxu0
    %955 = vmatprep.mubr.f32.mxu0 0.0
    %956 = vmatmul.mubr.f32.gmra.mrb[0].mxu0 %v872
    %v957 = vpop.f32.mrb[0].mxu0
    %v958 = vadd.f32 0.0, %v957
    %v959 = vpop.f32.mrb[0].mxu0
    %960 = vmatprep.mubr.f32.mxu0 0.0
    %961 = vmatmul.mubr.f32.gmra.mrb[0].mxu0 %v875
    %v962 = vpop.f32.mrb[0].mxu0
    %v963 = vadd.f32 0.0, %v962
    %v964 = vpop.f32.mrb[0].mxu0
    %965 = vmatprep.mubr.f32.mxu0 0.0
    %966 = vmatmul.mubr.f32.gmra.mrb[0].mxu0 %v878
    %v967 = vpop.f32.mrb[0].mxu0
    %v968 = vadd.f32 0.0, %v967
    %v969 = vpop.f32.mrb[0].mxu0
    %970 = vmatprep.mubr.f32.mxu0 0.0
    %971 = vmatmul.mubr.f32.gmra.mrb[0].mxu0 %v881
    %v972 = vpop.f32.mrb[0].mxu0
    %v973 = vadd.f32 0.0, %v972
    %v974 = vpop.f32.mrb[0].mxu0
    %975 = vmatprep.mubr.f32.mxu0 0.0
    %976 = vmatmul.mubr.f32.gmra.mrb[0].mxu0 %v884
    %v977 = vpop.f32.mrb[0].mxu0
    %v978 = vadd.f32 0.0, %v977
    %v979 = vpop.f32.mrb[0].mxu0
    %980 = vdwg.mxu0
    %v981 = vmul.f32 %v803, %v803
    %v982 = vmul.f32 %v808, %v808
    %v983 = vmul.f32 %v813, %v813
    %v984 = vmul.f32 %v818, %v818
    %v985 = vmul.f32 %v823, %v823
    %v986 = vmul.f32 %v828, %v828
    %v987 = vsel %vm404, %v981, 0.0
    %988 = vadd.xlane.f32.xlu0 %v987
    %v989 = vpop.xlane.xlu0 %988
    %v990 = vsel %vm404, %v982, 0.0
    %991 = vadd.xlane.f32.xlu0 %v990
    %v992 = vpop.xlane.xlu0 %991
    %v993 = vsel %vm404, %v983, 0.0
    %994 = vadd.xlane.f32.xlu0 %v993
    %v995 = vpop.xlane.xlu0 %994
    %v996 = vsel %vm404, %v984, 0.0
    %997 = vadd.xlane.f32.xlu0 %v996
    %v998 = vpop.xlane.xlu0 %997
    %v999 = vsel %vm404, %v985, 0.0
    %1000 = vadd.xlane.f32.xlu0 %v999
    %v1001 = vpop.xlane.xlu0 %1000
    %v1002 = vsel %vm404, %v986, 0.0
    %1003 = vadd.xlane.f32.xlu0 %v1002
    %v1004 = vpop.xlane.xlu0 %1003
    %1005 = vmatprep.subr.mxu0 0.0
    %1006 = vmatpush1.msra.mxu0 %v989
    %1007 = vmatprep.subr.mxu0 0.0
    %1008 = vmatpush1.msra.mxu0 %v992
    %1009 = vmatprep.subr.mxu0 0.0
    %1010 = vmatpush1.msra.mxu0 %v995
    %1011 = vmatprep.subr.mxu0 0.0
    %1012 = vmatpush1.msra.mxu0 %v998
    %1013 = vmatprep.subr.mxu0 0.0
    %1014 = vmatpush1.msra.mxu0 %v1001
    %1015 = vmatprep.subr.mxu0 0.0
    %1016 = vmatpush1.msra.mxu0 %v1004
    %1017 = vmatprep.subr.mxu0 0.0
    %1018 = vmatpush1.msra.mxu0 0.0
    %1019 = vmatprep.subr.mxu0 0.0
    %1020 = vmatpush1.msra.mxu0 0.0
    %1021 = vmatprep.subr.mxu0 0.0
    %1022 = vmatpush1.msra.mxu0 0.0
    %1023 = vmatprep.subr.mxu0 0.0
    %1024 = vmatpush1.msra.mxu0 0.0
    %1025 = vmatprep.subr.mxu0 0.0
    %1026 = vmatpush1.msra.mxu0 0.0
    %1027 = vmatprep.subr.mxu0 0.0
    %1028 = vmatpush1.msra.mxu0 0.0
    %1029 = vmatprep.subr.mxu0 0.0
    %1030 = vmatpush1.msra.mxu0 0.0
    %1031 = vmatprep.subr.mxu0 0.0
    %1032 = vmatpush1.msra.mxu0 0.0
    %1033 = vmatprep.subr.mxu0 0.0
    %1034 = vmatpush1.msra.mxu0 0.0
    %1035 = vmatprep.subr.mxu0 0.0
    %1036 = vmatpush1.msra.mxu0 0.0
    %1037 = vmatprep.subr.mxu0 0.0
    %1038 = vmatpush1.msra.mxu0 0.0
    %1039 = vmatprep.subr.mxu0 0.0
    %1040 = vmatpush1.msra.mxu0 0.0
    %1041 = vmatprep.subr.mxu0 0.0
    %1042 = vmatpush1.msra.mxu0 0.0
    %1043 = vmatprep.subr.mxu0 0.0
    %1044 = vmatpush1.msra.mxu0 0.0
    %1045 = vmatprep.subr.mxu0 0.0
    %1046 = vmatpush1.msra.mxu0 0.0
    %1047 = vmatprep.subr.mxu0 0.0
    %1048 = vmatpush1.msra.mxu0 0.0
    %1049 = vmatprep.subr.mxu0 0.0
    %1050 = vmatpush1.msra.mxu0 0.0
    %1051 = vmatprep.subr.mxu0 0.0
    %1052 = vmatpush1.msra.mxu0 0.0
    %1053 = vmatprep.subr.mxu0 0.0
    %1054 = vmatpush1.msra.mxu0 0.0
    %1055 = vmatprep.subr.mxu0 0.0
    %1056 = vmatpush1.msra.mxu0 0.0
    %1057 = vmatprep.subr.mxu0 0.0
    %1058 = vmatpush1.msra.mxu0 0.0
    %1059 = vmatprep.subr.mxu0 0.0
    %1060 = vmatpush1.msra.mxu0 0.0
    %1061 = vmatprep.subr.mxu0 0.0
    %1062 = vmatpush1.msra.mxu0 0.0
    %1063 = vmatprep.subr.mxu0 0.0
    %1064 = vmatpush1.msra.mxu0 0.0
    %1065 = vmatprep.subr.mxu0 0.0
    %1066 = vmatpush1.msra.mxu0 0.0
    %1067 = vmatprep.subr.mxu0 0.0
    %1068 = vmatpush1.msra.mxu0 0.0
    %1069 = vmatprep.mubr.f32.mxu0 0.0
    %1070 = vmatmul.mubr.f32.gmra.mrb[0].mxu0 %v869
    %v1071 = vpop.f32.mrb[0].mxu0
    %v1072 = vadd.f32 0.0, %v1071
    %v1073 = vpop.f32.mrb[0].mxu0
    %1074 = vmatprep.mubr.f32.mxu0 0.0
    %1075 = vmatmul.mubr.f32.gmra.mrb[0].mxu0 %v872
    %v1076 = vpop.f32.mrb[0].mxu0
    %v1077 = vadd.f32 0.0, %v1076
    %v1078 = vpop.f32.mrb[0].mxu0
    %1079 = vmatprep.mubr.f32.mxu0 0.0
    %1080 = vmatmul.mubr.f32.gmra.mrb[0].mxu0 %v875
    %v1081 = vpop.f32.mrb[0].mxu0
    %v1082 = vadd.f32 0.0, %v1081
    %v1083 = vpop.f32.mrb[0].mxu0
    %1084 = vmatprep.mubr.f32.mxu0 0.0
    %1085 = vmatmul.mubr.f32.gmra.mrb[0].mxu0 %v878
    %v1086 = vpop.f32.mrb[0].mxu0
    %v1087 = vadd.f32 0.0, %v1086
    %v1088 = vpop.f32.mrb[0].mxu0
    %1089 = vmatprep.mubr.f32.mxu0 0.0
    %1090 = vmatmul.mubr.f32.gmra.mrb[0].mxu0 %v881
    %v1091 = vpop.f32.mrb[0].mxu0
    %v1092 = vadd.f32 0.0, %v1091
    %v1093 = vpop.f32.mrb[0].mxu0
    %1094 = vmatprep.mubr.f32.mxu0 0.0
    %1095 = vmatmul.mubr.f32.gmra.mrb[0].mxu0 %v884
    %v1096 = vpop.f32.mrb[0].mxu0
    %v1097 = vadd.f32 0.0, %v1096
    %v1098 = vpop.f32.mrb[0].mxu0
    %1099 = vdwg.mxu0
    %v1100 = vmul.f32 %v953, 0.01
    %v1101 = vmul.f32 %v958, 0.01
    %v1102 = vmul.f32 %v963, 0.01
    %v1103 = vmul.f32 %v968, 0.01
    %v1104 = vmul.f32 %v973, 0.01
    %v1105 = vmul.f32 %v978, 0.01
    %v1106 = vmul.f32 %v1072, 0.01
    %v1107 = vmul.f32 %v1077, 0.01
    %v1108 = vmul.f32 %v1082, 0.01
    %v1109 = vmul.f32 %v1087, 0.01
    %v1110 = vmul.f32 %v1092, 0.01
    %v1111 = vmul.f32 %v1097, 0.01
    %v1112 = vmul.f32 %v1100, %v1100
    %v1113 = vmul.f32 %v1101, %v1101
    %v1114 = vmul.f32 %v1102, %v1102
    %v1115 = vmul.f32 %v1103, %v1103
    %v1116 = vmul.f32 %v1104, %v1104
    %v1117 = vmul.f32 %v1105, %v1105
    %v1118 = vsub.f32 %v1106, %v1112
    %v1119 = vsub.f32 %v1107, %v1113
    %v1120 = vsub.f32 %v1108, %v1114
    %v1121 = vsub.f32 %v1109, %v1115
    %v1122 = vsub.f32 %v1110, %v1116
    %v1123 = vsub.f32 %v1111, %v1117
    %v1124 = vmax.f32 %v1118, 0.0
    %v1125 = vmax.f32 %v1119, 0.0
    %v1126 = vmax.f32 %v1120, 0.0
    %v1127 = vmax.f32 %v1121, 0.0
    %v1128 = vmax.f32 %v1122, 0.0
    %v1129 = vmax.f32 %v1123, 0.0
    %v1130 = vadd.f32 %v1124, 1e-05
    %v1131 = vadd.f32 %v1125, 1e-05
    %v1132 = vadd.f32 %v1126, 1e-05
    %v1133 = vadd.f32 %v1127, 1e-05
    %v1134 = vadd.f32 %v1128, 1e-05
    %v1135 = vadd.f32 %v1129, 1e-05
    %v1136 = vrsqrt.pop %v1130
    %v1137 = vrsqrt.pop %v1131
    %v1138 = vrsqrt.pop %v1132
    %v1139 = vrsqrt.pop %v1133
    %v1140 = vrsqrt.pop %v1134
    %v1141 = vrsqrt.pop %v1135
    %v1142 = vmul.f32 %v1136, %v831
    %v1143 = vmul.f32 %v1137, %v832
    %v1144 = vmul.f32 %v1138, %v833
    %v1145 = vmul.f32 %v1139, %v834
    %v1146 = vmul.f32 %v1140, %v835
    %v1147 = vmul.f32 %v1141, %v836
    %v1148 = vmul.f32 %v1100, %v1142
    %v1149 = vmul.f32 %v1101, %v1143
    %v1150 = vmul.f32 %v1102, %v1144
    %v1151 = vmul.f32 %v1103, %v1145
    %v1152 = vmul.f32 %v1104, %v1146
    %v1153 = vmul.f32 %v1105, %v1147
    %v1154 = vsub.f32 %v837, %v1148
    %v1155 = vsub.f32 %v838, %v1149
    %v1156 = vsub.f32 %v839, %v1150
    %v1157 = vsub.f32 %v840, %v1151
    %v1158 = vsub.f32 %v841, %v1152
    %v1159 = vsub.f32 %v842, %v1153
    %1161 = vset.pattern.permute.xlu0 0
    %1162 = vperm.xlu0 %1161, %v1142
    %v1163 = vpop.permute.xlu0 %1162
    %1166 = vset.pattern.permute.xlu0 0
    %1167 = vperm.xlu0 %1166, %v1143
    %v1168 = vpop.permute.xlu0 %1167
    %1171 = vset.pattern.permute.xlu0 0
    %1172 = vperm.xlu0 %1171, %v1144
    %v1173 = vpop.permute.xlu0 %1172
    %1176 = vset.pattern.permute.xlu0 0
    %1177 = vperm.xlu0 %1176, %v1145
    %v1178 = vpop.permute.xlu0 %1177
    %1181 = vset.pattern.permute.xlu0 0
    %1182 = vperm.xlu0 %1181, %v1146
    %v1183 = vpop.permute.xlu0 %1182
    %1186 = vset.pattern.permute.xlu0 0
    %1187 = vperm.xlu0 %1186, %v1147
    %v1188 = vpop.permute.xlu0 %1187
    %v1190 = vmul.f32 %v803, %v1163
    %v1191 = vmul.f32 %v808, %v1168
    %v1192 = vmul.f32 %v813, %v1173
    %v1193 = vmul.f32 %v818, %v1178
    %v1194 = vmul.f32 %v823, %v1183
    %v1195 = vmul.f32 %v828, %v1188
    %1197 = vset.pattern.permute.xlu0 0
    %1198 = vperm.xlu0 %1197, %v1154
    %v1199 = vpop.permute.xlu0 %1198
    %1202 = vset.pattern.permute.xlu0 0
    %1203 = vperm.xlu0 %1202, %v1155
    %v1204 = vpop.permute.xlu0 %1203
    %1207 = vset.pattern.permute.xlu0 0
    %1208 = vperm.xlu0 %1207, %v1156
    %v1209 = vpop.permute.xlu0 %1208
    %1212 = vset.pattern.permute.xlu0 0
    %1213 = vperm.xlu0 %1212, %v1157
    %v1214 = vpop.permute.xlu0 %1213
    %1217 = vset.pattern.permute.xlu0 0
    %1218 = vperm.xlu0 %1217, %v1158
    %v1219 = vpop.permute.xlu0 %1218
    %1222 = vset.pattern.permute.xlu0 0
    %1223 = vperm.xlu0 %1222, %v1159
    %v1224 = vpop.permute.xlu0 %1223
    %v1226 = vadd.f32 %v1190, %v1199
    %v1227 = vadd.f32 %v1191, %v1204
    %v1228 = vadd.f32 %v1192, %v1209
    %v1229 = vadd.f32 %v1193, %v1214
    %v1230 = vadd.f32 %v1194, %v1219
    %v1231 = vadd.f32 %v1195, %v1224
    %v1232 = vmax.f32 %v1226, 0.0
    %v1233 = vmax.f32 %v1227, 0.0
    %v1234 = vmax.f32 %v1228, 0.0
    %v1235 = vmax.f32 %v1229, 0.0
    %v1236 = vmax.f32 %v1230, 0.0
    %v1237 = vmax.f32 %v1231, 0.0
    %v1238 = vlaneseq
    %v1239 = vshrl.u32 %v1238, 7
    %v1240 = vsub.s32 1, %v1239
    %v1241 = vrot.slane %v18, %v1240
    %v1242 = vmul.f32 %v1232, %v1241
    %v1243 = vmul.f32 %v1233, %v1241
    %v1244 = vmul.f32 %v1234, %v1241
    %v1245 = vmul.f32 %v1235, %v1241
    %v1246 = vmul.f32 %v1236, %v1241
    %v1247 = vmul.f32 %v1237, %v1241
    %v1248 = vadd.f32 %v1242, %v1244
    %v1249 = vadd.f32 %v1243, %v1245
    %v1250 = vadd.f32 %v1248, %v1246
    %v1251 = vadd.f32 %v1249, %v1247
    %v1252 = vsel %vm404, %v1250, 0.0
    %1253 = vadd.xlane.f32.xlu0 %v1252
    %v1254 = vpop.xlane.xlu0 %1253
    %v1255 = vsel %vm404, %v1251, 0.0
    %1256 = vadd.xlane.f32.xlu0 %v1255
    %v1257 = vpop.xlane.xlu0 %1256
    %v1258 = vmul.f32 %v1254, 0.02
    %v1259 = vmul.f32 %v1257, 0.02
    %v1260 = vld [vmem:[%s2 + $0x170] sm:$0xff]
    %v1262 = vsel %vm411, %v1260, 0
    %1264 = vmatprep.subr.mxu0 0.0
    %1265 = vmatpush1.msra.mxu0 %v1258
    %1266 = vmatprep.subr.mxu0 0.0
    %1267 = vmatpush1.msra.mxu0 %v1259
    %1268 = vmatprep.subr.mxu0 0.0
    %1269 = vmatpush1.msra.mxu0 0.0
    %1270 = vmatprep.subr.mxu0 0.0
    %1271 = vmatpush1.msra.mxu0 0.0
    %1272 = vmatprep.subr.mxu0 0.0
    %1273 = vmatpush1.msra.mxu0 0.0
    %1274 = vmatprep.subr.mxu0 0.0
    %1275 = vmatpush1.msra.mxu0 0.0
    %1276 = vmatprep.subr.mxu0 0.0
    %1277 = vmatpush1.msra.mxu0 0.0
    %1278 = vmatprep.subr.mxu0 0.0
    %1279 = vmatpush1.msra.mxu0 0.0
    %1280 = vmatprep.subr.mxu0 0.0
    %1281 = vmatpush1.msra.mxu0 0.0
    %1282 = vmatprep.subr.mxu0 0.0
    %1283 = vmatpush1.msra.mxu0 0.0
    %1284 = vmatprep.subr.mxu0 0.0
    %1285 = vmatpush1.msra.mxu0 0.0
    %1286 = vmatprep.subr.mxu0 0.0
    %1287 = vmatpush1.msra.mxu0 0.0
    %1288 = vmatprep.subr.mxu0 0.0
    %1289 = vmatpush1.msra.mxu0 0.0
    %1290 = vmatprep.subr.mxu0 0.0
    %1291 = vmatpush1.msra.mxu0 0.0
    %1292 = vmatprep.subr.mxu0 0.0
    %1293 = vmatpush1.msra.mxu0 0.0
    %1294 = vmatprep.subr.mxu0 0.0
    %1295 = vmatpush1.msra.mxu0 0.0
    %1296 = vmatprep.subr.mxu0 0.0
    %1297 = vmatpush1.msra.mxu0 0.0
    %1298 = vmatprep.subr.mxu0 0.0
    %1299 = vmatpush1.msra.mxu0 0.0
    %1300 = vmatprep.subr.mxu0 0.0
    %1301 = vmatpush1.msra.mxu0 0.0
    %1302 = vmatprep.subr.mxu0 0.0
    %1303 = vmatpush1.msra.mxu0 0.0
    %1304 = vmatprep.subr.mxu0 0.0
    %1305 = vmatpush1.msra.mxu0 0.0
    %1306 = vmatprep.subr.mxu0 0.0
    %1307 = vmatpush1.msra.mxu0 0.0
    %1308 = vmatprep.subr.mxu0 0.0
    %1309 = vmatpush1.msra.mxu0 0.0
    %1310 = vmatprep.subr.mxu0 0.0
    %1311 = vmatpush1.msra.mxu0 0.0
    %1312 = vmatprep.subr.mxu0 0.0
    %1313 = vmatpush1.msra.mxu0 0.0
    %1314 = vmatprep.subr.mxu0 0.0
    %1315 = vmatpush1.msra.mxu0 0.0
    %1316 = vmatprep.subr.mxu0 0.0
    %1317 = vmatpush1.msra.mxu0 0.0
    %1318 = vmatprep.subr.mxu0 0.0
    %1319 = vmatpush1.msra.mxu0 0.0
    %1320 = vmatprep.subr.mxu0 0.0
    %1321 = vmatpush1.msra.mxu0 0.0
    %1322 = vmatprep.subr.mxu0 0.0
    %1323 = vmatpush1.msra.mxu0 0.0
    %1324 = vmatprep.subr.mxu0 0.0
    %1325 = vmatpush1.msra.mxu0 0.0
    %1326 = vmatprep.subr.mxu0 0.0
    %1327 = vmatpush1.msra.mxu0 0.0
    %1328 = vmatprep.mubr.f32.mxu0 0.0
    %1329 = vmatmul.mubr.f32.gmra.mrb[0].mxu0 %v1262
    %v1330 = vpop.f32.mrb[0].mxu0
    %v1331 = vadd.f32 0.0, %v1330
    %v1332 = vpop.f32.mrb[0].mxu0
    %1333 = vdwg.mxu0
    %v1334 = vld [vmem:[%s3 + $0xe0] sm:$0xff]
    %v1335 = vld [vmem:[%s3 + $0xe8] sm:$0xff]
    %v1336 = vld [vmem:[%s2 + $0xa0] sm:$0xff]
    %v1337 = vadd.f32 %v1331, 0.0
    %vm1338 = vcmask 64512
    %v1340 = vsel %vm1338, %v1336, 0
    %1342 = vmatprep.subr.mxu0 0.0
    %1343 = vmatpush1.msra.mxu0 %v1337
    %1344 = vmatprep.subr.mxu0 0.0
    %1345 = vmatpush1.msra.mxu0 0.0
    %1346 = vmatprep.subr.mxu0 0.0
    %1347 = vmatpush1.msra.mxu0 0.0
    %1348 = vmatprep.subr.mxu0 0.0
    %1349 = vmatpush1.msra.mxu0 0.0
    %1350 = vmatprep.subr.mxu0 0.0
    %1351 = vmatpush1.msra.mxu0 0.0
    %1352 = vmatprep.subr.mxu0 0.0
    %1353 = vmatpush1.msra.mxu0 0.0
    %1354 = vmatprep.subr.mxu0 0.0
    %1355 = vmatpush1.msra.mxu0 0.0
    %1356 = vmatprep.subr.mxu0 0.0
    %1357 = vmatpush1.msra.mxu0 0.0
    %1358 = vmatprep.subr.mxu0 0.0
    %1359 = vmatpush1.msra.mxu0 0.0
    %1360 = vmatprep.subr.mxu0 0.0
    %1361 = vmatpush1.msra.mxu0 0.0
    %1362 = vmatprep.subr.mxu0 0.0
    %1363 = vmatpush1.msra.mxu0 0.0
    %1364 = vmatprep.subr.mxu0 0.0
    %1365 = vmatpush1.msra.mxu0 0.0
    %1366 = vmatprep.subr.mxu0 0.0
    %1367 = vmatpush1.msra.mxu0 0.0
    %1368 = vmatprep.subr.mxu0 0.0
    %1369 = vmatpush1.msra.mxu0 0.0
    %1370 = vmatprep.subr.mxu0 0.0
    %1371 = vmatpush1.msra.mxu0 0.0
    %1372 = vmatprep.subr.mxu0 0.0
    %1373 = vmatpush1.msra.mxu0 0.0
    %1374 = vmatprep.subr.mxu0 0.0
    %1375 = vmatpush1.msra.mxu0 0.0
    %1376 = vmatprep.subr.mxu0 0.0
    %1377 = vmatpush1.msra.mxu0 0.0
    %1378 = vmatprep.subr.mxu0 0.0
    %1379 = vmatpush1.msra.mxu0 0.0
    %1380 = vmatprep.subr.mxu0 0.0
    %1381 = vmatpush1.msra.mxu0 0.0
    %1382 = vmatprep.subr.mxu0 0.0
    %1383 = vmatpush1.msra.mxu0 0.0
    %1384 = vmatprep.subr.mxu0 0.0
    %1385 = vmatpush1.msra.mxu0 0.0
    %1386 = vmatprep.subr.mxu0 0.0
    %1387 = vmatpush1.msra.mxu0 0.0
    %1388 = vmatprep.subr.mxu0 0.0
    %1389 = vmatpush1.msra.mxu0 0.0
    %1390 = vmatprep.subr.mxu0 0.0
    %1391 = vmatpush1.msra.mxu0 0.0
    %1392 = vmatprep.subr.mxu0 0.0
    %1393 = vmatpush1.msra.mxu0 0.0
    %1394 = vmatprep.subr.mxu0 0.0
    %1395 = vmatpush1.msra.mxu0 0.0
    %1396 = vmatprep.subr.mxu0 0.0
    %1397 = vmatpush1.msra.mxu0 0.0
    %1398 = vmatprep.subr.mxu0 0.0
    %1399 = vmatpush1.msra.mxu0 0.0
    %1400 = vmatprep.subr.mxu0 0.0
    %1401 = vmatpush1.msra.mxu0 0.0
    %1402 = vmatprep.subr.mxu0 0.0
    %1403 = vmatpush1.msra.mxu0 0.0
    %1404 = vmatprep.subr.mxu0 0.0
    %1405 = vmatpush1.msra.mxu0 0.0
    %1406 = vmatprep.mubr.f32.mxu0 0.0
    %1407 = vmatmul.mubr.f32.gmra.mrb[0].mxu0 %v1340
    %v1408 = vpop.f32.mrb[0].mxu0
    %v1409 = vadd.f32 0.0, %v1408
    %v1410 = vpop.f32.mrb[0].mxu0
    %1411 = vdwg.mxu0
    %v1412 = vmul.f32 %v1331, %v1331
    %v1413 = vadd.f32 %v1412, 0.0
    %1414 = vmatprep.subr.mxu0 0.0
    %1415 = vmatpush1.msra.mxu0 %v1413
    %1416 = vmatprep.subr.mxu0 0.0
    %1417 = vmatpush1.msra.mxu0 0.0
    %1418 = vmatprep.subr.mxu0 0.0
    %1419 = vmatpush1.msra.mxu0 0.0
    %1420 = vmatprep.subr.mxu0 0.0
    %1421 = vmatpush1.msra.mxu0 0.0
    %1422 = vmatprep.subr.mxu0 0.0
    %1423 = vmatpush1.msra.mxu0 0.0
    %1424 = vmatprep.subr.mxu0 0.0
    %1425 = vmatpush1.msra.mxu0 0.0
    %1426 = vmatprep.subr.mxu0 0.0
    %1427 = vmatpush1.msra.mxu0 0.0
    %1428 = vmatprep.subr.mxu0 0.0
    %1429 = vmatpush1.msra.mxu0 0.0
    %1430 = vmatprep.subr.mxu0 0.0
    %1431 = vmatpush1.msra.mxu0 0.0
    %1432 = vmatprep.subr.mxu0 0.0
    %1433 = vmatpush1.msra.mxu0 0.0
    %1434 = vmatprep.subr.mxu0 0.0
    %1435 = vmatpush1.msra.mxu0 0.0
    %1436 = vmatprep.subr.mxu0 0.0
    %1437 = vmatpush1.msra.mxu0 0.0
    %1438 = vmatprep.subr.mxu0 0.0
    %1439 = vmatpush1.msra.mxu0 0.0
    %1440 = vmatprep.subr.mxu0 0.0
    %1441 = vmatpush1.msra.mxu0 0.0
    %1442 = vmatprep.subr.mxu0 0.0
    %1443 = vmatpush1.msra.mxu0 0.0
    %1444 = vmatprep.subr.mxu0 0.0
    %1445 = vmatpush1.msra.mxu0 0.0
    %1446 = vmatprep.subr.mxu0 0.0
    %1447 = vmatpush1.msra.mxu0 0.0
    %1448 = vmatprep.subr.mxu0 0.0
    %1449 = vmatpush1.msra.mxu0 0.0
    %1450 = vmatprep.subr.mxu0 0.0
    %1451 = vmatpush1.msra.mxu0 0.0
    %1452 = vmatprep.subr.mxu0 0.0
    %1453 = vmatpush1.msra.mxu0 0.0
    %1454 = vmatprep.subr.mxu0 0.0
    %1455 = vmatpush1.msra.mxu0 0.0
    %1456 = vmatprep.subr.mxu0 0.0
    %1457 = vmatpush1.msra.mxu0 0.0
    %1458 = vmatprep.subr.mxu0 0.0
    %1459 = vmatpush1.msra.mxu0 0.0
    %1460 = vmatprep.subr.mxu0 0.0
    %1461 = vmatpush1.msra.mxu0 0.0
    %1462 = vmatprep.subr.mxu0 0.0
    %1463 = vmatpush1.msra.mxu0 0.0
    %1464 = vmatprep.subr.mxu0 0.0
    %1465 = vmatpush1.msra.mxu0 0.0
    %1466 = vmatprep.subr.mxu0 0.0
    %1467 = vmatpush1.msra.mxu0 0.0
    %1468 = vmatprep.subr.mxu0 0.0
    %1469 = vmatpush1.msra.mxu0 0.0
    %1470 = vmatprep.subr.mxu0 0.0
    %1471 = vmatpush1.msra.mxu0 0.0
    %1472 = vmatprep.subr.mxu0 0.0
    %1473 = vmatpush1.msra.mxu0 0.0
    %1474 = vmatprep.subr.mxu0 0.0
    %1475 = vmatpush1.msra.mxu0 0.0
    %1476 = vmatprep.subr.mxu0 0.0
    %1477 = vmatpush1.msra.mxu0 0.0
    %1478 = vmatprep.mubr.f32.mxu0 0.0
    %1479 = vmatmul.mubr.f32.gmra.mrb[0].mxu0 %v1340
    %v1480 = vpop.f32.mrb[0].mxu0
    %v1481 = vadd.f32 0.0, %v1480
    %v1482 = vpop.f32.mrb[0].mxu0
    %1483 = vdwg.mxu0
    %v1484 = vmul.f32 %v1409, 0.5
    %v1485 = vmul.f32 %v1481, 0.5
    %v1486 = vmul.f32 %v1484, %v1484
    %v1487 = vsub.f32 %v1485, %v1486
    %v1488 = vmax.f32 %v1487, 0.0
    %v1489 = vadd.f32 %v1488, 1e-05
    %v1490 = vrsqrt.pop %v1489
    %v1491 = vmul.f32 %v1490, %v1334
    %v1492 = vmul.f32 %v1484, %v1491
    %v1493 = vsub.f32 %v1335, %v1492
    %v1494 = vmul.f32 %v1331, %v1491
    %v1495 = vadd.f32 %v1494, %v1493
    %v1496 = vmax.f32 %v1495, 0.0
    %v1497 = vld [vmem:[%s2 + $0x190] sm:$0xff]
    %v1498 = vld [vmem:[%s2 + $0x1a0] sm:$0xff]
    %v1499 = vld [vmem:[%s2 + $0x1b0] sm:$0xff]
    %v1500 = vld [vmem:[%s2 + $0x1c0] sm:$0xff]
    %v1501 = vld [vmem:[%s2 + $0x1d0] sm:$0xff]
    %v1502 = vld [vmem:[%s2 + $0x1e0] sm:$0xff]
    %v1503 = vld [vmem:[%s3 + $0x100] sm:$0xff]
    %v1504 = vld [vmem:[%s3 + $0x108] sm:$0xff]
    %v1505 = vld [vmem:[%s3 + $0x110] sm:$0xff]
    %v1506 = vld [vmem:[%s3 + $0x118] sm:$0xff]
    %v1507 = vld [vmem:[%s3 + $0x120] sm:$0xff]
    %v1508 = vld [vmem:[%s3 + $0x128] sm:$0xff]
    %v1510 = vsel %vm1338, %v1497, 0
    %v1513 = vsel %vm1338, %v1498, 0
    %v1516 = vsel %vm1338, %v1499, 0
    %v1519 = vsel %vm1338, %v1500, 0
    %v1522 = vsel %vm1338, %v1501, 0
    %v1525 = vsel %vm1338, %v1502, 0
    %1527 = vmatprep.subr.mxu0 0.0
    %1528 = vmatpush1.msra.mxu0 %v1496
    %1529 = vmatprep.subr.mxu0 0.0
    %1530 = vmatpush1.msra.mxu0 0.0
    %1531 = vmatprep.subr.mxu0 0.0
    %1532 = vmatpush1.msra.mxu0 0.0
    %1533 = vmatprep.subr.mxu0 0.0
    %1534 = vmatpush1.msra.mxu0 0.0
    %1535 = vmatprep.subr.mxu0 0.0
    %1536 = vmatpush1.msra.mxu0 0.0
    %1537 = vmatprep.subr.mxu0 0.0
    %1538 = vmatpush1.msra.mxu0 0.0
    %1539 = vmatprep.subr.mxu0 0.0
    %1540 = vmatpush1.msra.mxu0 0.0
    %1541 = vmatprep.subr.mxu0 0.0
    %1542 = vmatpush1.msra.mxu0 0.0
    %1543 = vmatprep.subr.mxu0 0.0
    %1544 = vmatpush1.msra.mxu0 0.0
    %1545 = vmatprep.subr.mxu0 0.0
    %1546 = vmatpush1.msra.mxu0 0.0
    %1547 = vmatprep.subr.mxu0 0.0
    %1548 = vmatpush1.msra.mxu0 0.0
    %1549 = vmatprep.subr.mxu0 0.0
    %1550 = vmatpush1.msra.mxu0 0.0
    %1551 = vmatprep.subr.mxu0 0.0
    %1552 = vmatpush1.msra.mxu0 0.0
    %1553 = vmatprep.subr.mxu0 0.0
    %1554 = vmatpush1.msra.mxu0 0.0
    %1555 = vmatprep.subr.mxu0 0.0
    %1556 = vmatpush1.msra.mxu0 0.0
    %1557 = vmatprep.subr.mxu0 0.0
    %1558 = vmatpush1.msra.mxu0 0.0
    %1559 = vmatprep.subr.mxu0 0.0
    %1560 = vmatpush1.msra.mxu0 0.0
    %1561 = vmatprep.subr.mxu0 0.0
    %1562 = vmatpush1.msra.mxu0 0.0
    %1563 = vmatprep.subr.mxu0 0.0
    %1564 = vmatpush1.msra.mxu0 0.0
    %1565 = vmatprep.subr.mxu0 0.0
    %1566 = vmatpush1.msra.mxu0 0.0
    %1567 = vmatprep.subr.mxu0 0.0
    %1568 = vmatpush1.msra.mxu0 0.0
    %1569 = vmatprep.subr.mxu0 0.0
    %1570 = vmatpush1.msra.mxu0 0.0
    %1571 = vmatprep.subr.mxu0 0.0
    %1572 = vmatpush1.msra.mxu0 0.0
    %1573 = vmatprep.subr.mxu0 0.0
    %1574 = vmatpush1.msra.mxu0 0.0
    %1575 = vmatprep.subr.mxu0 0.0
    %1576 = vmatpush1.msra.mxu0 0.0
    %1577 = vmatprep.subr.mxu0 0.0
    %1578 = vmatpush1.msra.mxu0 0.0
    %1579 = vmatprep.subr.mxu0 0.0
    %1580 = vmatpush1.msra.mxu0 0.0
    %1581 = vmatprep.subr.mxu0 0.0
    %1582 = vmatpush1.msra.mxu0 0.0
    %1583 = vmatprep.subr.mxu0 0.0
    %1584 = vmatpush1.msra.mxu0 0.0
    %1585 = vmatprep.subr.mxu0 0.0
    %1586 = vmatpush1.msra.mxu0 0.0
    %1587 = vmatprep.subr.mxu0 0.0
    %1588 = vmatpush1.msra.mxu0 0.0
    %1589 = vmatprep.subr.mxu0 0.0
    %1590 = vmatpush1.msra.mxu0 0.0
    %1591 = vmatprep.mubr.f32.mxu0 0.0
    %1592 = vmatmul.mubr.f32.gmra.mrb[0].mxu0 %v1510
    %v1593 = vpop.f32.mrb[0].mxu0
    %v1594 = vadd.f32 %v1503, %v1593
    %v1595 = vpop.f32.mrb[0].mxu0
    %1596 = vmatprep.mubr.f32.mxu0 0.0
    %1597 = vmatmul.mubr.f32.gmra.mrb[0].mxu0 %v1513
    %v1598 = vpop.f32.mrb[0].mxu0
    %v1599 = vadd.f32 %v1504, %v1598
    %v1600 = vpop.f32.mrb[0].mxu0
    %1601 = vmatprep.mubr.f32.mxu0 0.0
    %1602 = vmatmul.mubr.f32.gmra.mrb[0].mxu0 %v1516
    %v1603 = vpop.f32.mrb[0].mxu0
    %v1604 = vadd.f32 %v1505, %v1603
    %v1605 = vpop.f32.mrb[0].mxu0
    %1606 = vmatprep.mubr.f32.mxu0 0.0
    %1607 = vmatmul.mubr.f32.gmra.mrb[0].mxu0 %v1519
    %v1608 = vpop.f32.mrb[0].mxu0
    %v1609 = vadd.f32 %v1506, %v1608
    %v1610 = vpop.f32.mrb[0].mxu0
    %1611 = vmatprep.mubr.f32.mxu0 0.0
    %1612 = vmatmul.mubr.f32.gmra.mrb[0].mxu0 %v1522
    %v1613 = vpop.f32.mrb[0].mxu0
    %v1614 = vadd.f32 %v1507, %v1613
    %v1615 = vpop.f32.mrb[0].mxu0
    %1616 = vmatprep.mubr.f32.mxu0 0.0
    %1617 = vmatmul.mubr.f32.gmra.mrb[0].mxu0 %v1525
    %v1618 = vpop.f32.mrb[0].mxu0
    %v1619 = vadd.f32 %v1508, %v1618
    %v1620 = vpop.f32.mrb[0].mxu0
    %1621 = vdwg.mxu0
    %v1622 = vmax.f32 %v1594, %v1604
    %v1623 = vmax.f32 %v1599, %v1609
    %v1624 = vmax.f32 %v1622, %v1614
    %v1625 = vmax.f32 %v1623, %v1619
    %v1626 = vsub.f32 %v1594, %v1624
    %v1627 = vsub.f32 %v1599, %v1625
    %v1628 = vmul.f32 %v1626, 1.442695
    %v1629 = vpow.pop %v1628
    %v1630 = vmul.f32 %v1627, 1.442695
    %v1631 = vpow.pop %v1630
    %v1632 = vsub.f32 %v1604, %v1624
    %v1633 = vsub.f32 %v1609, %v1625
    %v1634 = vmul.f32 %v1632, 1.442695
    %v1635 = vpow.pop %v1634
    %v1636 = vmul.f32 %v1633, 1.442695
    %v1637 = vpow.pop %v1636
    %v1638 = vsub.f32 %v1614, %v1624
    %v1639 = vsub.f32 %v1619, %v1625
    %v1640 = vmul.f32 %v1638, 1.442695
    %v1641 = vpow.pop %v1640
    %v1642 = vmul.f32 %v1639, 1.442695
    %v1643 = vpow.pop %v1642
    %v1644 = vadd.f32 %v1629, %v1635
    %v1645 = vadd.f32 %v1631, %v1637
    %v1646 = vadd.f32 %v1644, %v1641
    %v1647 = vadd.f32 %v1645, %v1643
    %v1648 = vrcp.pop %v1646
    %v1649 = vrcp.pop %v1647
    %v1650 = vmul.f32 %v1629, %v1648
    %v1651 = vmul.f32 %v1631, %v1649
    %1653 = vset.pattern.permute.xlu0 0
    %1654 = vperm.xlu0 %1653, %v1650
    %v1655 = vpop.permute.xlu0 %1654
    %1658 = vset.pattern.permute.xlu0 0
    %1659 = vperm.xlu0 %1658, %v1651
    %v1660 = vpop.permute.xlu0 %1659
    %v1662 = vmul.f32 %v1242, %v1655
    %v1663 = vmul.f32 %v1243, %v1660
    %v1664 = vmul.f32 %v1635, %v1648
    %v1665 = vmul.f32 %v1637, %v1649
    %1667 = vset.pattern.permute.xlu0 0
    %1668 = vperm.xlu0 %1667, %v1664
    %v1669 = vpop.permute.xlu0 %1668
    %1672 = vset.pattern.permute.xlu0 0
    %1673 = vperm.xlu0 %1672, %v1665
    %v1674 = vpop.permute.xlu0 %1673
    %v1676 = vmul.f32 %v1244, %v1669
    %v1677 = vmul.f32 %v1245, %v1674
    %v1678 = vadd.f32 %v1662, %v1676
    %v1679 = vadd.f32 %v1663, %v1677
    %v1680 = vmul.f32 %v1641, %v1648
    %v1681 = vmul.f32 %v1643, %v1649
    %1683 = vset.pattern.permute.xlu0 0
    %1684 = vperm.xlu0 %1683, %v1680
    %v1685 = vpop.permute.xlu0 %1684
    %1688 = vset.pattern.permute.xlu0 0
    %1689 = vperm.xlu0 %1688, %v1681
    %v1690 = vpop.permute.xlu0 %1689
    %v1692 = vmul.f32 %v1246, %v1685
    %v1693 = vmul.f32 %v1247, %v1690
    %v1694 = vadd.f32 %v1678, %v1692
    %v1695 = vadd.f32 %v1679, %v1693
    %1698 = vrot.lane.b32.xlu0 %v1694, 21
    %v1699 = vpop.permute.xlu0 %1698
    %1700 = vrot.lane.b32.xlu0 %v1695, 21
    %v1701 = vpop.permute.xlu0 %1700
    %v1704 = vsel %vm636, 0.0, %v1699
    %v1705 = vsel %vm636, 0.0, %v1701
    %v1706 = vsel %vm639, %v1704, 0.0
    %v1707 = vsel %vm639, %v1705, 0.0
    %1710 = vrot.lane.b32.xlu0 %v1706, 121
    %v1711 = vpop.permute.xlu0 %1710
    %1712 = vrot.lane.b32.xlu0 %v1707, 121
    %v1713 = vpop.permute.xlu0 %1712
    %1714 = vrot.lane.b32.xlu0 %v1706, 114
    %v1715 = vpop.permute.xlu0 %1714
    %1716 = vrot.lane.b32.xlu0 %v1707, 114
    %v1717 = vpop.permute.xlu0 %1716
    %1718 = vrot.lane.b32.xlu0 %v1706, 7
    %v1719 = vpop.permute.xlu0 %1718
    %1720 = vrot.lane.b32.xlu0 %v1707, 7
    %v1721 = vpop.permute.xlu0 %1720
    %1722 = vrot.lane.b32.xlu0 %v1706, 107
    %v1723 = vpop.permute.xlu0 %1722
    %1724 = vrot.lane.b32.xlu0 %v1707, 107
    %v1725 = vpop.permute.xlu0 %1724
    %1726 = vrot.lane.b32.xlu0 %v1706, 14
    %v1727 = vpop.permute.xlu0 %1726
    %1728 = vrot.lane.b32.xlu0 %v1707, 14
    %v1729 = vpop.permute.xlu0 %1728
    %1730 = vrot.lane.b32.xlu0 %v1706, 100
    %v1731 = vpop.permute.xlu0 %1730
    %1732 = vrot.lane.b32.xlu0 %v1707, 100
    %v1733 = vpop.permute.xlu0 %1732
    %v1734 = vld [vmem:[%s2 + $0x110] sm:$0xff]
    %v1735 = vld [vmem:[%s2 + $0x118] sm:$0xff]
    %v1736 = vld [vmem:[%s2 + $0x120] sm:$0xff]
    %v1737 = vld [vmem:[%s2 + $0x128] sm:$0xff]
    %v1738 = vld [vmem:[%s2 + $0x130] sm:$0xff]
    %v1739 = vld [vmem:[%s2 + $0x138] sm:$0xff]
    %v1740 = vld [vmem:[%s2 + $0x140] sm:$0xff]
    %v1741 = vld [vmem:[%s2 + $0x148] sm:$0xff]
    %v1742 = vld [vmem:[%s2 + $0x150] sm:$0xff]
    %v1743 = vld [vmem:[%s2 + $0x158] sm:$0xff]
    %v1744 = vld [vmem:[%s2 + $0x160] sm:$0xff]
    %v1745 = vld [vmem:[%s2 + $0x168] sm:$0xff]
    %1746 = vrot.lane.b32.xlu0 %v1711, 114
    %v1747 = vpop.permute.xlu0 %1746
    %1748 = vrot.lane.b32.xlu0 %v1713, 114
    %v1749 = vpop.permute.xlu0 %1748
    %1750 = vrot.lane.b32.xlu0 %v1715, 114
    %v1751 = vpop.permute.xlu0 %1750
    %1752 = vrot.lane.b32.xlu0 %v1717, 114
    %v1753 = vpop.permute.xlu0 %1752
    %1754 = vrot.lane.b32.xlu0 %v1719, 114
    %v1755 = vpop.permute.xlu0 %1754
    %1756 = vrot.lane.b32.xlu0 %v1721, 114
    %v1757 = vpop.permute.xlu0 %1756
    %1758 = vrot.lane.b32.xlu0 %v1723, 114
    %v1759 = vpop.permute.xlu0 %1758
    %1760 = vrot.lane.b32.xlu0 %v1725, 114
    %v1761 = vpop.permute.xlu0 %1760
    %1762 = vrot.lane.b32.xlu0 %v1727, 114
    %v1763 = vpop.permute.xlu0 %1762
    %1764 = vrot.lane.b32.xlu0 %v1729, 114
    %v1765 = vpop.permute.xlu0 %1764
    %1766 = vrot.lane.b32.xlu0 %v1731, 114
    %v1767 = vpop.permute.xlu0 %1766
    %1768 = vrot.lane.b32.xlu0 %v1733, 114
    %v1769 = vpop.permute.xlu0 %1768
    %v1785 = vsel %vm411, %v1735, 0
    %v1788 = vsel %vm411, %v1737, 0
    %v1791 = vsel %vm411, %v1739, 0
    %v1794 = vsel %vm411, %v1741, 0
    %v1797 = vsel %vm411, %v1743, 0
    %v1800 = vsel %vm411, %v1745, 0
    %1802 = vmatprep.subr.mxu0 0.0
    %1803 = vmatpush1.msra.mxu0 %v1715
    %1804 = vmatprep.subr.mxu0 0.0
    %1805 = vmatpush1.msra.mxu0 %v1717
    %1806 = vmatprep.subr.mxu0 0.0
    %1807 = vmatpush1.msra.mxu0 %v1747
    %1808 = vmatprep.subr.mxu0 0.0
    %1809 = vmatpush1.msra.mxu0 %v1749
    %1810 = vmatprep.subr.mxu0 0.0
    %1811 = vmatpush1.msra.mxu0 %v1751
    %1812 = vmatprep.subr.mxu0 0.0
    %1813 = vmatpush1.msra.mxu0 %v1753
    %1814 = vmatprep.subr.mxu0 0.0
    %1815 = vmatpush1.msra.mxu0 %v1755
    %1816 = vmatprep.subr.mxu0 0.0
    %1817 = vmatpush1.msra.mxu0 %v1757
    %1818 = vmatprep.subr.mxu0 0.0
    %1819 = vmatpush1.msra.mxu0 %v1747
    %1820 = vmatprep.subr.mxu0 0.0
    %1821 = vmatpush1.msra.mxu0 %v1749
    %1822 = vmatprep.subr.mxu0 0.0
    %1823 = vmatpush1.msra.mxu0 %v1759
    %1824 = vmatprep.subr.mxu0 0.0
    %1825 = vmatpush1.msra.mxu0 %v1761
    %1826 = vmatprep.subr.mxu0 0.0
    %1827 = vmatpush1.msra.mxu0 %v1763
    %1828 = vmatprep.subr.mxu0 0.0
    %1829 = vmatpush1.msra.mxu0 %v1765
    %1830 = vmatprep.subr.mxu0 0.0
    %1831 = vmatpush1.msra.mxu0 %v1747
    %1832 = vmatprep.subr.mxu0 0.0
    %1833 = vmatpush1.msra.mxu0 %v1749
    %1834 = vmatprep.subr.mxu0 0.0
    %1835 = vmatpush1.msra.mxu0 %v1767
    %1836 = vmatprep.subr.mxu0 0.0
    %1837 = vmatpush1.msra.mxu0 %v1769
    %1838 = vmatprep.subr.mxu0 0.0
    %1839 = vmatpush1.msra.mxu0 0.0
    %1840 = vmatprep.subr.mxu0 0.0
    %1841 = vmatpush1.msra.mxu0 0.0
    %1842 = vmatprep.subr.mxu0 0.0
    %1843 = vmatpush1.msra.mxu0 0.0
    %1844 = vmatprep.subr.mxu0 0.0
    %1845 = vmatpush1.msra.mxu0 0.0
    %1846 = vmatprep.subr.mxu0 0.0
    %1847 = vmatpush1.msra.mxu0 0.0
    %1848 = vmatprep.subr.mxu0 0.0
    %1849 = vmatpush1.msra.mxu0 0.0
    %1850 = vmatprep.subr.mxu0 0.0
    %1851 = vmatpush1.msra.mxu0 0.0
    %1852 = vmatprep.subr.mxu0 0.0
    %1853 = vmatpush1.msra.mxu0 0.0
    %1854 = vmatprep.subr.mxu0 0.0
    %1855 = vmatpush1.msra.mxu0 0.0
    %1856 = vmatprep.subr.mxu0 0.0
    %1857 = vmatpush1.msra.mxu0 0.0
    %1858 = vmatprep.subr.mxu0 0.0
    %1859 = vmatpush1.msra.mxu0 0.0
    %1860 = vmatprep.subr.mxu0 0.0
    %1861 = vmatpush1.msra.mxu0 0.0
    %1862 = vmatprep.subr.mxu0 0.0
    %1863 = vmatpush1.msra.mxu0 0.0
    %1864 = vmatprep.subr.mxu0 0.0
    %1865 = vmatpush1.msra.mxu0 0.0
    %1866 = vmatprep.mubr.f32.mxu0 %v1785
    %1867 = vmatmul.mubr.f32.gmra.mrb[0].mxu0 %v1734
    %v1868 = vpop.f32.mrb[0].mxu0
    %v1869 = vadd.f32 0.0, %v1868
    %v1870 = vpop.f32.mrb[0].mxu0
    %1871 = vmatprep.mubr.f32.mxu0 %v1788
    %1872 = vmatmul.mubr.f32.gmra.mrb[0].mxu0 %v1736
    %v1873 = vpop.f32.mrb[0].mxu0
    %v1874 = vadd.f32 0.0, %v1873
    %v1875 = vpop.f32.mrb[0].mxu0
    %1876 = vmatprep.mubr.f32.mxu0 %v1791
    %1877 = vmatmul.mubr.f32.gmra.mrb[0].mxu0 %v1738
    %v1878 = vpop.f32.mrb[0].mxu0
    %v1879 = vadd.f32 0.0, %v1878
    %v1880 = vpop.f32.mrb[0].mxu0
    %1881 = vmatprep.mubr.f32.mxu0 %v1794
    %1882 = vmatmul.mubr.f32.gmra.mrb[0].mxu0 %v1740
    %v1883 = vpop.f32.mrb[0].mxu0
    %v1884 = vadd.f32 0.0, %v1883
    %v1885 = vpop.f32.mrb[0].mxu0
    %1886 = vmatprep.mubr.f32.mxu0 %v1797
    %1887 = vmatmul.mubr.f32.gmra.mrb[0].mxu0 %v1742
    %v1888 = vpop.f32.mrb[0].mxu0
    %v1889 = vadd.f32 0.0, %v1888
    %v1890 = vpop.f32.mrb[0].mxu0
    %1891 = vmatprep.mubr.f32.mxu0 %v1800
    %1892 = vmatmul.mubr.f32.gmra.mrb[0].mxu0 %v1744
    %v1893 = vpop.f32.mrb[0].mxu0
    %v1894 = vadd.f32 0.0, %v1893
    %v1895 = vpop.f32.mrb[0].mxu0
    %1896 = vdwg.mxu0
    %v1897 = vld [vmem:[%s3 + $0x80] sm:$0xff]
    %v1898 = vld [vmem:[%s3 + $0x88] sm:$0xff]
    %v1899 = vld [vmem:[%s3 + $0x90] sm:$0xff]
    %v1900 = vld [vmem:[%s3 + $0x98] sm:$0xff]
    %v1901 = vld [vmem:[%s3 + $0xa0] sm:$0xff]
    %v1902 = vld [vmem:[%s3 + $0xa8] sm:$0xff]
    %v1903 = vld [vmem:[%s3 + $0xb0] sm:$0xff]
    %v1904 = vld [vmem:[%s3 + $0xb8] sm:$0xff]
    %v1905 = vld [vmem:[%s3 + $0xc0] sm:$0xff]
    %v1906 = vld [vmem:[%s3 + $0xc8] sm:$0xff]
    %v1907 = vld [vmem:[%s3 + $0xd0] sm:$0xff]
    %v1908 = vld [vmem:[%s3 + $0xd8] sm:$0xff]
    %v1909 = vsel %vm404, %v1869, 0.0
    %1910 = vadd.xlane.f32.xlu0 %v1909
    %v1911 = vpop.xlane.xlu0 %1910
    %v1912 = vsel %vm404, %v1874, 0.0
    %1913 = vadd.xlane.f32.xlu0 %v1912
    %v1914 = vpop.xlane.xlu0 %1913
    %v1915 = vsel %vm404, %v1879, 0.0
    %1916 = vadd.xlane.f32.xlu0 %v1915
    %v1917 = vpop.xlane.xlu0 %1916
    %v1918 = vsel %vm404, %v1884, 0.0
    %1919 = vadd.xlane.f32.xlu0 %v1918
    %v1920 = vpop.xlane.xlu0 %1919
    %v1921 = vsel %vm404, %v1889, 0.0
    %1922 = vadd.xlane.f32.xlu0 %v1921
    %v1923 = vpop.xlane.xlu0 %1922
    %v1924 = vsel %vm404, %v1894, 0.0
    %1925 = vadd.xlane.f32.xlu0 %v1924
    %v1926 = vpop.xlane.xlu0 %1925
    %1927 = vmatprep.subr.mxu0 0.0
    %1928 = vmatpush1.msra.mxu0 %v1911
    %1929 = vmatprep.subr.mxu0 0.0
    %1930 = vmatpush1.msra.mxu0 %v1914
    %1931 = vmatprep.subr.mxu0 0.0
    %1932 = vmatpush1.msra.mxu0 %v1917
    %1933 = vmatprep.subr.mxu0 0.0
    %1934 = vmatpush1.msra.mxu0 %v1920
    %1935 = vmatprep.subr.mxu0 0.0
    %1936 = vmatpush1.msra.mxu0 %v1923
    %1937 = vmatprep.subr.mxu0 0.0
    %1938 = vmatpush1.msra.mxu0 %v1926
    %1939 = vmatprep.subr.mxu0 0.0
    %1940 = vmatpush1.msra.mxu0 0.0
    %1941 = vmatprep.subr.mxu0 0.0
    %1942 = vmatpush1.msra.mxu0 0.0
    %1943 = vmatprep.subr.mxu0 0.0
    %1944 = vmatpush1.msra.mxu0 0.0
    %1945 = vmatprep.subr.mxu0 0.0
    %1946 = vmatpush1.msra.mxu0 0.0
    %1947 = vmatprep.subr.mxu0 0.0
    %1948 = vmatpush1.msra.mxu0 0.0
    %1949 = vmatprep.subr.mxu0 0.0
    %1950 = vmatpush1.msra.mxu0 0.0
    %1951 = vmatprep.subr.mxu0 0.0
    %1952 = vmatpush1.msra.mxu0 0.0
    %1953 = vmatprep.subr.mxu0 0.0
    %1954 = vmatpush1.msra.mxu0 0.0
    %1955 = vmatprep.subr.mxu0 0.0
    %1956 = vmatpush1.msra.mxu0 0.0
    %1957 = vmatprep.subr.mxu0 0.0
    %1958 = vmatpush1.msra.mxu0 0.0
    %1959 = vmatprep.subr.mxu0 0.0
    %1960 = vmatpush1.msra.mxu0 0.0
    %1961 = vmatprep.subr.mxu0 0.0
    %1962 = vmatpush1.msra.mxu0 0.0
    %1963 = vmatprep.subr.mxu0 0.0
    %1964 = vmatpush1.msra.mxu0 0.0
    %1965 = vmatprep.subr.mxu0 0.0
    %1966 = vmatpush1.msra.mxu0 0.0
    %1967 = vmatprep.subr.mxu0 0.0
    %1968 = vmatpush1.msra.mxu0 0.0
    %1969 = vmatprep.subr.mxu0 0.0
    %1970 = vmatpush1.msra.mxu0 0.0
    %1971 = vmatprep.subr.mxu0 0.0
    %1972 = vmatpush1.msra.mxu0 0.0
    %1973 = vmatprep.subr.mxu0 0.0
    %1974 = vmatpush1.msra.mxu0 0.0
    %1975 = vmatprep.subr.mxu0 0.0
    %1976 = vmatpush1.msra.mxu0 0.0
    %1977 = vmatprep.subr.mxu0 0.0
    %1978 = vmatpush1.msra.mxu0 0.0
    %1979 = vmatprep.subr.mxu0 0.0
    %1980 = vmatpush1.msra.mxu0 0.0
    %1981 = vmatprep.subr.mxu0 0.0
    %1982 = vmatpush1.msra.mxu0 0.0
    %1983 = vmatprep.subr.mxu0 0.0
    %1984 = vmatpush1.msra.mxu0 0.0
    %1985 = vmatprep.subr.mxu0 0.0
    %1986 = vmatpush1.msra.mxu0 0.0
    %1987 = vmatprep.subr.mxu0 0.0
    %1988 = vmatpush1.msra.mxu0 0.0
    %1989 = vmatprep.subr.mxu0 0.0
    %1990 = vmatpush1.msra.mxu0 0.0
    %1991 = vmatprep.mubr.f32.mxu0 0.0
    %1992 = vmatmul.mubr.f32.gmra.mrb[0].mxu0 %v869
    %v1993 = vpop.f32.mrb[0].mxu0
    %v1994 = vadd.f32 0.0, %v1993
    %v1995 = vpop.f32.mrb[0].mxu0
    %1996 = vmatprep.mubr.f32.mxu0 0.0
    %1997 = vmatmul.mubr.f32.gmra.mrb[0].mxu0 %v872
    %v1998 = vpop.f32.mrb[0].mxu0
    %v1999 = vadd.f32 0.0, %v1998
    %v2000 = vpop.f32.mrb[0].mxu0
    %2001 = vmatprep.mubr.f32.mxu0 0.0
    %2002 = vmatmul.mubr.f32.gmra.mrb[0].mxu0 %v875
    %v2003 = vpop.f32.mrb[0].mxu0
    %v2004 = vadd.f32 0.0, %v2003
    %v2005 = vpop.f32.mrb[0].mxu0
    %2006 = vmatprep.mubr.f32.mxu0 0.0
    %2007 = vmatmul.mubr.f32.gmra.mrb[0].mxu0 %v878
    %v2008 = vpop.f32.mrb[0].mxu0
    %v2009 = vadd.f32 0.0, %v2008
    %v2010 = vpop.f32.mrb[0].mxu0
    %2011 = vmatprep.mubr.f32.mxu0 0.0
    %2012 = vmatmul.mubr.f32.gmra.mrb[0].mxu0 %v881
    %v2013 = vpop.f32.mrb[0].mxu0
    %v2014 = vadd.f32 0.0, %v2013
    %v2015 = vpop.f32.mrb[0].mxu0
    %2016 = vmatprep.mubr.f32.mxu0 0.0
    %2017 = vmatmul.mubr.f32.gmra.mrb[0].mxu0 %v884
    %v2018 = vpop.f32.mrb[0].mxu0
    %v2019 = vadd.f32 0.0, %v2018
    %v2020 = vpop.f32.mrb[0].mxu0
    %2021 = vdwg.mxu0
    %v2022 = vmul.f32 %v1869, %v1869
    %v2023 = vmul.f32 %v1874, %v1874
    %v2024 = vmul.f32 %v1879, %v1879
    %v2025 = vmul.f32 %v1884, %v1884
    %v2026 = vmul.f32 %v1889, %v1889
    %v2027 = vmul.f32 %v1894, %v1894
    %v2028 = vsel %vm404, %v2022, 0.0
    %2029 = vadd.xlane.f32.xlu0 %v2028
    %v2030 = vpop.xlane.xlu0 %2029
    %v2031 = vsel %vm404, %v2023, 0.0
    %2032 = vadd.xlane.f32.xlu0 %v2031
    %v2033 = vpop.xlane.xlu0 %2032
    %v2034 = vsel %vm404, %v2024, 0.0
    %2035 = vadd.xlane.f32.xlu0 %v2034
    %v2036 = vpop.xlane.xlu0 %2035
    %v2037 = vsel %vm404, %v2025, 0.0
    %2038 = vadd.xlane.f32.xlu0 %v2037
    %v2039 = vpop.xlane.xlu0 %2038
    %v2040 = vsel %vm404, %v2026, 0.0
    %2041 = vadd.xlane.f32.xlu0 %v2040
    %v2042 = vpop.xlane.xlu0 %2041
    %v2043 = vsel %vm404, %v2027, 0.0
    %2044 = vadd.xlane.f32.xlu0 %v2043
    %v2045 = vpop.xlane.xlu0 %2044
    %2046 = vmatprep.subr.mxu0 0.0
    %2047 = vmatpush1.msra.mxu0 %v2030
    %2048 = vmatprep.subr.mxu0 0.0
    %2049 = vmatpush1.msra.mxu0 %v2033
    %2050 = vmatprep.subr.mxu0 0.0
    %2051 = vmatpush1.msra.mxu0 %v2036
    %2052 = vmatprep.subr.mxu0 0.0
    %2053 = vmatpush1.msra.mxu0 %v2039
    %2054 = vmatprep.subr.mxu0 0.0
    %2055 = vmatpush1.msra.mxu0 %v2042
    %2056 = vmatprep.subr.mxu0 0.0
    %2057 = vmatpush1.msra.mxu0 %v2045
    %2058 = vmatprep.subr.mxu0 0.0
    %2059 = vmatpush1.msra.mxu0 0.0
    %2060 = vmatprep.subr.mxu0 0.0
    %2061 = vmatpush1.msra.mxu0 0.0
    %2062 = vmatprep.subr.mxu0 0.0
    %2063 = vmatpush1.msra.mxu0 0.0
    %2064 = vmatprep.subr.mxu0 0.0
    %2065 = vmatpush1.msra.mxu0 0.0
    %2066 = vmatprep.subr.mxu0 0.0
    %2067 = vmatpush1.msra.mxu0 0.0
    %2068 = vmatprep.subr.mxu0 0.0
    %2069 = vmatpush1.msra.mxu0 0.0
    %2070 = vmatprep.subr.mxu0 0.0
    %2071 = vmatpush1.msra.mxu0 0.0
    %2072 = vmatprep.subr.mxu0 0.0
    %2073 = vmatpush1.msra.mxu0 0.0
    %2074 = vmatprep.subr.mxu0 0.0
    %2075 = vmatpush1.msra.mxu0 0.0
    %2076 = vmatprep.subr.mxu0 0.0
    %2077 = vmatpush1.msra.mxu0 0.0
    %2078 = vmatprep.subr.mxu0 0.0
    %2079 = vmatpush1.msra.mxu0 0.0
    %2080 = vmatprep.subr.mxu0 0.0
    %2081 = vmatpush1.msra.mxu0 0.0
    %2082 = vmatprep.subr.mxu0 0.0
    %2083 = vmatpush1.msra.mxu0 0.0
    %2084 = vmatprep.subr.mxu0 0.0
    %2085 = vmatpush1.msra.mxu0 0.0
    %2086 = vmatprep.subr.mxu0 0.0
    %2087 = vmatpush1.msra.mxu0 0.0
    %2088 = vmatprep.subr.mxu0 0.0
    %2089 = vmatpush1.msra.mxu0 0.0
    %2090 = vmatprep.subr.mxu0 0.0
    %2091 = vmatpush1.msra.mxu0 0.0
    %2092 = vmatprep.subr.mxu0 0.0
    %2093 = vmatpush1.msra.mxu0 0.0
    %2094 = vmatprep.subr.mxu0 0.0
    %2095 = vmatpush1.msra.mxu0 0.0
    %2096 = vmatprep.subr.mxu0 0.0
    %2097 = vmatpush1.msra.mxu0 0.0
    %2098 = vmatprep.subr.mxu0 0.0
    %2099 = vmatpush1.msra.mxu0 0.0
    %2100 = vmatprep.subr.mxu0 0.0
    %2101 = vmatpush1.msra.mxu0 0.0
    %2102 = vmatprep.subr.mxu0 0.0
    %2103 = vmatpush1.msra.mxu0 0.0
    %2104 = vmatprep.subr.mxu0 0.0
    %2105 = vmatpush1.msra.mxu0 0.0
    %2106 = vmatprep.subr.mxu0 0.0
    %2107 = vmatpush1.msra.mxu0 0.0
    %2108 = vmatprep.subr.mxu0 0.0
    %2109 = vmatpush1.msra.mxu0 0.0
    %2110 = vmatprep.mubr.f32.mxu0 0.0
    %2111 = vmatmul.mubr.f32.gmra.mrb[0].mxu0 %v869
    %v2112 = vpop.f32.mrb[0].mxu0
    %v2113 = vadd.f32 0.0, %v2112
    %v2114 = vpop.f32.mrb[0].mxu0
    %2115 = vmatprep.mubr.f32.mxu0 0.0
    %2116 = vmatmul.mubr.f32.gmra.mrb[0].mxu0 %v872
    %v2117 = vpop.f32.mrb[0].mxu0
    %v2118 = vadd.f32 0.0, %v2117
    %v2119 = vpop.f32.mrb[0].mxu0
    %2120 = vmatprep.mubr.f32.mxu0 0.0
    %2121 = vmatmul.mubr.f32.gmra.mrb[0].mxu0 %v875
    %v2122 = vpop.f32.mrb[0].mxu0
    %v2123 = vadd.f32 0.0, %v2122
    %v2124 = vpop.f32.mrb[0].mxu0
    %2125 = vmatprep.mubr.f32.mxu0 0.0
    %2126 = vmatmul.mubr.f32.gmra.mrb[0].mxu0 %v878
    %v2127 = vpop.f32.mrb[0].mxu0
    %v2128 = vadd.f32 0.0, %v2127
    %v2129 = vpop.f32.mrb[0].mxu0
    %2130 = vmatprep.mubr.f32.mxu0 0.0
    %2131 = vmatmul.mubr.f32.gmra.mrb[0].mxu0 %v881
    %v2132 = vpop.f32.mrb[0].mxu0
    %v2133 = vadd.f32 0.0, %v2132
    %v2134 = vpop.f32.mrb[0].mxu0
    %2135 = vmatprep.mubr.f32.mxu0 0.0
    %2136 = vmatmul.mubr.f32.gmra.mrb[0].mxu0 %v884
    %v2137 = vpop.f32.mrb[0].mxu0
    %v2138 = vadd.f32 0.0, %v2137
    %v2139 = vpop.f32.mrb[0].mxu0
    %2140 = vdwg.mxu0
    %v2141 = vmul.f32 %v1994, 0.007142857
    %v2142 = vmul.f32 %v1999, 0.007142857
    %v2143 = vmul.f32 %v2004, 0.007142857
    %v2144 = vmul.f32 %v2009, 0.007142857
    %v2145 = vmul.f32 %v2014, 0.007142857
    %v2146 = vmul.f32 %v2019, 0.007142857
    %v2147 = vmul.f32 %v2113, 0.007142857
    %v2148 = vmul.f32 %v2118, 0.007142857
    %v2149 = vmul.f32 %v2123, 0.007142857
    %v2150 = vmul.f32 %v2128, 0.007142857
    %v2151 = vmul.f32 %v2133, 0.007142857
    %v2152 = vmul.f32 %v2138, 0.007142857
    %v2153 = vmul.f32 %v2141, %v2141
    %v2154 = vmul.f32 %v2142, %v2142
    %v2155 = vmul.f32 %v2143, %v2143
    %v2156 = vmul.f32 %v2144, %v2144
    %v2157 = vmul.f32 %v2145, %v2145
    %v2158 = vmul.f32 %v2146, %v2146
    %v2159 = vsub.f32 %v2147, %v2153
    %v2160 = vsub.f32 %v2148, %v2154
    %v2161 = vsub.f32 %v2149, %v2155
    %v2162 = vsub.f32 %v2150, %v2156
    %v2163 = vsub.f32 %v2151, %v2157
    %v2164 = vsub.f32 %v2152, %v2158
    %v2165 = vmax.f32 %v2159, 0.0
    %v2166 = vmax.f32 %v2160, 0.0
    %v2167 = vmax.f32 %v2161, 0.0
    %v2168 = vmax.f32 %v2162, 0.0
    %v2169 = vmax.f32 %v2163, 0.0
    %v2170 = vmax.f32 %v2164, 0.0
    %v2171 = vadd.f32 %v2165, 1e-05
    %v2172 = vadd.f32 %v2166, 1e-05
    %v2173 = vadd.f32 %v2167, 1e-05
    %v2174 = vadd.f32 %v2168, 1e-05
    %v2175 = vadd.f32 %v2169, 1e-05
    %v2176 = vadd.f32 %v2170, 1e-05
    %v2177 = vrsqrt.pop %v2171
    %v2178 = vrsqrt.pop %v2172
    %v2179 = vrsqrt.pop %v2173
    %v2180 = vrsqrt.pop %v2174
    %v2181 = vrsqrt.pop %v2175
    %v2182 = vrsqrt.pop %v2176
    %v2183 = vmul.f32 %v2177, %v1897
    %v2184 = vmul.f32 %v2178, %v1898
    %v2185 = vmul.f32 %v2179, %v1899
    %v2186 = vmul.f32 %v2180, %v1900
    %v2187 = vmul.f32 %v2181, %v1901
    %v2188 = vmul.f32 %v2182, %v1902
    %v2189 = vmul.f32 %v2141, %v2183
    %v2190 = vmul.f32 %v2142, %v2184
    %v2191 = vmul.f32 %v2143, %v2185
    %v2192 = vmul.f32 %v2144, %v2186
    %v2193 = vmul.f32 %v2145, %v2187
    %v2194 = vmul.f32 %v2146, %v2188
    %v2195 = vsub.f32 %v1903, %v2189
    %v2196 = vsub.f32 %v1904, %v2190
    %v2197 = vsub.f32 %v1905, %v2191
    %v2198 = vsub.f32 %v1906, %v2192
    %v2199 = vsub.f32 %v1907, %v2193
    %v2200 = vsub.f32 %v1908, %v2194
    %2202 = vset.pattern.permute.xlu0 0
    %2203 = vperm.xlu0 %2202, %v2183
    %v2204 = vpop.permute.xlu0 %2203
    %2207 = vset.pattern.permute.xlu0 0
    %2208 = vperm.xlu0 %2207, %v2184
    %v2209 = vpop.permute.xlu0 %2208
    %2212 = vset.pattern.permute.xlu0 0
    %2213 = vperm.xlu0 %2212, %v2185
    %v2214 = vpop.permute.xlu0 %2213
    %2217 = vset.pattern.permute.xlu0 0
    %2218 = vperm.xlu0 %2217, %v2186
    %v2219 = vpop.permute.xlu0 %2218
    %2222 = vset.pattern.permute.xlu0 0
    %2223 = vperm.xlu0 %2222, %v2187
    %v2224 = vpop.permute.xlu0 %2223
    %2227 = vset.pattern.permute.xlu0 0
    %2228 = vperm.xlu0 %2227, %v2188
    %v2229 = vpop.permute.xlu0 %2228
    %v2231 = vmul.f32 %v1869, %v2204
    %v2232 = vmul.f32 %v1874, %v2209
    %v2233 = vmul.f32 %v1879, %v2214
    %v2234 = vmul.f32 %v1884, %v2219
    %v2235 = vmul.f32 %v1889, %v2224
    %v2236 = vmul.f32 %v1894, %v2229
    %2238 = vset.pattern.permute.xlu0 0
    %2239 = vperm.xlu0 %2238, %v2195
    %v2240 = vpop.permute.xlu0 %2239
    %2243 = vset.pattern.permute.xlu0 0
    %2244 = vperm.xlu0 %2243, %v2196
    %v2245 = vpop.permute.xlu0 %2244
    %2248 = vset.pattern.permute.xlu0 0
    %2249 = vperm.xlu0 %2248, %v2197
    %v2250 = vpop.permute.xlu0 %2249
    %2253 = vset.pattern.permute.xlu0 0
    %2254 = vperm.xlu0 %2253, %v2198
    %v2255 = vpop.permute.xlu0 %2254
    %2258 = vset.pattern.permute.xlu0 0
    %2259 = vperm.xlu0 %2258, %v2199
    %v2260 = vpop.permute.xlu0 %2259
    %2263 = vset.pattern.permute.xlu0 0
    %2264 = vperm.xlu0 %2263, %v2200
    %v2265 = vpop.permute.xlu0 %2264
    %v2267 = vadd.f32 %v2231, %v2240
    %v2268 = vadd.f32 %v2232, %v2245
    %v2269 = vadd.f32 %v2233, %v2250
    %v2270 = vadd.f32 %v2234, %v2255
    %v2271 = vadd.f32 %v2235, %v2260
    %v2272 = vadd.f32 %v2236, %v2265
    %v2273 = vmax.f32 %v2267, 0.0
    %v2274 = vmax.f32 %v2268, 0.0
    %v2275 = vmax.f32 %v2269, 0.0
    %v2276 = vmax.f32 %v2270, 0.0
    %v2277 = vmax.f32 %v2271, 0.0
    %v2278 = vmax.f32 %v2272, 0.0
    %v2279 = vadd.f32 %v2273, %v2275
    %v2280 = vadd.f32 %v2274, %v2276
    %v2281 = vadd.f32 %v2279, %v2277
    %v2282 = vadd.f32 %v2280, %v2278
    %v2283 = vsel %vm404, %v2281, 0.0
    %2284 = vadd.xlane.f32.xlu0 %v2283
    %v2285 = vpop.xlane.xlu0 %2284
    %v2286 = vsel %vm404, %v2282, 0.0
    %2287 = vadd.xlane.f32.xlu0 %v2286
    %v2288 = vpop.xlane.xlu0 %2287
    %v2289 = vmul.f32 %v2285, 0.014285714
    %v2290 = vmul.f32 %v2288, 0.014285714
    %v2291 = vld [vmem:[%s2 + $0x180] sm:$0xff]
    %v2293 = vsel %vm411, %v2291, 0
    %2295 = vmatprep.subr.mxu0 0.0
    %2296 = vmatpush1.msra.mxu0 %v2289
    %2297 = vmatprep.subr.mxu0 0.0
    %2298 = vmatpush1.msra.mxu0 %v2290
    %2299 = vmatprep.subr.mxu0 0.0
    %2300 = vmatpush1.msra.mxu0 0.0
    %2301 = vmatprep.subr.mxu0 0.0
    %2302 = vmatpush1.msra.mxu0 0.0
    %2303 = vmatprep.subr.mxu0 0.0
    %2304 = vmatpush1.msra.mxu0 0.0
    %2305 = vmatprep.subr.mxu0 0.0
    %2306 = vmatpush1.msra.mxu0 0.0
    %2307 = vmatprep.subr.mxu0 0.0
    %2308 = vmatpush1.msra.mxu0 0.0
    %2309 = vmatprep.subr.mxu0 0.0
    %2310 = vmatpush1.msra.mxu0 0.0
    %2311 = vmatprep.subr.mxu0 0.0
    %2312 = vmatpush1.msra.mxu0 0.0
    %2313 = vmatprep.subr.mxu0 0.0
    %2314 = vmatpush1.msra.mxu0 0.0
    %2315 = vmatprep.subr.mxu0 0.0
    %2316 = vmatpush1.msra.mxu0 0.0
    %2317 = vmatprep.subr.mxu0 0.0
    %2318 = vmatpush1.msra.mxu0 0.0
    %2319 = vmatprep.subr.mxu0 0.0
    %2320 = vmatpush1.msra.mxu0 0.0
    %2321 = vmatprep.subr.mxu0 0.0
    %2322 = vmatpush1.msra.mxu0 0.0
    %2323 = vmatprep.subr.mxu0 0.0
    %2324 = vmatpush1.msra.mxu0 0.0
    %2325 = vmatprep.subr.mxu0 0.0
    %2326 = vmatpush1.msra.mxu0 0.0
    %2327 = vmatprep.subr.mxu0 0.0
    %2328 = vmatpush1.msra.mxu0 0.0
    %2329 = vmatprep.subr.mxu0 0.0
    %2330 = vmatpush1.msra.mxu0 0.0
    %2331 = vmatprep.subr.mxu0 0.0
    %2332 = vmatpush1.msra.mxu0 0.0
    %2333 = vmatprep.subr.mxu0 0.0
    %2334 = vmatpush1.msra.mxu0 0.0
    %2335 = vmatprep.subr.mxu0 0.0
    %2336 = vmatpush1.msra.mxu0 0.0
    %2337 = vmatprep.subr.mxu0 0.0
    %2338 = vmatpush1.msra.mxu0 0.0
    %2339 = vmatprep.subr.mxu0 0.0
    %2340 = vmatpush1.msra.mxu0 0.0
    %2341 = vmatprep.subr.mxu0 0.0
    %2342 = vmatpush1.msra.mxu0 0.0
    %2343 = vmatprep.subr.mxu0 0.0
    %2344 = vmatpush1.msra.mxu0 0.0
    %2345 = vmatprep.subr.mxu0 0.0
    %2346 = vmatpush1.msra.mxu0 0.0
    %2347 = vmatprep.subr.mxu0 0.0
    %2348 = vmatpush1.msra.mxu0 0.0
    %2349 = vmatprep.subr.mxu0 0.0
    %2350 = vmatpush1.msra.mxu0 0.0
    %2351 = vmatprep.subr.mxu0 0.0
    %2352 = vmatpush1.msra.mxu0 0.0
    %2353 = vmatprep.subr.mxu0 0.0
    %2354 = vmatpush1.msra.mxu0 0.0
    %2355 = vmatprep.subr.mxu0 0.0
    %2356 = vmatpush1.msra.mxu0 0.0
    %2357 = vmatprep.subr.mxu0 0.0
    %2358 = vmatpush1.msra.mxu0 0.0
    %2359 = vmatprep.mubr.f32.mxu0 0.0
    %2360 = vmatmul.mubr.f32.gmra.mrb[0].mxu0 %v2293
    %v2361 = vpop.f32.mrb[0].mxu0
    %v2362 = vadd.f32 0.0, %v2361
    %v2363 = vpop.f32.mrb[0].mxu0
    %2364 = vdwg.mxu0
    %v2365 = vld [vmem:[%s3 + $0xf0] sm:$0xff]
    %v2366 = vld [vmem:[%s3 + $0xf8] sm:$0xff]
    %v2367 = vadd.f32 %v2362, 0.0
    %2368 = vmatprep.subr.mxu0 0.0
    %2369 = vmatpush1.msra.mxu0 %v2367
    %2370 = vmatprep.subr.mxu0 0.0
    %2371 = vmatpush1.msra.mxu0 0.0
    %2372 = vmatprep.subr.mxu0 0.0
    %2373 = vmatpush1.msra.mxu0 0.0
    %2374 = vmatprep.subr.mxu0 0.0
    %2375 = vmatpush1.msra.mxu0 0.0
    %2376 = vmatprep.subr.mxu0 0.0
    %2377 = vmatpush1.msra.mxu0 0.0
    %2378 = vmatprep.subr.mxu0 0.0
    %2379 = vmatpush1.msra.mxu0 0.0
    %2380 = vmatprep.subr.mxu0 0.0
    %2381 = vmatpush1.msra.mxu0 0.0
    %2382 = vmatprep.subr.mxu0 0.0
    %2383 = vmatpush1.msra.mxu0 0.0
    %2384 = vmatprep.subr.mxu0 0.0
    %2385 = vmatpush1.msra.mxu0 0.0
    %2386 = vmatprep.subr.mxu0 0.0
    %2387 = vmatpush1.msra.mxu0 0.0
    %2388 = vmatprep.subr.mxu0 0.0
    %2389 = vmatpush1.msra.mxu0 0.0
    %2390 = vmatprep.subr.mxu0 0.0
    %2391 = vmatpush1.msra.mxu0 0.0
    %2392 = vmatprep.subr.mxu0 0.0
    %2393 = vmatpush1.msra.mxu0 0.0
    %2394 = vmatprep.subr.mxu0 0.0
    %2395 = vmatpush1.msra.mxu0 0.0
    %2396 = vmatprep.subr.mxu0 0.0
    %2397 = vmatpush1.msra.mxu0 0.0
    %2398 = vmatprep.subr.mxu0 0.0
    %2399 = vmatpush1.msra.mxu0 0.0
    %2400 = vmatprep.subr.mxu0 0.0
    %2401 = vmatpush1.msra.mxu0 0.0
    %2402 = vmatprep.subr.mxu0 0.0
    %2403 = vmatpush1.msra.mxu0 0.0
    %2404 = vmatprep.subr.mxu0 0.0
    %2405 = vmatpush1.msra.mxu0 0.0
    %2406 = vmatprep.subr.mxu0 0.0
    %2407 = vmatpush1.msra.mxu0 0.0
    %2408 = vmatprep.subr.mxu0 0.0
    %2409 = vmatpush1.msra.mxu0 0.0
    %2410 = vmatprep.subr.mxu0 0.0
    %2411 = vmatpush1.msra.mxu0 0.0
    %2412 = vmatprep.subr.mxu0 0.0
    %2413 = vmatpush1.msra.mxu0 0.0
    %2414 = vmatprep.subr.mxu0 0.0
    %2415 = vmatpush1.msra.mxu0 0.0
    %2416 = vmatprep.subr.mxu0 0.0
    %2417 = vmatpush1.msra.mxu0 0.0
    %2418 = vmatprep.subr.mxu0 0.0
    %2419 = vmatpush1.msra.mxu0 0.0
    %2420 = vmatprep.subr.mxu0 0.0
    %2421 = vmatpush1.msra.mxu0 0.0
    %2422 = vmatprep.subr.mxu0 0.0
    %2423 = vmatpush1.msra.mxu0 0.0
    %2424 = vmatprep.subr.mxu0 0.0
    %2425 = vmatpush1.msra.mxu0 0.0
    %2426 = vmatprep.subr.mxu0 0.0
    %2427 = vmatpush1.msra.mxu0 0.0
    %2428 = vmatprep.subr.mxu0 0.0
    %2429 = vmatpush1.msra.mxu0 0.0
    %2430 = vmatprep.subr.mxu0 0.0
    %2431 = vmatpush1.msra.mxu0 0.0
    %2432 = vmatprep.mubr.f32.mxu0 0.0
    %2433 = vmatmul.mubr.f32.gmra.mrb[0].mxu0 %v1340
    %v2434 = vpop.f32.mrb[0].mxu0
    %v2435 = vadd.f32 0.0, %v2434
    %v2436 = vpop.f32.mrb[0].mxu0
    %2437 = vdwg.mxu0
    %v2438 = vmul.f32 %v2362, %v2362
    %v2439 = vadd.f32 %v2438, 0.0
    %2440 = vmatprep.subr.mxu0 0.0
    %2441 = vmatpush1.msra.mxu0 %v2439
    %2442 = vmatprep.subr.mxu0 0.0
    %2443 = vmatpush1.msra.mxu0 0.0
    %2444 = vmatprep.subr.mxu0 0.0
    %2445 = vmatpush1.msra.mxu0 0.0
    %2446 = vmatprep.subr.mxu0 0.0
    %2447 = vmatpush1.msra.mxu0 0.0
    %2448 = vmatprep.subr.mxu0 0.0
    %2449 = vmatpush1.msra.mxu0 0.0
    %2450 = vmatprep.subr.mxu0 0.0
    %2451 = vmatpush1.msra.mxu0 0.0
    %2452 = vmatprep.subr.mxu0 0.0
    %2453 = vmatpush1.msra.mxu0 0.0
    %2454 = vmatprep.subr.mxu0 0.0
    %2455 = vmatpush1.msra.mxu0 0.0
    %2456 = vmatprep.subr.mxu0 0.0
    %2457 = vmatpush1.msra.mxu0 0.0
    %2458 = vmatprep.subr.mxu0 0.0
    %2459 = vmatpush1.msra.mxu0 0.0
    %2460 = vmatprep.subr.mxu0 0.0
    %2461 = vmatpush1.msra.mxu0 0.0
    %2462 = vmatprep.subr.mxu0 0.0
    %2463 = vmatpush1.msra.mxu0 0.0
    %2464 = vmatprep.subr.mxu0 0.0
    %2465 = vmatpush1.msra.mxu0 0.0
    %2466 = vmatprep.subr.mxu0 0.0
    %2467 = vmatpush1.msra.mxu0 0.0
    %2468 = vmatprep.subr.mxu0 0.0
    %2469 = vmatpush1.msra.mxu0 0.0
    %2470 = vmatprep.subr.mxu0 0.0
    %2471 = vmatpush1.msra.mxu0 0.0
    %2472 = vmatprep.subr.mxu0 0.0
    %2473 = vmatpush1.msra.mxu0 0.0
    %2474 = vmatprep.subr.mxu0 0.0
    %2475 = vmatpush1.msra.mxu0 0.0
    %2476 = vmatprep.subr.mxu0 0.0
    %2477 = vmatpush1.msra.mxu0 0.0
    %2478 = vmatprep.subr.mxu0 0.0
    %2479 = vmatpush1.msra.mxu0 0.0
    %2480 = vmatprep.subr.mxu0 0.0
    %2481 = vmatpush1.msra.mxu0 0.0
    %2482 = vmatprep.subr.mxu0 0.0
    %2483 = vmatpush1.msra.mxu0 0.0
    %2484 = vmatprep.subr.mxu0 0.0
    %2485 = vmatpush1.msra.mxu0 0.0
    %2486 = vmatprep.subr.mxu0 0.0
    %2487 = vmatpush1.msra.mxu0 0.0
    %2488 = vmatprep.subr.mxu0 0.0
    %2489 = vmatpush1.msra.mxu0 0.0
    %2490 = vmatprep.subr.mxu0 0.0
    %2491 = vmatpush1.msra.mxu0 0.0
    %2492 = vmatprep.subr.mxu0 0.0
    %2493 = vmatpush1.msra.mxu0 0.0
    %2494 = vmatprep.subr.mxu0 0.0
    %2495 = vmatpush1.msra.mxu0 0.0
    %2496 = vmatprep.subr.mxu0 0.0
    %2497 = vmatpush1.msra.mxu0 0.0
    %2498 = vmatprep.subr.mxu0 0.0
    %2499 = vmatpush1.msra.mxu0 0.0
    %2500 = vmatprep.subr.mxu0 0.0
    %2501 = vmatpush1.msra.mxu0 0.0
    %2502 = vmatprep.subr.mxu0 0.0
    %2503 = vmatpush1.msra.mxu0 0.0
    %2504 = vmatprep.mubr.f32.mxu0 0.0
    %2505 = vmatmul.mubr.f32.gmra.mrb[0].mxu0 %v1340
    %v2506 = vpop.f32.mrb[0].mxu0
    %v2507 = vadd.f32 0.0, %v2506
    %v2508 = vpop.f32.mrb[0].mxu0
    %2509 = vdwg.mxu0
    %v2510 = vmul.f32 %v2435, 0.5
    %v2511 = vmul.f32 %v2507, 0.5
    %v2512 = vmul.f32 %v2510, %v2510
    %v2513 = vsub.f32 %v2511, %v2512
    %v2514 = vmax.f32 %v2513, 0.0
    %v2515 = vadd.f32 %v2514, 1e-05
    %v2516 = vrsqrt.pop %v2515
    %v2517 = vmul.f32 %v2516, %v2365
    %v2518 = vmul.f32 %v2510, %v2517
    %v2519 = vsub.f32 %v2366, %v2518
    %v2520 = vmul.f32 %v2362, %v2517
    %v2521 = vadd.f32 %v2520, %v2519
    %v2522 = vmax.f32 %v2521, 0.0
    %v2523 = vld [vmem:[%s2 + $0x1f0] sm:$0xff]
    %v2524 = vld [vmem:[%s2 + $0x200] sm:$0xff]
    %v2525 = vld [vmem:[%s2 + $0x210] sm:$0xff]
    %v2526 = vld [vmem:[%s2 + $0x220] sm:$0xff]
    %v2527 = vld [vmem:[%s2 + $0x230] sm:$0xff]
    %v2528 = vld [vmem:[%s2 + $0x240] sm:$0xff]
    %v2529 = vld [vmem:[%s3 + $0x130] sm:$0xff]
    %v2530 = vld [vmem:[%s3 + $0x138] sm:$0xff]
    %v2531 = vld [vmem:[%s3 + $0x140] sm:$0xff]
    %v2532 = vld [vmem:[%s3 + $0x148] sm:$0xff]
    %v2533 = vld [vmem:[%s3 + $0x150] sm:$0xff]
    %v2534 = vld [vmem:[%s3 + $0x158] sm:$0xff]
    %v2536 = vsel %vm1338, %v2523, 0
    %v2539 = vsel %vm1338, %v2524, 0
    %v2542 = vsel %vm1338, %v2525, 0
    %v2545 = vsel %vm1338, %v2526, 0
    %v2548 = vsel %vm1338, %v2527, 0
    %v2551 = vsel %vm1338, %v2528, 0
    %2553 = vmatprep.subr.mxu0 0.0
    %2554 = vmatpush1.msra.mxu0 %v2522
    %2555 = vmatprep.subr.mxu0 0.0
    %2556 = vmatpush1.msra.mxu0 0.0
    %2557 = vmatprep.subr.mxu0 0.0
    %2558 = vmatpush1.msra.mxu0 0.0
    %2559 = vmatprep.subr.mxu0 0.0
    %2560 = vmatpush1.msra.mxu0 0.0
    %2561 = vmatprep.subr.mxu0 0.0
    %2562 = vmatpush1.msra.mxu0 0.0
    %2563 = vmatprep.subr.mxu0 0.0
    %2564 = vmatpush1.msra.mxu0 0.0
    %2565 = vmatprep.subr.mxu0 0.0
    %2566 = vmatpush1.msra.mxu0 0.0
    %2567 = vmatprep.subr.mxu0 0.0
    %2568 = vmatpush1.msra.mxu0 0.0
    %2569 = vmatprep.subr.mxu0 0.0
    %2570 = vmatpush1.msra.mxu0 0.0
    %2571 = vmatprep.subr.mxu0 0.0
    %2572 = vmatpush1.msra.mxu0 0.0
    %2573 = vmatprep.subr.mxu0 0.0
    %2574 = vmatpush1.msra.mxu0 0.0
    %2575 = vmatprep.subr.mxu0 0.0
    %2576 = vmatpush1.msra.mxu0 0.0
    %2577 = vmatprep.subr.mxu0 0.0
    %2578 = vmatpush1.msra.mxu0 0.0
    %2579 = vmatprep.subr.mxu0 0.0
    %2580 = vmatpush1.msra.mxu0 0.0
    %2581 = vmatprep.subr.mxu0 0.0
    %2582 = vmatpush1.msra.mxu0 0.0
    %2583 = vmatprep.subr.mxu0 0.0
    %2584 = vmatpush1.msra.mxu0 0.0
    %2585 = vmatprep.subr.mxu0 0.0
    %2586 = vmatpush1.msra.mxu0 0.0
    %2587 = vmatprep.subr.mxu0 0.0
    %2588 = vmatpush1.msra.mxu0 0.0
    %2589 = vmatprep.subr.mxu0 0.0
    %2590 = vmatpush1.msra.mxu0 0.0
    %2591 = vmatprep.subr.mxu0 0.0
    %2592 = vmatpush1.msra.mxu0 0.0
    %2593 = vmatprep.subr.mxu0 0.0
    %2594 = vmatpush1.msra.mxu0 0.0
    %2595 = vmatprep.subr.mxu0 0.0
    %2596 = vmatpush1.msra.mxu0 0.0
    %2597 = vmatprep.subr.mxu0 0.0
    %2598 = vmatpush1.msra.mxu0 0.0
    %2599 = vmatprep.subr.mxu0 0.0
    %2600 = vmatpush1.msra.mxu0 0.0
    %2601 = vmatprep.subr.mxu0 0.0
    %2602 = vmatpush1.msra.mxu0 0.0
    %2603 = vmatprep.subr.mxu0 0.0
    %2604 = vmatpush1.msra.mxu0 0.0
    %2605 = vmatprep.subr.mxu0 0.0
    %2606 = vmatpush1.msra.mxu0 0.0
    %2607 = vmatprep.subr.mxu0 0.0
    %2608 = vmatpush1.msra.mxu0 0.0
    %2609 = vmatprep.subr.mxu0 0.0
    %2610 = vmatpush1.msra.mxu0 0.0
    %2611 = vmatprep.subr.mxu0 0.0
    %2612 = vmatpush1.msra.mxu0 0.0
    %2613 = vmatprep.subr.mxu0 0.0
    %2614 = vmatpush1.msra.mxu0 0.0
    %2615 = vmatprep.subr.mxu0 0.0
    %2616 = vmatpush1.msra.mxu0 0.0
    %2617 = vmatprep.mubr.f32.mxu0 0.0
    %2618 = vmatmul.mubr.f32.gmra.mrb[0].mxu0 %v2536
    %v2619 = vpop.f32.mrb[0].mxu0
    %v2620 = vadd.f32 %v2529, %v2619
    %v2621 = vpop.f32.mrb[0].mxu0
    %2622 = vmatprep.mubr.f32.mxu0 0.0
    %2623 = vmatmul.mubr.f32.gmra.mrb[0].mxu0 %v2539
    %v2624 = vpop.f32.mrb[0].mxu0
    %v2625 = vadd.f32 %v2530, %v2624
    %v2626 = vpop.f32.mrb[0].mxu0
    %2627 = vmatprep.mubr.f32.mxu0 0.0
    %2628 = vmatmul.mubr.f32.gmra.mrb[0].mxu0 %v2542
    %v2629 = vpop.f32.mrb[0].mxu0
    %v2630 = vadd.f32 %v2531, %v2629
    %v2631 = vpop.f32.mrb[0].mxu0
    %2632 = vmatprep.mubr.f32.mxu0 0.0
    %2633 = vmatmul.mubr.f32.gmra.mrb[0].mxu0 %v2545
    %v2634 = vpop.f32.mrb[0].mxu0
    %v2635 = vadd.f32 %v2532, %v2634
    %v2636 = vpop.f32.mrb[0].mxu0
    %2637 = vmatprep.mubr.f32.mxu0 0.0
    %2638 = vmatmul.mubr.f32.gmra.mrb[0].mxu0 %v2548
    %v2639 = vpop.f32.mrb[0].mxu0
    %v2640 = vadd.f32 %v2533, %v2639
    %v2641 = vpop.f32.mrb[0].mxu0
    %2642 = vmatprep.mubr.f32.mxu0 0.0
    %2643 = vmatmul.mubr.f32.gmra.mrb[0].mxu0 %v2551
    %v2644 = vpop.f32.mrb[0].mxu0
    %v2645 = vadd.f32 %v2534, %v2644
    %v2646 = vpop.f32.mrb[0].mxu0
    %2647 = vdwg.mxu0
    %v2648 = vmax.f32 %v2620, %v2630
    %v2649 = vmax.f32 %v2625, %v2635
    %v2650 = vmax.f32 %v2648, %v2640
    %v2651 = vmax.f32 %v2649, %v2645
    %v2652 = vsub.f32 %v2620, %v2650
    %v2653 = vsub.f32 %v2625, %v2651
    %v2654 = vmul.f32 %v2652, 1.442695
    %v2655 = vpow.pop %v2654
    %v2656 = vmul.f32 %v2653, 1.442695
    %v2657 = vpow.pop %v2656
    %v2658 = vsub.f32 %v2630, %v2650
    %v2659 = vsub.f32 %v2635, %v2651
    %v2660 = vmul.f32 %v2658, 1.442695
    %v2661 = vpow.pop %v2660
    %v2662 = vmul.f32 %v2659, 1.442695
    %v2663 = vpow.pop %v2662
    %v2664 = vsub.f32 %v2640, %v2650
    %v2665 = vsub.f32 %v2645, %v2651
    %v2666 = vmul.f32 %v2664, 1.442695
    %v2667 = vpow.pop %v2666
    %v2668 = vmul.f32 %v2665, 1.442695
    %v2669 = vpow.pop %v2668
    %v2670 = vadd.f32 %v2655, %v2661
    %v2671 = vadd.f32 %v2657, %v2663
    %v2672 = vadd.f32 %v2670, %v2667
    %v2673 = vadd.f32 %v2671, %v2669
    %v2674 = vrcp.pop %v2672
    %v2675 = vrcp.pop %v2673
    %v2676 = vmul.f32 %v2655, %v2674
    %v2677 = vmul.f32 %v2657, %v2675
    %2679 = vset.pattern.permute.xlu0 0
    %2680 = vperm.xlu0 %2679, %v2676
    %v2681 = vpop.permute.xlu0 %2680
    %2684 = vset.pattern.permute.xlu0 0
    %2685 = vperm.xlu0 %2684, %v2677
    %v2686 = vpop.permute.xlu0 %2685
    %v2688 = vmul.f32 %v2273, %v2681
    %v2689 = vmul.f32 %v2274, %v2686
    %v2690 = vmul.f32 %v2661, %v2674
    %v2691 = vmul.f32 %v2663, %v2675
    %2693 = vset.pattern.permute.xlu0 0
    %2694 = vperm.xlu0 %2693, %v2690
    %v2695 = vpop.permute.xlu0 %2694
    %2698 = vset.pattern.permute.xlu0 0
    %2699 = vperm.xlu0 %2698, %v2691
    %v2700 = vpop.permute.xlu0 %2699
    %v2702 = vmul.f32 %v2275, %v2695
    %v2703 = vmul.f32 %v2276, %v2700
    %v2704 = vadd.f32 %v2688, %v2702
    %v2705 = vadd.f32 %v2689, %v2703
    %v2706 = vmul.f32 %v2667, %v2674
    %v2707 = vmul.f32 %v2669, %v2675
    %2709 = vset.pattern.permute.xlu0 0
    %2710 = vperm.xlu0 %2709, %v2706
    %v2711 = vpop.permute.xlu0 %2710
    %2714 = vset.pattern.permute.xlu0 0
    %2715 = vperm.xlu0 %2714, %v2707
    %v2716 = vpop.permute.xlu0 %2715
    %v2718 = vmul.f32 %v2277, %v2711
    %v2719 = vmul.f32 %v2278, %v2716
    %v2720 = vadd.f32 %v2704, %v2718
    %v2721 = vadd.f32 %v2705, %v2719
    %v2722 = vld [vmem:[%s2 + $0x250] sm:$0xff]
    %v2723 = vld [vmem:[%s2 + $0x260] sm:$0xff]
    %v2724 = vld [vmem:[%s2 + $0x270] sm:$0xff]
    %v2725 = vld [vmem:[%s2 + $0x280] sm:$0xff]
    %v2726 = vld [vmem:[%s2 + $0x290] sm:$0xff]
    %v2727 = vld [vmem:[%s2 + $0x2a0] sm:$0xff]
    %v2728 = vld [vmem:[%s2 + $0x2b0] sm:$0xff]
    %v2729 = vld [vmem:[%s2 + $0x2c0] sm:$0xff]
    %v2730 = vld [vmem:[%s2 + $0x2d0] sm:$0x3f]
    %v2732 = vsel %vm404, %v2720, 0
    %v2735 = vsel %vm404, %v2721, 0
    %v2738 = vsel %vm309, %v2730, 0
    %2740 = vmatprep.subr.mxu0 0.0
    %2741 = vmatpush1.msra.mxu0 %v2722
    %2742 = vmatprep.subr.mxu0 0.0
    %2743 = vmatpush1.msra.mxu0 %v2723
    %2744 = vmatprep.subr.mxu0 0.0
    %2745 = vmatpush1.msra.mxu0 %v2724
    %2746 = vmatprep.subr.mxu0 0.0
    %2747 = vmatpush1.msra.mxu0 %v2725
    %2748 = vmatprep.subr.mxu0 0.0
    %2749 = vmatpush1.msra.mxu0 %v2726
    %2750 = vmatprep.subr.mxu0 0.0
    %2751 = vmatpush1.msra.mxu0 %v2727
    %2752 = vmatprep.subr.mxu0 0.0
    %2753 = vmatpush1.msra.mxu0 %v2728
    %2754 = vmatprep.subr.mxu0 0.0
    %2755 = vmatpush1.msra.mxu0 %v2729
    %2756 = vmatprep.subr.mxu0 0.0
    %2757 = vmatpush1.msra.mxu0 %v2738
    %2758 = vmatprep.subr.mxu0 0.0
    %2759 = vmatpush1.msra.mxu0 0.0
    %2760 = vmatprep.subr.mxu0 0.0
    %2761 = vmatpush1.msra.mxu0 0.0
    %2762 = vmatprep.subr.mxu0 0.0
    %2763 = vmatpush1.msra.mxu0 0.0
    %2764 = vmatprep.subr.mxu0 0.0
    %2765 = vmatpush1.msra.mxu0 0.0
    %2766 = vmatprep.subr.mxu0 0.0
    %2767 = vmatpush1.msra.mxu0 0.0
    %2768 = vmatprep.subr.mxu0 0.0
    %2769 = vmatpush1.msra.mxu0 0.0
    %2770 = vmatprep.subr.mxu0 0.0
    %2771 = vmatpush1.msra.mxu0 0.0
    %2772 = vmatprep.subr.mxu0 0.0
    %2773 = vmatpush1.msra.mxu0 0.0
    %2774 = vmatprep.subr.mxu0 0.0
    %2775 = vmatpush1.msra.mxu0 0.0
    %2776 = vmatprep.subr.mxu0 0.0
    %2777 = vmatpush1.msra.mxu0 0.0
    %2778 = vmatprep.subr.mxu0 0.0
    %2779 = vmatpush1.msra.mxu0 0.0
    %2780 = vmatprep.subr.mxu0 0.0
    %2781 = vmatpush1.msra.mxu0 0.0
    %2782 = vmatprep.subr.mxu0 0.0
    %2783 = vmatpush1.msra.mxu0 0.0
    %2784 = vmatprep.subr.mxu0 0.0
    %2785 = vmatpush1.msra.mxu0 0.0
    %2786 = vmatprep.subr.mxu0 0.0
    %2787 = vmatpush1.msra.mxu0 0.0
    %2788 = vmatprep.subr.mxu0 0.0
    %2789 = vmatpush1.msra.mxu0 0.0
    %2790 = vmatprep.subr.mxu0 0.0
    %2791 = vmatpush1.msra.mxu0 0.0
    %2792 = vmatprep.subr.mxu0 0.0
    %2793 = vmatpush1.msra.mxu0 0.0
    %2794 = vmatprep.subr.mxu0 0.0
    %2795 = vmatpush1.msra.mxu0 0.0
    %2796 = vmatprep.subr.mxu0 0.0
    %2797 = vmatpush1.msra.mxu0 0.0
    %2798 = vmatprep.subr.mxu0 0.0
    %2799 = vmatpush1.msra.mxu0 0.0
    %2800 = vmatprep.subr.mxu0 0.0
    %2801 = vmatpush1.msra.mxu0 0.0
    %2802 = vmatprep.subr.mxu0 0.0
    %2803 = vmatpush1.msra.mxu0 0.0
    %2804 = vmatprep.mubr.f32.mxu0 0.0
    %2805 = vmatmul.mubr.f32.gmra.mrb[0].mxu0 %v2732
    %v2806 = vpop.f32.mrb[0].mxu0
    %v2807 = vadd.f32 0.0, %v2806
    %v2808 = vpop.f32.mrb[0].mxu0
    %2809 = vmatprep.mubr.f32.mxu0 0.0
    %2810 = vmatmul.mubr.f32.gmra.mrb[0].mxu0 %v2735
    %v2811 = vpop.f32.mrb[0].mxu0
    %v2812 = vadd.f32 0.0, %v2811
    %v2813 = vpop.f32.mrb[0].mxu0
    %2814 = vdwg.mxu0
    %v2815 = vld [vmem:[%s2 + $0x350] sm:$0xff]
    %v2816 = vld [vmem:[%s2 + $0x360] sm:$0xff]
    %v2817 = vmul.f32 %v2807, %v2815
    %v2818 = vmul.f32 %v2812, %v2816
    %v2819 = vld [vmem:[%s2 + $0x2e0] sm:$0xff]
    %v2820 = vld [vmem:[%s2 + $0x2f0] sm:$0xff]
    %v2821 = vld [vmem:[%s2 + $0x300] sm:$0xff]
    %v2822 = vld [vmem:[%s2 + $0x310] sm:$0xff]
    %v2823 = vld [vmem:[%s2 + $0x320] sm:$0xff]
    %v2824 = vld [vmem:[%s2 + $0x330] sm:$0xff]
    %v2826 = vsel %vm867, %v2817, 0
    %v2829 = vsel %vm867, %v2818, 0
    %2831 = vmatprep.subr.mxu0 0.0
    %2832 = vmatpush1.msra.mxu0 %v2819
    %2833 = vmatprep.subr.mxu0 0.0
    %2834 = vmatpush1.msra.mxu0 %v2820
    %2835 = vmatprep.subr.mxu0 0.0
    %2836 = vmatpush1.msra.mxu0 %v2821
    %2837 = vmatprep.subr.mxu0 0.0
    %2838 = vmatpush1.msra.mxu0 %v2822
    %2839 = vmatprep.subr.mxu0 0.0
    %2840 = vmatpush1.msra.mxu0 %v2823
    %2841 = vmatprep.subr.mxu0 0.0
    %2842 = vmatpush1.msra.mxu0 %v2824
    %2843 = vmatprep.subr.mxu0 0.0
    %2844 = vmatpush1.msra.mxu0 0.0
    %2845 = vmatprep.subr.mxu0 0.0
    %2846 = vmatpush1.msra.mxu0 0.0
    %2847 = vmatprep.subr.mxu0 0.0
    %2848 = vmatpush1.msra.mxu0 0.0
    %2849 = vmatprep.subr.mxu0 0.0
    %2850 = vmatpush1.msra.mxu0 0.0
    %2851 = vmatprep.subr.mxu0 0.0
    %2852 = vmatpush1.msra.mxu0 0.0
    %2853 = vmatprep.subr.mxu0 0.0
    %2854 = vmatpush1.msra.mxu0 0.0
    %2855 = vmatprep.subr.mxu0 0.0
    %2856 = vmatpush1.msra.mxu0 0.0
    %2857 = vmatprep.subr.mxu0 0.0
    %2858 = vmatpush1.msra.mxu0 0.0
    %2859 = vmatprep.subr.mxu0 0.0
    %2860 = vmatpush1.msra.mxu0 0.0
    %2861 = vmatprep.subr.mxu0 0.0
    %2862 = vmatpush1.msra.mxu0 0.0
    %2863 = vmatprep.subr.mxu0 0.0
    %2864 = vmatpush1.msra.mxu0 0.0
    %2865 = vmatprep.subr.mxu0 0.0
    %2866 = vmatpush1.msra.mxu0 0.0
    %2867 = vmatprep.subr.mxu0 0.0
    %2868 = vmatpush1.msra.mxu0 0.0
    %2869 = vmatprep.subr.mxu0 0.0
    %2870 = vmatpush1.msra.mxu0 0.0
    %2871 = vmatprep.subr.mxu0 0.0
    %2872 = vmatpush1.msra.mxu0 0.0
    %2873 = vmatprep.subr.mxu0 0.0
    %2874 = vmatpush1.msra.mxu0 0.0
    %2875 = vmatprep.subr.mxu0 0.0
    %2876 = vmatpush1.msra.mxu0 0.0
    %2877 = vmatprep.subr.mxu0 0.0
    %2878 = vmatpush1.msra.mxu0 0.0
    %2879 = vmatprep.subr.mxu0 0.0
    %2880 = vmatpush1.msra.mxu0 0.0
    %2881 = vmatprep.subr.mxu0 0.0
    %2882 = vmatpush1.msra.mxu0 0.0
    %2883 = vmatprep.subr.mxu0 0.0
    %2884 = vmatpush1.msra.mxu0 0.0
    %2885 = vmatprep.subr.mxu0 0.0
    %2886 = vmatpush1.msra.mxu0 0.0
    %2887 = vmatprep.subr.mxu0 0.0
    %2888 = vmatpush1.msra.mxu0 0.0
    %2889 = vmatprep.subr.mxu0 0.0
    %2890 = vmatpush1.msra.mxu0 0.0
    %2891 = vmatprep.subr.mxu0 0.0
    %2892 = vmatpush1.msra.mxu0 0.0
    %2893 = vmatprep.subr.mxu0 0.0
    %2894 = vmatpush1.msra.mxu0 0.0
    %2895 = vmatprep.mubr.f32.mxu0 0.0
    %2896 = vmatmul.mubr.f32.gmra.mrb[0].mxu0 %v2826
    %v2897 = vpop.f32.mrb[0].mxu0
    %v2898 = vadd.f32 0.0, %v2897
    %v2899 = vpop.f32.mrb[0].mxu0
    %2900 = vmatprep.mubr.f32.mxu0 0.0
    %2901 = vmatmul.mubr.f32.gmra.mrb[0].mxu0 %v2829
    %v2902 = vpop.f32.mrb[0].mxu0
    %v2903 = vadd.f32 0.0, %v2902
    %v2904 = vpop.f32.mrb[0].mxu0
    %2905 = vdwg.mxu0
    %v2906 = vld [vmem:[%s2 + $0x340] sm:$0x3]
    %v2907 = vld [vmem:[%s2 + $0x380] ss:$0 sm:$0xff]
    %v2909 = vsel %vm411, %v2906, 0
    %2911 = vmatprep.subr.mxu0 0.0
    %2912 = vmatpush1.msra.mxu0 %v2898
    %2913 = vmatprep.subr.mxu0 0.0
    %2914 = vmatpush1.msra.mxu0 %v2903
    %2915 = vmatprep.subr.mxu0 0.0
    %2916 = vmatpush1.msra.mxu0 0.0
    %2917 = vmatprep.subr.mxu0 0.0
    %2918 = vmatpush1.msra.mxu0 0.0
    %2919 = vmatprep.subr.mxu0 0.0
    %2920 = vmatpush1.msra.mxu0 0.0
    %2921 = vmatprep.subr.mxu0 0.0
    %2922 = vmatpush1.msra.mxu0 0.0
    %2923 = vmatprep.subr.mxu0 0.0
    %2924 = vmatpush1.msra.mxu0 0.0
    %2925 = vmatprep.subr.mxu0 0.0
    %2926 = vmatpush1.msra.mxu0 0.0
    %2927 = vmatprep.subr.mxu0 0.0
    %2928 = vmatpush1.msra.mxu0 0.0
    %2929 = vmatprep.subr.mxu0 0.0
    %2930 = vmatpush1.msra.mxu0 0.0
    %2931 = vmatprep.subr.mxu0 0.0
    %2932 = vmatpush1.msra.mxu0 0.0
    %2933 = vmatprep.subr.mxu0 0.0
    %2934 = vmatpush1.msra.mxu0 0.0
    %2935 = vmatprep.subr.mxu0 0.0
    %2936 = vmatpush1.msra.mxu0 0.0
    %2937 = vmatprep.subr.mxu0 0.0
    %2938 = vmatpush1.msra.mxu0 0.0
    %2939 = vmatprep.subr.mxu0 0.0
    %2940 = vmatpush1.msra.mxu0 0.0
    %2941 = vmatprep.subr.mxu0 0.0
    %2942 = vmatpush1.msra.mxu0 0.0
    %2943 = vmatprep.subr.mxu0 0.0
    %2944 = vmatpush1.msra.mxu0 0.0
    %2945 = vmatprep.subr.mxu0 0.0
    %2946 = vmatpush1.msra.mxu0 0.0
    %2947 = vmatprep.subr.mxu0 0.0
    %2948 = vmatpush1.msra.mxu0 0.0
    %2949 = vmatprep.subr.mxu0 0.0
    %2950 = vmatpush1.msra.mxu0 0.0
    %2951 = vmatprep.subr.mxu0 0.0
    %2952 = vmatpush1.msra.mxu0 0.0
    %2953 = vmatprep.subr.mxu0 0.0
    %2954 = vmatpush1.msra.mxu0 0.0
    %2955 = vmatprep.subr.mxu0 0.0
    %2956 = vmatpush1.msra.mxu0 0.0
    %2957 = vmatprep.subr.mxu0 0.0
    %2958 = vmatpush1.msra.mxu0 0.0
    %2959 = vmatprep.subr.mxu0 0.0
    %2960 = vmatpush1.msra.mxu0 0.0
    %2961 = vmatprep.subr.mxu0 0.0
    %2962 = vmatpush1.msra.mxu0 0.0
    %2963 = vmatprep.subr.mxu0 0.0
    %2964 = vmatpush1.msra.mxu0 0.0
    %2965 = vmatprep.subr.mxu0 0.0
    %2966 = vmatpush1.msra.mxu0 0.0
    %2967 = vmatprep.subr.mxu0 0.0
    %2968 = vmatpush1.msra.mxu0 0.0
    %2969 = vmatprep.subr.mxu0 0.0
    %2970 = vmatpush1.msra.mxu0 0.0
    %2971 = vmatprep.subr.mxu0 0.0
    %2972 = vmatpush1.msra.mxu0 0.0
    %2973 = vmatprep.subr.mxu0 0.0
    %2974 = vmatpush1.msra.mxu0 0.0
    %2975 = vmatprep.mubr.f32.mxu0 0.0
    %2976 = vmatmul.mubr.f32.gmra.mrb[0].mxu0 %v2909
    %v2977 = vpop.f32.mrb[0].mxu0
    %v2978 = vadd.f32 %v2907, %v2977
    %v2979 = vpop.f32.mrb[0].mxu0
    %2980 = vdwg.mxu0
    %vm2981 = vcmask 41984
    %v2982 = vsel %vm2981, %v2978, 0.0
    %2983 = vadd.xlane.f32.xlu0 %v2982
    %v2984 = vpop.xlane.xlu0 %2983
    %v2985 = vrot.slane %v2984, 4
    %v2986 = vadd.f32 %v2984, %v2985
    %v2987 = vrot.slane %v2986, 2
    %v2988 = vadd.f32 %v2986, %v2987
    %v2989 = vrot.slane %v2988, 1
    %v2990 = vadd.f32 %v2988, %v2989
    %s2991 = vtos %v2990
    %v2992 = vstv %s2991
    %v2993 = vrcp.pop 12.0
    %v2994 = vmul.f32 %v2992, %v2993
    %v2995 = vsub.f32 %v2978, %v2994
    %v2996 = vmul.f32 %v2995, %v2995
    %v2997 = vsel %vm2981, %v2996, 0.0
    %2998 = vadd.xlane.f32.xlu0 %v2997
    %v2999 = vpop.xlane.xlu0 %2998
    %v3000 = vrot.slane %v2999, 4
    %v3001 = vadd.f32 %v2999, %v3000
    %v3002 = vrot.slane %v3001, 2
    %v3003 = vadd.f32 %v3001, %v3002
    %v3004 = vrot.slane %v3003, 1
    %v3005 = vadd.f32 %v3003, %v3004
    %s3006 = vtos %v3005
    %v3007 = vstv %s3006
    %v3008 = vmul.f32 %v3007, %v2993
    %v3009 = vadd.f32 %v3008, 1e-05
    %v3010 = vrsqrt.pop %v3009
    %v3011 = vmul.f32 %v2995, %v3010
    %3012 = vst.msk [vmem:[#allocation2] sm:$0x3] %vm2981, %v3011
    // Predicated region
    $region18: #{sknet_forward.1} parent=1 // pred_check
      _
    $region19: #{sknet_forward.1} parent=1 // pred_check_branch
      %3014 = sbr.rel (0) target = $region21
    $region20: #{sknet_forward.1} parent=1 // pred_region
      %s3016 = ssub.s32 32, 32
      %3017 = vsyncadd [#allocation3], %s3016
      %s3019 = sshll.u32 [#allocation2], 4
      %s3020 = int_to_ptr.vmem [resolvable:$true] %s3019
      %3022 = dma.vmem_to_hbm [thread:$0]  %s3020, 32, %s4, [#allocation3]
    $region21: #{sknet_forward.1} parent=1 // pred_fallthru
      _
    // Predicated region
    $region22: #{sknet_forward.1} parent=1 // pred_check
      _
    $region23: #{sknet_forward.1} parent=1 // pred_check_branch
      %3024 = sbr.rel (0) target = $region25
    $region24: #{sknet_forward.1} parent=1 // pred_region
      %3025 = dma.done [#allocation3], 32
    $region25: #{sknet_forward.1} parent=1 // pred_fallthru
      _
    %3026 = vsyncpa [#allocation3], 1

</llo_original>
